<compile_context>
chip_gen: v6e
topology: v6e:2x2x1
jax: 0.10.0
libtpu: 0.0.40
codegen_flags: <defaults>
</compile_context>

<pallas_src>
import jax
import jax.numpy as jnp
from jax.experimental import pallas as pl
from jax.experimental.pallas import tpu as pltpu  # noqa: F401  (TPU-specific tuning hooks)

# ---------------- small, module-consistent config ----------------
B = 2                     # batch
C_IN = 4                  # in_channels
C_IN_PAD = 8              # x lane-padded to 8
L = 16                    # sequence length (power of 2 -> cheap batch-id via shift)
BL = B * L                # rows seen by the kernel (batch folded into rows)
OC = 8                    # out_channels (per conv branch)
KERNEL_SIZES = (3, 5, 7)
N_BRANCH = len(KERNEL_SIZES)
C1 = OC * N_BRANCH        # 24 = out_channels * len(kernel_sizes)
INNER = 32                # inner_linear_dim (small for the demo)
OUT_DIM = 10              # output_dim
KMAX = max(KERNEL_SIZES)  # 7
MAX_PAD = KMAX // 2       # 3
OUT_PAD = 128             # lane-dense output width (sliced to OUT_DIM outside)
LANES = 128
EPS = 1e-5
assert (L & (L - 1)) == 0, "L must be a power of two for the shift-based batch id"
LOG2_L = L.bit_length() - 1

# --- weight-slab layout (all offsets 8-row aligned, 128 lanes wide) ----------
W1_ROW0 = 0                               # KMAX taps of (C_IN_PAD, C1)
W2_ROW0 = W1_ROW0 + KMAX * C_IN_PAD       # 56:  KMAX taps of (C1, C1)
WL1_ROW0 = W2_ROW0 + KMAX * C1            # 224: (C1, INNER)
WL2_ROW0 = WL1_ROW0 + C1                  # 248: (INNER, OUT_PAD)
W_ROWS = WL2_ROW0 + INNER                 # 280


# ---------------- Pallas kernel: whole forward, whole batch, one step -------
def multiscale_cnn_kernel(
    x_ref,                  # (BL, C_IN_PAD)  raw input rows (lanes 4..7 zero)
    w_ref,                  # (W_ROWS, 128)   fused weight slab
    b_ref,                  # (8, 128)        fused bias slab (rows 0..3 used)
    o_ref,                  # (BL, OUT_PAD)   lane-dense output
):
    # ---- per-tap row-shift / pad-mask matrices, built once from iota --------
    # Shift_t[g, g2] = 1 iff g2 == g + (t - MAX_PAD) and g, g2 are in the same
    # batch (this reproduces the per-batch zero padding of the 'same' conv).
    g_row = jax.lax.broadcasted_iota(jnp.int32, (BL, BL), 0)
    g_col = jax.lax.broadcasted_iota(jnp.int32, (BL, BL), 1)
    same_batch = (g_row >> LOG2_L) == (g_col >> LOG2_L)
    diff = g_col - g_row
    shift_mats = [
        jnp.where((diff == (t - MAX_PAD)) & same_batch, 1.0, 0.0).astype(jnp.float32)
        for t in range(KMAX)
    ]

    def conv_stage(act, row0, tap_rows, bias):
        # y = relu(sum_t Shift_t(act) @ W_t + bias); single f32 accumulator.
        acc = jnp.zeros((BL, C1), jnp.float32)
        for t in range(KMAX):
            wt = w_ref[row0 + t * tap_rows: row0 + (t + 1) * tap_rows, 0:C1]
            shifted = jnp.dot(shift_mats[t], act, preferred_element_type=jnp.float32)
            acc = acc + jnp.dot(shifted, wt, preferred_element_type=jnp.float32)
        return jnp.maximum(acc + bias, 0.0)          # dropout = identity (eval)

    b1 = b_ref[0:1, 0:C1]
    b2 = b_ref[1:2, 0:C1]
    bl1 = b_ref[2:3, 0:INNER]
    bl2 = b_ref[3:4, :]

    # ---- stage 1 & stage 2: fused conv + BN + ReLU ---------------------------
    y1 = conv_stage(x_ref[...], W1_ROW0, C_IN_PAD, b1)   # (BL, C1)
    y2 = conv_stage(y1, W2_ROW0, C1, b2)                  # (BL, C1)

    # ---- MoBYMLP head: Linear -> (folded BN) -> ReLU -> Linear ---------------
    wl1 = w_ref[WL1_ROW0:WL1_ROW0 + C1, 0:INNER]
    wl2 = w_ref[WL2_ROW0:WL2_ROW0 + INNER, :]
    z = jnp.maximum(jnp.dot(y2, wl1, preferred_element_type=jnp.float32) + bl1, 0.0)
    out = jnp.dot(z, wl2, preferred_element_type=jnp.float32) + bl2
    o_ref[...] = out.astype(o_ref.dtype)                  # lane-dense (BL, 128) store


# ---------------- one-time weight fusion (hoisted out of the hot path) -------
def _fuse_conv_stage(branch_ws, bias, scale, shift, c_in, c_in_pad):
    """Zero-pad taps to KMAX, concat branches on out-channels, fold bias+BN."""
    W = jnp.zeros((KMAX, c_in_pad, C1), jnp.float32)
    for i, (w, k) in enumerate(zip(branch_ws, KERNEL_SIZES)):
        off = MAX_PAD - k // 2
        W = W.at[off:off + k, :c_in, i * OC:(i + 1) * OC].set(w)
    W = W * scale.reshape(1, 1, C1)                 # fold BN scale into weights
    bf = bias * scale + shift                       # fold conv bias + BN shift
    return W, bf


def prepare_weights(p):
    """Build the (W_ROWS,128) weight slab and (8,128) bias slab ONCE."""
    W1, b1f = _fuse_conv_stage(p["w1"], p["b1"], p["s1"], p["t1"], C_IN, C_IN_PAD)
    W2, b2f = _fuse_conv_stage(p["w2"], p["b2"], p["s2"], p["t2"], C1, C1)
    wl1f = p["wl1"] * p["s3"]                                       # fold MLP BN
    bl1f = p["bl1"] * p["s3"] + p["t3"]

    w_slab = jnp.zeros((W_ROWS, LANES), jnp.float32)
    w_slab = w_slab.at[W1_ROW0:W1_ROW0 + KMAX * C_IN_PAD, :C1].set(
        W1.reshape(KMAX * C_IN_PAD, C1))
    w_slab = w_slab.at[W2_ROW0:W2_ROW0 + KMAX * C1, :C1].set(
        W2.reshape(KMAX * C1, C1))
    w_slab = w_slab.at[WL1_ROW0:WL1_ROW0 + C1, :INNER].set(wl1f)
    w_slab = w_slab.at[WL2_ROW0:WL2_ROW0 + INNER, :OUT_DIM].set(p["wl2"])

    b_slab = jnp.zeros((8, LANES), jnp.float32)
    b_slab = b_slab.at[0, :C1].set(b1f[0])
    b_slab = b_slab.at[1, :C1].set(b2f[0])
    b_slab = b_slab.at[2, :INNER].set(bl1f[0])
    b_slab = b_slab.at[3, :OUT_DIM].set(p["bl2"][0])
    return w_slab, b_slab


# ---------------- jitted forward (x prep + kernel + slice, nothing else) -----
@jax.jit
def multiscale_cnn_forward(x_ncl, w_slab, b_slab):
    """x_ncl: (B, C_IN, L) float32 (PyTorch NCL layout). Returns (B, L, OUT_DIM)."""
    x = jnp.transpose(x_ncl, (0, 2, 1)).astype(jnp.float32).reshape(BL, C_IN)
    x_pad = jnp.zeros((BL, C_IN_PAD), jnp.float32).at[:, :C_IN].set(x)

    out_full = pl.pallas_call(
        multiscale_cnn_kernel,
        out_shape=jax.ShapeDtypeStruct((BL, OUT_PAD), jnp.float32),
        # No grid: whole problem is a few KB, one invocation, all operands in
        # VMEM; output is lane-dense (128 lanes); single TensorCore everywhere.
    )(x_pad, w_slab, b_slab)

    return out_full[:, :OUT_DIM].reshape(B, L, OUT_DIM)


# ---------------- deterministic parameter construction -----------------------
def make_params(key):
    ks = iter(jax.random.split(key, 32))

    def norm(shape, scale=0.1):
        return (scale * jax.random.normal(next(ks), shape)).astype(jnp.float32)

    def bn_affine(dim):
        # eval-mode BN folded to scale/shift: scale = g/sqrt(var+eps), shift = b - mean*scale
        gamma = 1.0 + 0.1 * jax.random.normal(next(ks), (dim,))
        beta = 0.1 * jax.random.normal(next(ks), (dim,))
        mean = 0.05 * jax.random.normal(next(ks), (dim,))
        var = jnp.abs(1.0 + 0.1 * jax.random.normal(next(ks), (dim,)))
        scale = gamma / jnp.sqrt(var + EPS)
        shift = beta - mean * scale
        return (scale.reshape(1, dim).astype(jnp.float32),
                shift.reshape(1, dim).astype(jnp.float32))

    p = {}
    # stage-1 convs (weights stored as (k, C_in, OC) == PyTorch (OC, C_in, k) transposed)
    p["w1"] = [norm((k, C_IN, OC)) for k in KERNEL_SIZES]
    p["b1"] = norm((1, C1))
    p["s1"], p["t1"] = bn_affine(C1)
    # stage-2 convs
    p["w2"] = [norm((k, C1, OC)) for k in KERNEL_SIZES]
    p["b2"] = norm((1, C1))
    p["s2"], p["t2"] = bn_affine(C1)
    # MoBYMLP (num_layers=2): Linear(C1->INNER) + BN + ReLU, Linear(INNER->OUT_DIM)
    p["wl1"] = norm((C1, INNER))
    p["bl1"] = norm((1, INNER))
    p["s3"], p["t3"] = bn_affine(INNER)
    p["wl2"] = norm((INNER, OUT_DIM))
    p["bl2"] = norm((1, OUT_DIM))
    return p


# ---------------- plain-JAX reference (unfused math, for a sanity check) -----
def ref_forward(x_ncl, p):
    x = jnp.transpose(x_ncl, (0, 2, 1)).astype(jnp.float32)
    xp = jnp.pad(x, ((0, 0), (MAX_PAD, MAX_PAD), (0, 0)))

    def branch(src, w, k):
        pad = k // 2
        off0 = MAX_PAD - pad
        acc = jnp.zeros((src.shape[0], L, w.shape[-1]), jnp.float32)
        for t in range(k):
            acc = acc + jnp.einsum("blc,co->blo", src[:, off0 + t: off0 + t + L, :], w[t])
        return acc

    y1 = jnp.concatenate([branch(xp, p["w1"][i], KERNEL_SIZES[i]) for i in range(N_BRANCH)], -1)
    y1 = jnp.maximum((y1 + p["b1"]) * p["s1"] + p["t1"], 0.0)
    h1 = jnp.pad(y1, ((0, 0), (MAX_PAD, MAX_PAD), (0, 0)))
    y2 = jnp.concatenate([branch(h1, p["w2"][i], KERNEL_SIZES[i]) for i in range(N_BRANCH)], -1)
    y2 = jnp.maximum((y2 + p["b2"]) * p["s2"] + p["t2"], 0.0)
    z = jnp.maximum((y2 @ p["wl1"] + p["bl1"]) * p["s3"] + p["t3"], 0.0)
    return z @ p["wl2"] + p["bl2"]


if __name__ == "__main__":
    key = jax.random.PRNGKey(0)
    kx, kp = jax.random.split(key)
    x = jax.random.normal(kx, (B, C_IN, L), dtype=jnp.float32)    # PyTorch NCL layout
    params = make_params(kp)

    # one-time weight fusion (NOT part of the per-call path)
    w_slab, b_slab = prepare_weights(params)

    out = multiscale_cnn_forward(x, w_slab, b_slab)
    out = jax.block_until_ready(out)

    ref = ref_forward(x, params)
    assert out.shape == (B, L, OUT_DIM), out.shape
    assert bool(jnp.all(jnp.isfinite(out)))
    assert bool(jnp.allclose(out, ref, atol=1e-4, rtol=1e-4)), float(jnp.max(jnp.abs(out - ref)))

    print("KERNEL_OK")
</pallas_src>

<mosaic_0001>
module attributes {stable_mosaic.version = 11 : i64} {
  func.func @multiscale_cnn_kernel(%arg0: memref<32x8xf32, #tpu.memory_space<vmem>>, %arg1: memref<280x128xf32, #tpu.memory_space<vmem>>, %arg2: memref<8x128xf32, #tpu.memory_space<vmem>>, %arg3: memref<32x128xf32, #tpu.memory_space<vmem>>) attributes {dimension_semantics = [], scalar_prefetch = 0 : i64, scratch_operands = 0 : i64, tpu.core_type = #tpu.core_type<tc>} {
    %0 = tpu.iota {dimensions = array<i32: 0>} : vector<32x32xi32>
    %1 = tpu.iota {dimensions = array<i32: 1>} : vector<32x32xi32>
    %c4_i32 = arith.constant 4 : i32
    %2 = vector.broadcast %c4_i32 : i32 to vector<32x32xi32>
    %3 = arith.shrsi %0, %2 : vector<32x32xi32>
    %c4_i32_0 = arith.constant 4 : i32
    %4 = vector.broadcast %c4_i32_0 : i32 to vector<32x32xi32>
    %5 = arith.shrsi %1, %4 : vector<32x32xi32>
    %6 = arith.cmpi eq, %3, %5 : vector<32x32xi32>
    %7 = arith.subi %1, %0 : vector<32x32xi32>
    %c-3_i32 = arith.constant -3 : i32
    %8 = vector.broadcast %c-3_i32 : i32 to vector<32x32xi32>
    %9 = arith.cmpi eq, %7, %8 : vector<32x32xi32>
    %10 = arith.andi %9, %6 : vector<32x32xi1>
    %cst = arith.constant 1.000000e+00 : f32
    %cst_1 = arith.constant 0.000000e+00 : f32
    %11 = vector.broadcast %cst : f32 to vector<32x32xf32>
    %12 = vector.broadcast %cst_1 : f32 to vector<32x32xf32>
    %13 = arith.select %10, %11, %12 : vector<32x32xi1>, vector<32x32xf32>
    %c-2_i32 = arith.constant -2 : i32
    %14 = vector.broadcast %c-2_i32 : i32 to vector<32x32xi32>
    %15 = arith.cmpi eq, %7, %14 : vector<32x32xi32>
    %16 = arith.andi %15, %6 : vector<32x32xi1>
    %cst_2 = arith.constant 1.000000e+00 : f32
    %cst_3 = arith.constant 0.000000e+00 : f32
    %17 = vector.broadcast %cst_2 : f32 to vector<32x32xf32>
    %18 = vector.broadcast %cst_3 : f32 to vector<32x32xf32>
    %19 = arith.select %16, %17, %18 : vector<32x32xi1>, vector<32x32xf32>
    %c-1_i32 = arith.constant -1 : i32
    %20 = vector.broadcast %c-1_i32 : i32 to vector<32x32xi32>
    %21 = arith.cmpi eq, %7, %20 : vector<32x32xi32>
    %22 = arith.andi %21, %6 : vector<32x32xi1>
    %cst_4 = arith.constant 1.000000e+00 : f32
    %cst_5 = arith.constant 0.000000e+00 : f32
    %23 = vector.broadcast %cst_4 : f32 to vector<32x32xf32>
    %24 = vector.broadcast %cst_5 : f32 to vector<32x32xf32>
    %25 = arith.select %22, %23, %24 : vector<32x32xi1>, vector<32x32xf32>
    %c0_i32 = arith.constant 0 : i32
    %26 = vector.broadcast %c0_i32 : i32 to vector<32x32xi32>
    %27 = arith.cmpi eq, %7, %26 : vector<32x32xi32>
    %28 = arith.andi %27, %6 : vector<32x32xi1>
    %cst_6 = arith.constant 1.000000e+00 : f32
    %cst_7 = arith.constant 0.000000e+00 : f32
    %29 = vector.broadcast %cst_6 : f32 to vector<32x32xf32>
    %30 = vector.broadcast %cst_7 : f32 to vector<32x32xf32>
    %31 = arith.select %28, %29, %30 : vector<32x32xi1>, vector<32x32xf32>
    %c1_i32 = arith.constant 1 : i32
    %32 = vector.broadcast %c1_i32 : i32 to vector<32x32xi32>
    %33 = arith.cmpi eq, %7, %32 : vector<32x32xi32>
    %34 = arith.andi %33, %6 : vector<32x32xi1>
    %cst_8 = arith.constant 1.000000e+00 : f32
    %cst_9 = arith.constant 0.000000e+00 : f32
    %35 = vector.broadcast %cst_8 : f32 to vector<32x32xf32>
    %36 = vector.broadcast %cst_9 : f32 to vector<32x32xf32>
    %37 = arith.select %34, %35, %36 : vector<32x32xi1>, vector<32x32xf32>
    %c2_i32 = arith.constant 2 : i32
    %38 = vector.broadcast %c2_i32 : i32 to vector<32x32xi32>
    %39 = arith.cmpi eq, %7, %38 : vector<32x32xi32>
    %40 = arith.andi %39, %6 : vector<32x32xi1>
    %cst_10 = arith.constant 1.000000e+00 : f32
    %cst_11 = arith.constant 0.000000e+00 : f32
    %41 = vector.broadcast %cst_10 : f32 to vector<32x32xf32>
    %42 = vector.broadcast %cst_11 : f32 to vector<32x32xf32>
    %43 = arith.select %40, %41, %42 : vector<32x32xi1>, vector<32x32xf32>
    %c3_i32 = arith.constant 3 : i32
    %44 = vector.broadcast %c3_i32 : i32 to vector<32x32xi32>
    %45 = arith.cmpi eq, %7, %44 : vector<32x32xi32>
    %46 = arith.andi %45, %6 : vector<32x32xi1>
    %cst_12 = arith.constant 1.000000e+00 : f32
    %cst_13 = arith.constant 0.000000e+00 : f32
    %47 = vector.broadcast %cst_12 : f32 to vector<32x32xf32>
    %48 = vector.broadcast %cst_13 : f32 to vector<32x32xf32>
    %49 = arith.select %46, %47, %48 : vector<32x32xi1>, vector<32x32xf32>
    %c0 = arith.constant 0 : index
    %c0_14 = arith.constant 0 : index
    %50 = vector.load %arg2[%c0, %c0_14] : memref<8x128xf32, #tpu.memory_space<vmem>>, vector<1x24xf32>
    %c1 = arith.constant 1 : index
    %c0_15 = arith.constant 0 : index
    %51 = vector.load %arg2[%c1, %c0_15] : memref<8x128xf32, #tpu.memory_space<vmem>>, vector<1x24xf32>
    %c2 = arith.constant 2 : index
    %c0_16 = arith.constant 0 : index
    %52 = vector.load %arg2[%c2, %c0_16] : memref<8x128xf32, #tpu.memory_space<vmem>>, vector<1x32xf32>
    %c3 = arith.constant 3 : index
    %c0_17 = arith.constant 0 : index
    %53 = vector.load %arg2[%c3, %c0_17] : memref<8x128xf32, #tpu.memory_space<vmem>>, vector<1x128xf32>
    %c0_18 = arith.constant 0 : index
    %c0_19 = arith.constant 0 : index
    %54 = vector.load %arg0[%c0_18, %c0_19] : memref<32x8xf32, #tpu.memory_space<vmem>>, vector<32x8xf32>
    %cst_20 = arith.constant 0.000000e+00 : f32
    %55 = vector.broadcast %cst_20 : f32 to vector<32x24xf32>
    %c0_21 = arith.constant 0 : index
    %c0_22 = arith.constant 0 : index
    %56 = vector.load %arg1[%c0_21, %c0_22] : memref<280x128xf32, #tpu.memory_space<vmem>>, vector<8x24xf32>
    %cst_23 = arith.constant dense<0.000000e+00> : vector<32x8xf32>
    %57 = tpu.matmul %13, %54, %cst_23 {dimension_numbers = #tpu.dot_dimension_numbers<[1], [0], [0], [1], [0, 0, 1, 1], [], []>} : vector<32x32xf32>, vector<32x8xf32>, vector<32x8xf32> -> vector<32x8xf32>
    %cst_24 = arith.constant dense<0.000000e+00> : vector<32x24xf32>
    %58 = tpu.matmul %57, %56, %cst_24 {dimension_numbers = #tpu.dot_dimension_numbers<[1], [0], [0], [1], [0, 0, 1, 1], [], []>} : vector<32x8xf32>, vector<8x24xf32>, vector<32x24xf32> -> vector<32x24xf32>
    %59 = arith.addf %55, %58 : vector<32x24xf32>
    %c8 = arith.constant 8 : index
    %c0_25 = arith.constant 0 : index
    %60 = vector.load %arg1[%c8, %c0_25] : memref<280x128xf32, #tpu.memory_space<vmem>>, vector<8x24xf32>
    %cst_26 = arith.constant dense<0.000000e+00> : vector<32x8xf32>
    %61 = tpu.matmul %19, %54, %cst_26 {dimension_numbers = #tpu.dot_dimension_numbers<[1], [0], [0], [1], [0, 0, 1, 1], [], []>} : vector<32x32xf32>, vector<32x8xf32>, vector<32x8xf32> -> vector<32x8xf32>
    %cst_27 = arith.constant dense<0.000000e+00> : vector<32x24xf32>
    %62 = tpu.matmul %61, %60, %cst_27 {dimension_numbers = #tpu.dot_dimension_numbers<[1], [0], [0], [1], [0, 0, 1, 1], [], []>} : vector<32x8xf32>, vector<8x24xf32>, vector<32x24xf32> -> vector<32x24xf32>
    %63 = arith.addf %59, %62 : vector<32x24xf32>
    %c16 = arith.constant 16 : index
    %c0_28 = arith.constant 0 : index
    %64 = vector.load %arg1[%c16, %c0_28] : memref<280x128xf32, #tpu.memory_space<vmem>>, vector<8x24xf32>
    %cst_29 = arith.constant dense<0.000000e+00> : vector<32x8xf32>
    %65 = tpu.matmul %25, %54, %cst_29 {dimension_numbers = #tpu.dot_dimension_numbers<[1], [0], [0], [1], [0, 0, 1, 1], [], []>} : vector<32x32xf32>, vector<32x8xf32>, vector<32x8xf32> -> vector<32x8xf32>
    %cst_30 = arith.constant dense<0.000000e+00> : vector<32x24xf32>
    %66 = tpu.matmul %65, %64, %cst_30 {dimension_numbers = #tpu.dot_dimension_numbers<[1], [0], [0], [1], [0, 0, 1, 1], [], []>} : vector<32x8xf32>, vector<8x24xf32>, vector<32x24xf32> -> vector<32x24xf32>
    %67 = arith.addf %63, %66 : vector<32x24xf32>
    %c24 = arith.constant 24 : index
    %c0_31 = arith.constant 0 : index
    %68 = vector.load %arg1[%c24, %c0_31] : memref<280x128xf32, #tpu.memory_space<vmem>>, vector<8x24xf32>
    %cst_32 = arith.constant dense<0.000000e+00> : vector<32x8xf32>
    %69 = tpu.matmul %31, %54, %cst_32 {dimension_numbers = #tpu.dot_dimension_numbers<[1], [0], [0], [1], [0, 0, 1, 1], [], []>} : vector<32x32xf32>, vector<32x8xf32>, vector<32x8xf32> -> vector<32x8xf32>
    %cst_33 = arith.constant dense<0.000000e+00> : vector<32x24xf32>
    %70 = tpu.matmul %69, %68, %cst_33 {dimension_numbers = #tpu.dot_dimension_numbers<[1], [0], [0], [1], [0, 0, 1, 1], [], []>} : vector<32x8xf32>, vector<8x24xf32>, vector<32x24xf32> -> vector<32x24xf32>
    %71 = arith.addf %67, %70 : vector<32x24xf32>
    %c32 = arith.constant 32 : index
    %c0_34 = arith.constant 0 : index
    %72 = vector.load %arg1[%c32, %c0_34] : memref<280x128xf32, #tpu.memory_space<vmem>>, vector<8x24xf32>
    %cst_35 = arith.constant dense<0.000000e+00> : vector<32x8xf32>
    %73 = tpu.matmul %37, %54, %cst_35 {dimension_numbers = #tpu.dot_dimension_numbers<[1], [0], [0], [1], [0, 0, 1, 1], [], []>} : vector<32x32xf32>, vector<32x8xf32>, vector<32x8xf32> -> vector<32x8xf32>
    %cst_36 = arith.constant dense<0.000000e+00> : vector<32x24xf32>
    %74 = tpu.matmul %73, %72, %cst_36 {dimension_numbers = #tpu.dot_dimension_numbers<[1], [0], [0], [1], [0, 0, 1, 1], [], []>} : vector<32x8xf32>, vector<8x24xf32>, vector<32x24xf32> -> vector<32x24xf32>
    %75 = arith.addf %71, %74 : vector<32x24xf32>
    %c40 = arith.constant 40 : index
    %c0_37 = arith.constant 0 : index
    %76 = vector.load %arg1[%c40, %c0_37] : memref<280x128xf32, #tpu.memory_space<vmem>>, vector<8x24xf32>
    %cst_38 = arith.constant dense<0.000000e+00> : vector<32x8xf32>
    %77 = tpu.matmul %43, %54, %cst_38 {dimension_numbers = #tpu.dot_dimension_numbers<[1], [0], [0], [1], [0, 0, 1, 1], [], []>} : vector<32x32xf32>, vector<32x8xf32>, vector<32x8xf32> -> vector<32x8xf32>
    %cst_39 = arith.constant dense<0.000000e+00> : vector<32x24xf32>
    %78 = tpu.matmul %77, %76, %cst_39 {dimension_numbers = #tpu.dot_dimension_numbers<[1], [0], [0], [1], [0, 0, 1, 1], [], []>} : vector<32x8xf32>, vector<8x24xf32>, vector<32x24xf32> -> vector<32x24xf32>
    %79 = arith.addf %75, %78 : vector<32x24xf32>
    %c48 = arith.constant 48 : index
    %c0_40 = arith.constant 0 : index
    %80 = vector.load %arg1[%c48, %c0_40] : memref<280x128xf32, #tpu.memory_space<vmem>>, vector<8x24xf32>
    %cst_41 = arith.constant dense<0.000000e+00> : vector<32x8xf32>
    %81 = tpu.matmul %49, %54, %cst_41 {dimension_numbers = #tpu.dot_dimension_numbers<[1], [0], [0], [1], [0, 0, 1, 1], [], []>} : vector<32x32xf32>, vector<32x8xf32>, vector<32x8xf32> -> vector<32x8xf32>
    %cst_42 = arith.constant dense<0.000000e+00> : vector<32x24xf32>
    %82 = tpu.matmul %81, %80, %cst_42 {dimension_numbers = #tpu.dot_dimension_numbers<[1], [0], [0], [1], [0, 0, 1, 1], [], []>} : vector<32x8xf32>, vector<8x24xf32>, vector<32x24xf32> -> vector<32x24xf32>
    %83 = arith.addf %79, %82 : vector<32x24xf32>
    %84 = vector.broadcast %50 : vector<1x24xf32> to vector<32x24xf32>
    %85 = arith.addf %83, %84 : vector<32x24xf32>
    %cst_43 = arith.constant 0.000000e+00 : f32
    %86 = vector.broadcast %cst_43 : f32 to vector<32x24xf32>
    %87 = arith.maximumf %85, %86 : vector<32x24xf32>
    %cst_44 = arith.constant 0.000000e+00 : f32
    %88 = vector.broadcast %cst_44 : f32 to vector<32x24xf32>
    %c56 = arith.constant 56 : index
    %c0_45 = arith.constant 0 : index
    %89 = vector.load %arg1[%c56, %c0_45] : memref<280x128xf32, #tpu.memory_space<vmem>>, vector<24x24xf32>
    %cst_46 = arith.constant dense<0.000000e+00> : vector<32x24xf32>
    %90 = tpu.matmul %13, %87, %cst_46 {dimension_numbers = #tpu.dot_dimension_numbers<[1], [0], [0], [1], [0, 0, 1, 1], [], []>} : vector<32x32xf32>, vector<32x24xf32>, vector<32x24xf32> -> vector<32x24xf32>
    %cst_47 = arith.constant dense<0.000000e+00> : vector<32x24xf32>
    %91 = tpu.matmul %90, %89, %cst_47 {dimension_numbers = #tpu.dot_dimension_numbers<[1], [0], [0], [1], [0, 0, 1, 1], [], []>} : vector<32x24xf32>, vector<24x24xf32>, vector<32x24xf32> -> vector<32x24xf32>
    %92 = arith.addf %88, %91 : vector<32x24xf32>
    %c80 = arith.constant 80 : index
    %c0_48 = arith.constant 0 : index
    %93 = vector.load %arg1[%c80, %c0_48] : memref<280x128xf32, #tpu.memory_space<vmem>>, vector<24x24xf32>
    %cst_49 = arith.constant dense<0.000000e+00> : vector<32x24xf32>
    %94 = tpu.matmul %19, %87, %cst_49 {dimension_numbers = #tpu.dot_dimension_numbers<[1], [0], [0], [1], [0, 0, 1, 1], [], []>} : vector<32x32xf32>, vector<32x24xf32>, vector<32x24xf32> -> vector<32x24xf32>
    %cst_50 = arith.constant dense<0.000000e+00> : vector<32x24xf32>
    %95 = tpu.matmul %94, %93, %cst_50 {dimension_numbers = #tpu.dot_dimension_numbers<[1], [0], [0], [1], [0, 0, 1, 1], [], []>} : vector<32x24xf32>, vector<24x24xf32>, vector<32x24xf32> -> vector<32x24xf32>
    %96 = arith.addf %92, %95 : vector<32x24xf32>
    %c104 = arith.constant 104 : index
    %c0_51 = arith.constant 0 : index
    %97 = vector.load %arg1[%c104, %c0_51] : memref<280x128xf32, #tpu.memory_space<vmem>>, vector<24x24xf32>
    %cst_52 = arith.constant dense<0.000000e+00> : vector<32x24xf32>
    %98 = tpu.matmul %25, %87, %cst_52 {dimension_numbers = #tpu.dot_dimension_numbers<[1], [0], [0], [1], [0, 0, 1, 1], [], []>} : vector<32x32xf32>, vector<32x24xf32>, vector<32x24xf32> -> vector<32x24xf32>
    %cst_53 = arith.constant dense<0.000000e+00> : vector<32x24xf32>
    %99 = tpu.matmul %98, %97, %cst_53 {dimension_numbers = #tpu.dot_dimension_numbers<[1], [0], [0], [1], [0, 0, 1, 1], [], []>} : vector<32x24xf32>, vector<24x24xf32>, vector<32x24xf32> -> vector<32x24xf32>
    %100 = arith.addf %96, %99 : vector<32x24xf32>
    %c128 = arith.constant 128 : index
    %c0_54 = arith.constant 0 : index
    %101 = vector.load %arg1[%c128, %c0_54] : memref<280x128xf32, #tpu.memory_space<vmem>>, vector<24x24xf32>
    %cst_55 = arith.constant dense<0.000000e+00> : vector<32x24xf32>
    %102 = tpu.matmul %31, %87, %cst_55 {dimension_numbers = #tpu.dot_dimension_numbers<[1], [0], [0], [1], [0, 0, 1, 1], [], []>} : vector<32x32xf32>, vector<32x24xf32>, vector<32x24xf32> -> vector<32x24xf32>
    %cst_56 = arith.constant dense<0.000000e+00> : vector<32x24xf32>
    %103 = tpu.matmul %102, %101, %cst_56 {dimension_numbers = #tpu.dot_dimension_numbers<[1], [0], [0], [1], [0, 0, 1, 1], [], []>} : vector<32x24xf32>, vector<24x24xf32>, vector<32x24xf32> -> vector<32x24xf32>
    %104 = arith.addf %100, %103 : vector<32x24xf32>
    %c152 = arith.constant 152 : index
    %c0_57 = arith.constant 0 : index
    %105 = vector.load %arg1[%c152, %c0_57] : memref<280x128xf32, #tpu.memory_space<vmem>>, vector<24x24xf32>
    %cst_58 = arith.constant dense<0.000000e+00> : vector<32x24xf32>
    %106 = tpu.matmul %37, %87, %cst_58 {dimension_numbers = #tpu.dot_dimension_numbers<[1], [0], [0], [1], [0, 0, 1, 1], [], []>} : vector<32x32xf32>, vector<32x24xf32>, vector<32x24xf32> -> vector<32x24xf32>
    %cst_59 = arith.constant dense<0.000000e+00> : vector<32x24xf32>
    %107 = tpu.matmul %106, %105, %cst_59 {dimension_numbers = #tpu.dot_dimension_numbers<[1], [0], [0], [1], [0, 0, 1, 1], [], []>} : vector<32x24xf32>, vector<24x24xf32>, vector<32x24xf32> -> vector<32x24xf32>
    %108 = arith.addf %104, %107 : vector<32x24xf32>
    %c176 = arith.constant 176 : index
    %c0_60 = arith.constant 0 : index
    %109 = vector.load %arg1[%c176, %c0_60] : memref<280x128xf32, #tpu.memory_space<vmem>>, vector<24x24xf32>
    %cst_61 = arith.constant dense<0.000000e+00> : vector<32x24xf32>
    %110 = tpu.matmul %43, %87, %cst_61 {dimension_numbers = #tpu.dot_dimension_numbers<[1], [0], [0], [1], [0, 0, 1, 1], [], []>} : vector<32x32xf32>, vector<32x24xf32>, vector<32x24xf32> -> vector<32x24xf32>
    %cst_62 = arith.constant dense<0.000000e+00> : vector<32x24xf32>
    %111 = tpu.matmul %110, %109, %cst_62 {dimension_numbers = #tpu.dot_dimension_numbers<[1], [0], [0], [1], [0, 0, 1, 1], [], []>} : vector<32x24xf32>, vector<24x24xf32>, vector<32x24xf32> -> vector<32x24xf32>
    %112 = arith.addf %108, %111 : vector<32x24xf32>
    %c200 = arith.constant 200 : index
    %c0_63 = arith.constant 0 : index
    %113 = vector.load %arg1[%c200, %c0_63] : memref<280x128xf32, #tpu.memory_space<vmem>>, vector<24x24xf32>
    %cst_64 = arith.constant dense<0.000000e+00> : vector<32x24xf32>
    %114 = tpu.matmul %49, %87, %cst_64 {dimension_numbers = #tpu.dot_dimension_numbers<[1], [0], [0], [1], [0, 0, 1, 1], [], []>} : vector<32x32xf32>, vector<32x24xf32>, vector<32x24xf32> -> vector<32x24xf32>
    %cst_65 = arith.constant dense<0.000000e+00> : vector<32x24xf32>
    %115 = tpu.matmul %114, %113, %cst_65 {dimension_numbers = #tpu.dot_dimension_numbers<[1], [0], [0], [1], [0, 0, 1, 1], [], []>} : vector<32x24xf32>, vector<24x24xf32>, vector<32x24xf32> -> vector<32x24xf32>
    %116 = arith.addf %112, %115 : vector<32x24xf32>
    %117 = vector.broadcast %51 : vector<1x24xf32> to vector<32x24xf32>
    %118 = arith.addf %116, %117 : vector<32x24xf32>
    %cst_66 = arith.constant 0.000000e+00 : f32
    %119 = vector.broadcast %cst_66 : f32 to vector<32x24xf32>
    %120 = arith.maximumf %118, %119 : vector<32x24xf32>
    %c224 = arith.constant 224 : index
    %c0_67 = arith.constant 0 : index
    %121 = vector.load %arg1[%c224, %c0_67] : memref<280x128xf32, #tpu.memory_space<vmem>>, vector<24x32xf32>
    %c248 = arith.constant 248 : index
    %c0_68 = arith.constant 0 : index
    %122 = vector.load %arg1[%c248, %c0_68] : memref<280x128xf32, #tpu.memory_space<vmem>>, vector<32x128xf32>
    %cst_69 = arith.constant dense<0.000000e+00> : vector<32x32xf32>
    %123 = tpu.matmul %120, %121, %cst_69 {dimension_numbers = #tpu.dot_dimension_numbers<[1], [0], [0], [1], [0, 0, 1, 1], [], []>} : vector<32x24xf32>, vector<24x32xf32>, vector<32x32xf32> -> vector<32x32xf32>
    %124 = vector.broadcast %52 : vector<1x32xf32> to vector<32x32xf32>
    %125 = arith.addf %123, %124 : vector<32x32xf32>
    %cst_70 = arith.constant 0.000000e+00 : f32
    %126 = vector.broadcast %cst_70 : f32 to vector<32x32xf32>
    %127 = arith.maximumf %125, %126 : vector<32x32xf32>
    %cst_71 = arith.constant dense<0.000000e+00> : vector<32x128xf32>
    %128 = tpu.matmul %127, %122, %cst_71 {dimension_numbers = #tpu.dot_dimension_numbers<[1], [0], [0], [1], [0, 0, 1, 1], [], []>} : vector<32x32xf32>, vector<32x128xf32>, vector<32x128xf32> -> vector<32x128xf32>
    %129 = vector.broadcast %53 : vector<1x128xf32> to vector<32x128xf32>
    %130 = arith.addf %128, %129 : vector<32x128xf32>
    %c0_72 = arith.constant 0 : index
    %c0_73 = arith.constant 0 : index
    %131 = vector.load %arg3[%c0_72, %c0_73] : memref<32x128xf32, #tpu.memory_space<vmem>>, vector<32x128xf32>
    tpu.vector_store %arg3[%c0_72, %c0_73], %130 {strides = array<i32>} : memref<32x128xf32, #tpu.memory_space<vmem>>, vector<32x128xf32>,
    return
  }
}

</mosaic_0001>

<llo_original>
// kernel: multiscale_cnn_forward.1
$region0: #{multiscale_cnn_forward.1}
  #allocation0 [shape = 'u32[]', space=smem, size = 0x4, offset = 0x4, fixed_abs, tag = 'smem constant byte address 0x4 - core index']
  #allocation1 [shape = 'u32[144,128]{1,0:T(1,128)}', space=vmem, size = 0x12000, scoped, tag = 'internal scratch']
  %s0 = inlined_call_operand.vmem [shape: f32[32,8], index: 0, kind: input, shape index: {}]
  %s1 = inlined_call_operand.hbm [shape: f32[280,128], index: 1, kind: input, shape index: {}]
  %s2 = inlined_call_operand.vmem [shape: f32[8,128], index: 2, kind: input, shape index: {}]
  %s3 = inlined_call_operand.vmem [shape: f32[32,128], index: 3, kind: output, shape index: {}]
  %s4 = sld [smem:[#allocation0]]
  $region26: #{multiscale_cnn_forward.1} parent=0
    _
  %s6 = ssub.s32 1, %s4
  %s7 = scalar_select 0, %s6, %s4
  $region1: #{multiscale_cnn_forward.1} parent=0
    #allocation2 [shape = 'u8[143360]{0}', space=vmem, size = 0x23000, scoped, tag = 'input window, operand 1, single buffered']
    #allocation3 [shape = 's32[1]{0}', space=sflag, size = 0x4, scoped, tag = 'scoped memory for multiscale_cnn_forward.1']
    %8 = vsyncpa [#allocation3], 0
    // Predicated region
    $region2: #{multiscale_cnn_forward.1} parent=1 // pred_check
      _
    $region3: #{multiscale_cnn_forward.1} parent=1 // pred_check_branch
      %10 = sbr.rel (0) target = $region5
    $region4: #{multiscale_cnn_forward.1} parent=1 // pred_region
      _
    $region5: #{multiscale_cnn_forward.1} parent=1 // pred_fallthru
      _
    // Predicated region
    $region6: #{multiscale_cnn_forward.1} parent=1 // pred_check
      _
    $region7: #{multiscale_cnn_forward.1} parent=1 // pred_check_branch
      %12 = sbr.rel (0) target = $region9
    $region8: #{multiscale_cnn_forward.1} parent=1 // pred_region
      %s14 = ssub.s32 4480, 4480
      %15 = vsyncadd [#allocation3], %s14
      %s16 = sshll.u32 [#allocation2], 4
      %s17 = int_to_ptr.vmem [resolvable:$true] %s16
      %22 = dma.hbm_to_vmem [thread:$0]  %s1, 4480, %s17, [#allocation3], 128, 128, 8
    $region9: #{multiscale_cnn_forward.1} parent=1 // pred_fallthru
      _
    // Predicated region
    $region10: #{multiscale_cnn_forward.1} parent=1 // pred_check
      _
    $region11: #{multiscale_cnn_forward.1} parent=1 // pred_check_branch
      %24 = sbr.rel (0) target = $region13
    $region12: #{multiscale_cnn_forward.1} parent=1 // pred_region
      _
    $region13: #{multiscale_cnn_forward.1} parent=1 // pred_fallthru
      _
    // Predicated region
    $region14: #{multiscale_cnn_forward.1} parent=1 // pred_check
      _
    $region15: #{multiscale_cnn_forward.1} parent=1 // pred_check_branch
      %26 = sbr.rel (0) target = $region17
    $region16: #{multiscale_cnn_forward.1} parent=1 // pred_region
      %27 = dma.done [#allocation3], 4480
    $region17: #{multiscale_cnn_forward.1} parent=1 // pred_fallthru
      _
    %v28 = vlaneseq
    %v29 = vshrl.u32 %v28, 7
    %v30 = vadd.s32 %v29, 8
    %v31 = vadd.s32 %v29, 16
    %v32 = vadd.s32 %v29, 24
    %v33 = vlaneseq
    %v34 = vand.u32 %v33, 127
    %v35 = vshra.s32 %v29, 4
    %v36 = vshra.s32 %v30, 4
    %v37 = vshra.s32 %v31, 4
    %v38 = vshra.s32 %v32, 4
    %v39 = vshra.s32 %v34, 4
    %vm40 = vcmp.eq.s32.totalorder %v35, %v39
    %vm41 = vcmp.eq.s32.totalorder %v36, %v39
    %vm42 = vcmp.eq.s32.totalorder %v37, %v39
    %vm43 = vcmp.eq.s32.totalorder %v38, %v39
    %v44 = vsub.s32 %v34, %v29
    %v45 = vsub.s32 %v34, %v30
    %v46 = vsub.s32 %v34, %v31
    %v47 = vsub.s32 %v34, %v32
    %vm48 = vcmp.eq.s32.totalorder %v44, 4294967293
    %vm49 = vcmp.eq.s32.totalorder %v45, 4294967293
    %vm50 = vcmp.eq.s32.totalorder %v46, 4294967293
    %vm51 = vcmp.eq.s32.totalorder %v47, 4294967293
    %vm52 = vmand %vm48, %vm40
    %vm53 = vmand %vm49, %vm41
    %vm54 = vmand %vm50, %vm42
    %vm55 = vmand %vm51, %vm43
    %v56 = vsel %vm52, 1.0, 0.0
    %v57 = vsel %vm53, 1.0, 0.0
    %v58 = vsel %vm54, 1.0, 0.0
    %v59 = vsel %vm55, 1.0, 0.0
    %vm60 = vcmp.eq.s32.totalorder %v44, 4294967294
    %vm61 = vcmp.eq.s32.totalorder %v45, 4294967294
    %vm62 = vcmp.eq.s32.totalorder %v46, 4294967294
    %vm63 = vcmp.eq.s32.totalorder %v47, 4294967294
    %vm64 = vmand %vm60, %vm40
    %vm65 = vmand %vm61, %vm41
    %vm66 = vmand %vm62, %vm42
    %vm67 = vmand %vm63, %vm43
    %v68 = vsel %vm64, 1.0, 0.0
    %v69 = vsel %vm65, 1.0, 0.0
    %v70 = vsel %vm66, 1.0, 0.0
    %v71 = vsel %vm67, 1.0, 0.0
    %vm72 = vcmp.eq.s32.totalorder %v44, 4294967295
    %vm73 = vcmp.eq.s32.totalorder %v45, 4294967295
    %vm74 = vcmp.eq.s32.totalorder %v46, 4294967295
    %vm75 = vcmp.eq.s32.totalorder %v47, 4294967295
    %vm76 = vmand %vm72, %vm40
    %vm77 = vmand %vm73, %vm41
    %vm78 = vmand %vm74, %vm42
    %vm79 = vmand %vm75, %vm43
    %v80 = vsel %vm76, 1.0, 0.0
    %v81 = vsel %vm77, 1.0, 0.0
    %v82 = vsel %vm78, 1.0, 0.0
    %v83 = vsel %vm79, 1.0, 0.0
    %vm84 = vcmp.eq.s32.totalorder %v44, 0
    %vm85 = vcmp.eq.s32.totalorder %v45, 0
    %vm86 = vcmp.eq.s32.totalorder %v46, 0
    %vm87 = vcmp.eq.s32.totalorder %v47, 0
    %vm88 = vmand %vm84, %vm40
    %vm89 = vmand %vm85, %vm41
    %vm90 = vmand %vm86, %vm42
    %vm91 = vmand %vm87, %vm43
    %v92 = vsel %vm88, 1.0, 0.0
    %v93 = vsel %vm89, 1.0, 0.0
    %v94 = vsel %vm90, 1.0, 0.0
    %v95 = vsel %vm91, 1.0, 0.0
    %vm96 = vcmp.eq.s32.totalorder %v44, 1
    %vm97 = vcmp.eq.s32.totalorder %v45, 1
    %vm98 = vcmp.eq.s32.totalorder %v46, 1
    %vm99 = vcmp.eq.s32.totalorder %v47, 1
    %vm100 = vmand %vm96, %vm40
    %vm101 = vmand %vm97, %vm41
    %vm102 = vmand %vm98, %vm42
    %vm103 = vmand %vm99, %vm43
    %v104 = vsel %vm100, 1.0, 0.0
    %v105 = vsel %vm101, 1.0, 0.0
    %v106 = vsel %vm102, 1.0, 0.0
    %v107 = vsel %vm103, 1.0, 0.0
    %vm108 = vcmp.eq.s32.totalorder %v44, 2
    %vm109 = vcmp.eq.s32.totalorder %v45, 2
    %vm110 = vcmp.eq.s32.totalorder %v46, 2
    %vm111 = vcmp.eq.s32.totalorder %v47, 2
    %vm112 = vmand %vm108, %vm40
    %vm113 = vmand %vm109, %vm41
    %vm114 = vmand %vm110, %vm42
    %vm115 = vmand %vm111, %vm43
    %v116 = vsel %vm112, 1.0, 0.0
    %v117 = vsel %vm113, 1.0, 0.0
    %v118 = vsel %vm114, 1.0, 0.0
    %v119 = vsel %vm115, 1.0, 0.0
    %vm120 = vcmp.eq.s32.totalorder %v44, 3
    %vm121 = vcmp.eq.s32.totalorder %v45, 3
    %vm122 = vcmp.eq.s32.totalorder %v46, 3
    %vm123 = vcmp.eq.s32.totalorder %v47, 3
    %vm124 = vmand %vm120, %vm40
    %vm125 = vmand %vm121, %vm41
    %vm126 = vmand %vm122, %vm42
    %vm127 = vmand %vm123, %vm43
    %v128 = vsel %vm124, 1.0, 0.0
    %v129 = vsel %vm125, 1.0, 0.0
    %v130 = vsel %vm126, 1.0, 0.0
    %v131 = vsel %vm127, 1.0, 0.0
    %v132 = vld [vmem:[%s2] sm:$0x1]
    %v133 = vld [vmem:[%s2 + $0x1] sm:$0x1]
    %v134 = vld [vmem:[%s2 + $0x2] sm:$0x1]
    %v135 = vld [vmem:[%s2 + $0x3] sm:$0x1]
    %v136 = vld [vmem:[%s0] sm:$0xff]
    %v137 = vld [vmem:[%s0 + $0x8] sm:$0xff]
    %v138 = vld [vmem:[%s0 + $0x10] sm:$0xff]
    %v139 = vld [vmem:[%s0 + $0x18] sm:$0xff]
    %v140 = vld [vmem:[#allocation2] sm:$0xff]
    %vm141 = vcmask 261120
    %v143 = vsel %vm141, %v56, 0
    %v146 = vsel %vm141, %v57, 0
    %v149 = vsel %vm141, %v58, 0
    %v152 = vsel %vm141, %v59, 0
    %154 = vmatprep.subr.mxu0 0.0
    %155 = vmatpush1.msra.mxu0 0.0
    %156 = vmatprep.subr.mxu0 0.0
    %157 = vmatpush1.msra.mxu0 0.0
    %158 = vmatprep.subr.mxu0 0.0
    %159 = vmatpush1.msra.mxu0 0.0
    %160 = vmatprep.subr.mxu0 0.0
    %161 = vmatpush1.msra.mxu0 0.0
    %162 = vmatprep.subr.mxu0 0.0
    %163 = vmatpush1.msra.mxu0 0.0
    %164 = vmatprep.subr.mxu0 0.0
    %165 = vmatpush1.msra.mxu0 0.0
    %166 = vmatprep.subr.mxu0 0.0
    %167 = vmatpush1.msra.mxu0 0.0
    %168 = vmatprep.subr.mxu0 0.0
    %169 = vmatpush1.msra.mxu0 0.0
    %170 = vmatprep.subr.mxu0 0.0
    %171 = vmatpush1.msra.mxu0 0.0
    %172 = vmatprep.subr.mxu0 0.0
    %173 = vmatpush1.msra.mxu0 0.0
    %174 = vmatprep.subr.mxu0 0.0
    %175 = vmatpush1.msra.mxu0 0.0
    %176 = vmatprep.subr.mxu0 0.0
    %177 = vmatpush1.msra.mxu0 0.0
    %178 = vmatprep.subr.mxu0 0.0
    %179 = vmatpush1.msra.mxu0 %v139
    %180 = vmatprep.subr.mxu0 0.0
    %181 = vmatpush1.msra.mxu0 %v138
    %182 = vmatprep.subr.mxu0 0.0
    %183 = vmatpush1.msra.mxu0 %v137
    %184 = vmatprep.subr.mxu0 0.0
    %185 = vmatpush1.msra.mxu0 %v136
    %186 = vmatprep.subr.mxu0 0.0
    %187 = vmatpush2.msra.mxu0 0.0
    %188 = vmatprep.subr.mxu0 0.0
    %189 = vmatpush2.msra.mxu0 0.0
    %190 = vmatprep.subr.mxu0 0.0
    %191 = vmatpush2.msra.mxu0 0.0
    %192 = vmatprep.subr.mxu0 0.0
    %193 = vmatpush2.msra.mxu0 0.0
    %194 = vmatprep.subr.mxu0 0.0
    %195 = vmatpush2.msra.mxu0 0.0
    %196 = vmatprep.subr.mxu0 0.0
    %197 = vmatpush2.msra.mxu0 0.0
    %198 = vmatprep.subr.mxu0 0.0
    %199 = vmatpush2.msra.mxu0 0.0
    %200 = vmatprep.subr.mxu0 0.0
    %201 = vmatpush2.msra.mxu0 0.0
    %202 = vmatprep.subr.mxu0 0.0
    %203 = vmatpush2.msra.mxu0 0.0
    %204 = vmatprep.subr.mxu0 0.0
    %205 = vmatpush2.msra.mxu0 0.0
    %206 = vmatprep.subr.mxu0 0.0
    %207 = vmatpush2.msra.mxu0 0.0
    %208 = vmatprep.subr.mxu0 0.0
    %209 = vmatpush2.msra.mxu0 0.0
    %210 = vmatprep.subr.mxu0 0.0
    %211 = vmatpush2.msra.mxu0 0.0
    %212 = vmatprep.subr.mxu0 0.0
    %213 = vmatpush2.msra.mxu0 0.0
    %214 = vmatprep.subr.mxu0 0.0
    %215 = vmatpush2.msra.mxu0 0.0
    %216 = vmatprep.subr.mxu0 0.0
    %217 = vmatpush2.msra.mxu0 0.0
    %218 = vmatprep.mubr.f32.mxu0 0.0
    %219 = vmatmul.mubr.f32.gmra.mxu0 %v143
    %v220 = vpop.f32.mrf.mxu0
    %v221 = vadd.f32 0.0, %v220
    %v222 = vpop.f32.mrf.mxu0
    %223 = vmatprep.mubr.f32.mxu0 0.0
    %224 = vmatmul.mubr.f32.gmra.mxu0 %v146
    %v225 = vpop.f32.mrf.mxu0
    %v226 = vadd.f32 0.0, %v225
    %v227 = vpop.f32.mrf.mxu0
    %228 = vmatprep.mubr.f32.mxu0 0.0
    %229 = vmatmul.mubr.f32.gmra.mxu0 %v149
    %v230 = vpop.f32.mrf.mxu0
    %v231 = vadd.f32 0.0, %v230
    %v232 = vpop.f32.mrf.mxu0
    %233 = vmatprep.mubr.f32.mxu0 0.0
    %234 = vmatmul.mubr.f32.gmra.mxu0 %v152
    %v235 = vpop.f32.mrf.mxu0
    %v236 = vadd.f32 0.0, %v235
    %v237 = vpop.f32.mrf.mxu0
    %238 = vdwg.mxu0
    %v239 = vld [vmem:[#allocation2 + $0x8] sm:$0xff]
    %v241 = vsel %vm141, %v68, 0
    %v244 = vsel %vm141, %v69, 0
    %v247 = vsel %vm141, %v70, 0
    %v250 = vsel %vm141, %v71, 0
    %252 = vmatprep.subr.mxu0 0.0
    %253 = vmatpush1.msra.mxu0 0.0
    %254 = vmatprep.subr.mxu0 0.0
    %255 = vmatpush1.msra.mxu0 0.0
    %256 = vmatprep.subr.mxu0 0.0
    %257 = vmatpush1.msra.mxu0 0.0
    %258 = vmatprep.subr.mxu0 0.0
    %259 = vmatpush1.msra.mxu0 0.0
    %260 = vmatprep.subr.mxu0 0.0
    %261 = vmatpush1.msra.mxu0 0.0
    %262 = vmatprep.subr.mxu0 0.0
    %263 = vmatpush1.msra.mxu0 0.0
    %264 = vmatprep.subr.mxu0 0.0
    %265 = vmatpush1.msra.mxu0 0.0
    %266 = vmatprep.subr.mxu0 0.0
    %267 = vmatpush1.msra.mxu0 0.0
    %268 = vmatprep.subr.mxu0 0.0
    %269 = vmatpush1.msra.mxu0 0.0
    %270 = vmatprep.subr.mxu0 0.0
    %271 = vmatpush1.msra.mxu0 0.0
    %272 = vmatprep.subr.mxu0 0.0
    %273 = vmatpush1.msra.mxu0 0.0
    %274 = vmatprep.subr.mxu0 0.0
    %275 = vmatpush1.msra.mxu0 0.0
    %276 = vmatprep.subr.mxu0 0.0
    %277 = vmatpush1.msra.mxu0 %v139
    %278 = vmatprep.subr.mxu0 0.0
    %279 = vmatpush1.msra.mxu0 %v138
    %280 = vmatprep.subr.mxu0 0.0
    %281 = vmatpush1.msra.mxu0 %v137
    %282 = vmatprep.subr.mxu0 0.0
    %283 = vmatpush1.msra.mxu0 %v136
    %284 = vmatprep.subr.mxu0 0.0
    %285 = vmatpush2.msra.mxu0 0.0
    %286 = vmatprep.subr.mxu0 0.0
    %287 = vmatpush2.msra.mxu0 0.0
    %288 = vmatprep.subr.mxu0 0.0
    %289 = vmatpush2.msra.mxu0 0.0
    %290 = vmatprep.subr.mxu0 0.0
    %291 = vmatpush2.msra.mxu0 0.0
    %292 = vmatprep.subr.mxu0 0.0
    %293 = vmatpush2.msra.mxu0 0.0
    %294 = vmatprep.subr.mxu0 0.0
    %295 = vmatpush2.msra.mxu0 0.0
    %296 = vmatprep.subr.mxu0 0.0
    %297 = vmatpush2.msra.mxu0 0.0
    %298 = vmatprep.subr.mxu0 0.0
    %299 = vmatpush2.msra.mxu0 0.0
    %300 = vmatprep.subr.mxu0 0.0
    %301 = vmatpush2.msra.mxu0 0.0
    %302 = vmatprep.subr.mxu0 0.0
    %303 = vmatpush2.msra.mxu0 0.0
    %304 = vmatprep.subr.mxu0 0.0
    %305 = vmatpush2.msra.mxu0 0.0
    %306 = vmatprep.subr.mxu0 0.0
    %307 = vmatpush2.msra.mxu0 0.0
    %308 = vmatprep.subr.mxu0 0.0
    %309 = vmatpush2.msra.mxu0 0.0
    %310 = vmatprep.subr.mxu0 0.0
    %311 = vmatpush2.msra.mxu0 0.0
    %312 = vmatprep.subr.mxu0 0.0
    %313 = vmatpush2.msra.mxu0 0.0
    %314 = vmatprep.subr.mxu0 0.0
    %315 = vmatpush2.msra.mxu0 0.0
    %316 = vmatprep.mubr.f32.mxu0 0.0
    %317 = vmatmul.mubr.f32.gmra.mxu0 %v241
    %v318 = vpop.f32.mrf.mxu0
    %v319 = vadd.f32 0.0, %v318
    %v320 = vpop.f32.mrf.mxu0
    %321 = vmatprep.mubr.f32.mxu0 0.0
    %322 = vmatmul.mubr.f32.gmra.mxu0 %v244
    %v323 = vpop.f32.mrf.mxu0
    %v324 = vadd.f32 0.0, %v323
    %v325 = vpop.f32.mrf.mxu0
    %326 = vmatprep.mubr.f32.mxu0 0.0
    %327 = vmatmul.mubr.f32.gmra.mxu0 %v247
    %v328 = vpop.f32.mrf.mxu0
    %v329 = vadd.f32 0.0, %v328
    %v330 = vpop.f32.mrf.mxu0
    %331 = vmatprep.mubr.f32.mxu0 0.0
    %332 = vmatmul.mubr.f32.gmra.mxu0 %v250
    %v333 = vpop.f32.mrf.mxu0
    %v334 = vadd.f32 0.0, %v333
    %v335 = vpop.f32.mrf.mxu0
    %336 = vdwg.mxu0
    %vm337 = vcmask 64512
    %v339 = vsel %vm337, %v319, 0
    %v342 = vsel %vm337, %v324, 0
    %v345 = vsel %vm337, %v329, 0
    %v348 = vsel %vm337, %v334, 0
    %350 = vmatprep.subr.mxu0 0.0
    %351 = vmatpush1.msra.mxu0 0.0
    %352 = vmatprep.subr.mxu0 0.0
    %353 = vmatpush1.msra.mxu0 0.0
    %354 = vmatprep.subr.mxu0 0.0
    %355 = vmatpush1.msra.mxu0 0.0
    %356 = vmatprep.subr.mxu0 0.0
    %357 = vmatpush1.msra.mxu0 0.0
    %358 = vmatprep.subr.mxu0 0.0
    %359 = vmatpush1.msra.mxu0 0.0
    %360 = vmatprep.subr.mxu0 0.0
    %361 = vmatpush1.msra.mxu0 0.0
    %362 = vmatprep.subr.mxu0 0.0
    %363 = vmatpush1.msra.mxu0 0.0
    %364 = vmatprep.subr.mxu0 0.0
    %365 = vmatpush1.msra.mxu0 0.0
    %366 = vmatprep.subr.mxu0 0.0
    %367 = vmatpush1.msra.mxu0 0.0
    %368 = vmatprep.subr.mxu0 0.0
    %369 = vmatpush1.msra.mxu0 0.0
    %370 = vmatprep.subr.mxu0 0.0
    %371 = vmatpush1.msra.mxu0 0.0
    %372 = vmatprep.subr.mxu0 0.0
    %373 = vmatpush1.msra.mxu0 0.0
    %374 = vmatprep.subr.mxu0 0.0
    %375 = vmatpush1.msra.mxu0 0.0
    %376 = vmatprep.subr.mxu0 0.0
    %377 = vmatpush1.msra.mxu0 0.0
    %378 = vmatprep.subr.mxu0 0.0
    %379 = vmatpush1.msra.mxu0 0.0
    %380 = vmatprep.subr.mxu0 0.0
    %381 = vmatpush1.msra.mxu0 %v239
    %382 = vmatprep.subr.mxu0 0.0
    %383 = vmatpush2.msra.mxu0 0.0
    %384 = vmatprep.subr.mxu0 0.0
    %385 = vmatpush2.msra.mxu0 0.0
    %386 = vmatprep.subr.mxu0 0.0
    %387 = vmatpush2.msra.mxu0 0.0
    %388 = vmatprep.subr.mxu0 0.0
    %389 = vmatpush2.msra.mxu0 0.0
    %390 = vmatprep.subr.mxu0 0.0
    %391 = vmatpush2.msra.mxu0 0.0
    %392 = vmatprep.subr.mxu0 0.0
    %393 = vmatpush2.msra.mxu0 0.0
    %394 = vmatprep.subr.mxu0 0.0
    %395 = vmatpush2.msra.mxu0 0.0
    %396 = vmatprep.subr.mxu0 0.0
    %397 = vmatpush2.msra.mxu0 0.0
    %398 = vmatprep.subr.mxu0 0.0
    %399 = vmatpush2.msra.mxu0 0.0
    %400 = vmatprep.subr.mxu0 0.0
    %401 = vmatpush2.msra.mxu0 0.0
    %402 = vmatprep.subr.mxu0 0.0
    %403 = vmatpush2.msra.mxu0 0.0
    %404 = vmatprep.subr.mxu0 0.0
    %405 = vmatpush2.msra.mxu0 0.0
    %406 = vmatprep.subr.mxu0 0.0
    %407 = vmatpush2.msra.mxu0 0.0
    %408 = vmatprep.subr.mxu0 0.0
    %409 = vmatpush2.msra.mxu0 0.0
    %410 = vmatprep.subr.mxu0 0.0
    %411 = vmatpush2.msra.mxu0 0.0
    %412 = vmatprep.subr.mxu0 0.0
    %413 = vmatpush2.msra.mxu0 0.0
    %414 = vmatprep.mubr.f32.mxu0 0.0
    %415 = vmatmul.mubr.f32.gmra.mxu0 %v339
    %v416 = vpop.f32.mrf.mxu0
    %v417 = vadd.f32 0.0, %v416
    %v418 = vpop.f32.mrf.mxu0
    %419 = vmatprep.mubr.f32.mxu0 0.0
    %420 = vmatmul.mubr.f32.gmra.mxu0 %v342
    %v421 = vpop.f32.mrf.mxu0
    %v422 = vadd.f32 0.0, %v421
    %v423 = vpop.f32.mrf.mxu0
    %424 = vmatprep.mubr.f32.mxu0 0.0
    %425 = vmatmul.mubr.f32.gmra.mxu0 %v345
    %v426 = vpop.f32.mrf.mxu0
    %v427 = vadd.f32 0.0, %v426
    %v428 = vpop.f32.mrf.mxu0
    %429 = vmatprep.mubr.f32.mxu0 0.0
    %430 = vmatmul.mubr.f32.gmra.mxu0 %v348
    %v431 = vpop.f32.mrf.mxu0
    %v432 = vadd.f32 0.0, %v431
    %v433 = vpop.f32.mrf.mxu0
    %434 = vdwg.mxu0
    %v436 = vsel %vm337, %v221, 0
    %v439 = vsel %vm337, %v226, 0
    %v442 = vsel %vm337, %v231, 0
    %v445 = vsel %vm337, %v236, 0
    %447 = vmatprep.subr.mxu0 0.0
    %448 = vmatpush1.msra.mxu0 0.0
    %449 = vmatprep.subr.mxu0 0.0
    %450 = vmatpush1.msra.mxu0 0.0
    %451 = vmatprep.subr.mxu0 0.0
    %452 = vmatpush1.msra.mxu0 0.0
    %453 = vmatprep.subr.mxu0 0.0
    %454 = vmatpush1.msra.mxu0 0.0
    %455 = vmatprep.subr.mxu0 0.0
    %456 = vmatpush1.msra.mxu0 0.0
    %457 = vmatprep.subr.mxu0 0.0
    %458 = vmatpush1.msra.mxu0 0.0
    %459 = vmatprep.subr.mxu0 0.0
    %460 = vmatpush1.msra.mxu0 0.0
    %461 = vmatprep.subr.mxu0 0.0
    %462 = vmatpush1.msra.mxu0 0.0
    %463 = vmatprep.subr.mxu0 0.0
    %464 = vmatpush1.msra.mxu0 0.0
    %465 = vmatprep.subr.mxu0 0.0
    %466 = vmatpush1.msra.mxu0 0.0
    %467 = vmatprep.subr.mxu0 0.0
    %468 = vmatpush1.msra.mxu0 0.0
    %469 = vmatprep.subr.mxu0 0.0
    %470 = vmatpush1.msra.mxu0 0.0
    %471 = vmatprep.subr.mxu0 0.0
    %472 = vmatpush1.msra.mxu0 0.0
    %473 = vmatprep.subr.mxu0 0.0
    %474 = vmatpush1.msra.mxu0 0.0
    %475 = vmatprep.subr.mxu0 0.0
    %476 = vmatpush1.msra.mxu0 0.0
    %477 = vmatprep.subr.mxu0 0.0
    %478 = vmatpush1.msra.mxu0 %v140
    %479 = vmatprep.subr.mxu0 0.0
    %480 = vmatpush2.msra.mxu0 0.0
    %481 = vmatprep.subr.mxu0 0.0
    %482 = vmatpush2.msra.mxu0 0.0
    %483 = vmatprep.subr.mxu0 0.0
    %484 = vmatpush2.msra.mxu0 0.0
    %485 = vmatprep.subr.mxu0 0.0
    %486 = vmatpush2.msra.mxu0 0.0
    %487 = vmatprep.subr.mxu0 0.0
    %488 = vmatpush2.msra.mxu0 0.0
    %489 = vmatprep.subr.mxu0 0.0
    %490 = vmatpush2.msra.mxu0 0.0
    %491 = vmatprep.subr.mxu0 0.0
    %492 = vmatpush2.msra.mxu0 0.0
    %493 = vmatprep.subr.mxu0 0.0
    %494 = vmatpush2.msra.mxu0 0.0
    %495 = vmatprep.subr.mxu0 0.0
    %496 = vmatpush2.msra.mxu0 0.0
    %497 = vmatprep.subr.mxu0 0.0
    %498 = vmatpush2.msra.mxu0 0.0
    %499 = vmatprep.subr.mxu0 0.0
    %500 = vmatpush2.msra.mxu0 0.0
    %501 = vmatprep.subr.mxu0 0.0
    %502 = vmatpush2.msra.mxu0 0.0
    %503 = vmatprep.subr.mxu0 0.0
    %504 = vmatpush2.msra.mxu0 0.0
    %505 = vmatprep.subr.mxu0 0.0
    %506 = vmatpush2.msra.mxu0 0.0
    %507 = vmatprep.subr.mxu0 0.0
    %508 = vmatpush2.msra.mxu0 0.0
    %509 = vmatprep.subr.mxu0 0.0
    %510 = vmatpush2.msra.mxu0 0.0
    %511 = vmatprep.mubr.f32.mxu0 0.0
    %512 = vmatmul.mubr.f32.gmra.mxu0 %v436
    %v513 = vpop.f32.mrf.mxu0
    %v514 = vadd.f32 %v417, %v513
    %v515 = vpop.f32.mrf.mxu0
    %516 = vmatprep.mubr.f32.mxu0 0.0
    %517 = vmatmul.mubr.f32.gmra.mxu0 %v439
    %v518 = vpop.f32.mrf.mxu0
    %v519 = vadd.f32 %v422, %v518
    %v520 = vpop.f32.mrf.mxu0
    %521 = vmatprep.mubr.f32.mxu0 0.0
    %522 = vmatmul.mubr.f32.gmra.mxu0 %v442
    %v523 = vpop.f32.mrf.mxu0
    %v524 = vadd.f32 %v427, %v523
    %v525 = vpop.f32.mrf.mxu0
    %526 = vmatprep.mubr.f32.mxu0 0.0
    %527 = vmatmul.mubr.f32.gmra.mxu0 %v445
    %v528 = vpop.f32.mrf.mxu0
    %v529 = vadd.f32 %v432, %v528
    %v530 = vpop.f32.mrf.mxu0
    %531 = vdwg.mxu0
    %v532 = vld [vmem:[#allocation2 + $0x10] sm:$0xff]
    %v534 = vsel %vm141, %v80, 0
    %v537 = vsel %vm141, %v81, 0
    %v540 = vsel %vm141, %v82, 0
    %v543 = vsel %vm141, %v83, 0
    %545 = vmatprep.subr.mxu0 0.0
    %546 = vmatpush1.msra.mxu0 0.0
    %547 = vmatprep.subr.mxu0 0.0
    %548 = vmatpush1.msra.mxu0 0.0
    %549 = vmatprep.subr.mxu0 0.0
    %550 = vmatpush1.msra.mxu0 0.0
    %551 = vmatprep.subr.mxu0 0.0
    %552 = vmatpush1.msra.mxu0 0.0
    %553 = vmatprep.subr.mxu0 0.0
    %554 = vmatpush1.msra.mxu0 0.0
    %555 = vmatprep.subr.mxu0 0.0
    %556 = vmatpush1.msra.mxu0 0.0
    %557 = vmatprep.subr.mxu0 0.0
    %558 = vmatpush1.msra.mxu0 0.0
    %559 = vmatprep.subr.mxu0 0.0
    %560 = vmatpush1.msra.mxu0 0.0
    %561 = vmatprep.subr.mxu0 0.0
    %562 = vmatpush1.msra.mxu0 0.0
    %563 = vmatprep.subr.mxu0 0.0
    %564 = vmatpush1.msra.mxu0 0.0
    %565 = vmatprep.subr.mxu0 0.0
    %566 = vmatpush1.msra.mxu0 0.0
    %567 = vmatprep.subr.mxu0 0.0
    %568 = vmatpush1.msra.mxu0 0.0
    %569 = vmatprep.subr.mxu0 0.0
    %570 = vmatpush1.msra.mxu0 %v139
    %571 = vmatprep.subr.mxu0 0.0
    %572 = vmatpush1.msra.mxu0 %v138
    %573 = vmatprep.subr.mxu0 0.0
    %574 = vmatpush1.msra.mxu0 %v137
    %575 = vmatprep.subr.mxu0 0.0
    %576 = vmatpush1.msra.mxu0 %v136
    %577 = vmatprep.subr.mxu0 0.0
    %578 = vmatpush2.msra.mxu0 0.0
    %579 = vmatprep.subr.mxu0 0.0
    %580 = vmatpush2.msra.mxu0 0.0
    %581 = vmatprep.subr.mxu0 0.0
    %582 = vmatpush2.msra.mxu0 0.0
    %583 = vmatprep.subr.mxu0 0.0
    %584 = vmatpush2.msra.mxu0 0.0
    %585 = vmatprep.subr.mxu0 0.0
    %586 = vmatpush2.msra.mxu0 0.0
    %587 = vmatprep.subr.mxu0 0.0
    %588 = vmatpush2.msra.mxu0 0.0
    %589 = vmatprep.subr.mxu0 0.0
    %590 = vmatpush2.msra.mxu0 0.0
    %591 = vmatprep.subr.mxu0 0.0
    %592 = vmatpush2.msra.mxu0 0.0
    %593 = vmatprep.subr.mxu0 0.0
    %594 = vmatpush2.msra.mxu0 0.0
    %595 = vmatprep.subr.mxu0 0.0
    %596 = vmatpush2.msra.mxu0 0.0
    %597 = vmatprep.subr.mxu0 0.0
    %598 = vmatpush2.msra.mxu0 0.0
    %599 = vmatprep.subr.mxu0 0.0
    %600 = vmatpush2.msra.mxu0 0.0
    %601 = vmatprep.subr.mxu0 0.0
    %602 = vmatpush2.msra.mxu0 0.0
    %603 = vmatprep.subr.mxu0 0.0
    %604 = vmatpush2.msra.mxu0 0.0
    %605 = vmatprep.subr.mxu0 0.0
    %606 = vmatpush2.msra.mxu0 0.0
    %607 = vmatprep.subr.mxu0 0.0
    %608 = vmatpush2.msra.mxu0 0.0
    %609 = vmatprep.mubr.f32.mxu0 0.0
    %610 = vmatmul.mubr.f32.gmra.mxu0 %v534
    %v611 = vpop.f32.mrf.mxu0
    %v612 = vadd.f32 0.0, %v611
    %v613 = vpop.f32.mrf.mxu0
    %614 = vmatprep.mubr.f32.mxu0 0.0
    %615 = vmatmul.mubr.f32.gmra.mxu0 %v537
    %v616 = vpop.f32.mrf.mxu0
    %v617 = vadd.f32 0.0, %v616
    %v618 = vpop.f32.mrf.mxu0
    %619 = vmatprep.mubr.f32.mxu0 0.0
    %620 = vmatmul.mubr.f32.gmra.mxu0 %v540
    %v621 = vpop.f32.mrf.mxu0
    %v622 = vadd.f32 0.0, %v621
    %v623 = vpop.f32.mrf.mxu0
    %624 = vmatprep.mubr.f32.mxu0 0.0
    %625 = vmatmul.mubr.f32.gmra.mxu0 %v543
    %v626 = vpop.f32.mrf.mxu0
    %v627 = vadd.f32 0.0, %v626
    %v628 = vpop.f32.mrf.mxu0
    %629 = vdwg.mxu0
    %v631 = vsel %vm337, %v612, 0
    %v634 = vsel %vm337, %v617, 0
    %v637 = vsel %vm337, %v622, 0
    %v640 = vsel %vm337, %v627, 0
    %642 = vmatprep.subr.mxu0 0.0
    %643 = vmatpush1.msra.mxu0 0.0
    %644 = vmatprep.subr.mxu0 0.0
    %645 = vmatpush1.msra.mxu0 0.0
    %646 = vmatprep.subr.mxu0 0.0
    %647 = vmatpush1.msra.mxu0 0.0
    %648 = vmatprep.subr.mxu0 0.0
    %649 = vmatpush1.msra.mxu0 0.0
    %650 = vmatprep.subr.mxu0 0.0
    %651 = vmatpush1.msra.mxu0 0.0
    %652 = vmatprep.subr.mxu0 0.0
    %653 = vmatpush1.msra.mxu0 0.0
    %654 = vmatprep.subr.mxu0 0.0
    %655 = vmatpush1.msra.mxu0 0.0
    %656 = vmatprep.subr.mxu0 0.0
    %657 = vmatpush1.msra.mxu0 0.0
    %658 = vmatprep.subr.mxu0 0.0
    %659 = vmatpush1.msra.mxu0 0.0
    %660 = vmatprep.subr.mxu0 0.0
    %661 = vmatpush1.msra.mxu0 0.0
    %662 = vmatprep.subr.mxu0 0.0
    %663 = vmatpush1.msra.mxu0 0.0
    %664 = vmatprep.subr.mxu0 0.0
    %665 = vmatpush1.msra.mxu0 0.0
    %666 = vmatprep.subr.mxu0 0.0
    %667 = vmatpush1.msra.mxu0 0.0
    %668 = vmatprep.subr.mxu0 0.0
    %669 = vmatpush1.msra.mxu0 0.0
    %670 = vmatprep.subr.mxu0 0.0
    %671 = vmatpush1.msra.mxu0 0.0
    %672 = vmatprep.subr.mxu0 0.0
    %673 = vmatpush1.msra.mxu0 %v532
    %674 = vmatprep.subr.mxu0 0.0
    %675 = vmatpush2.msra.mxu0 0.0
    %676 = vmatprep.subr.mxu0 0.0
    %677 = vmatpush2.msra.mxu0 0.0
    %678 = vmatprep.subr.mxu0 0.0
    %679 = vmatpush2.msra.mxu0 0.0
    %680 = vmatprep.subr.mxu0 0.0
    %681 = vmatpush2.msra.mxu0 0.0
    %682 = vmatprep.subr.mxu0 0.0
    %683 = vmatpush2.msra.mxu0 0.0
    %684 = vmatprep.subr.mxu0 0.0
    %685 = vmatpush2.msra.mxu0 0.0
    %686 = vmatprep.subr.mxu0 0.0
    %687 = vmatpush2.msra.mxu0 0.0
    %688 = vmatprep.subr.mxu0 0.0
    %689 = vmatpush2.msra.mxu0 0.0
    %690 = vmatprep.subr.mxu0 0.0
    %691 = vmatpush2.msra.mxu0 0.0
    %692 = vmatprep.subr.mxu0 0.0
    %693 = vmatpush2.msra.mxu0 0.0
    %694 = vmatprep.subr.mxu0 0.0
    %695 = vmatpush2.msra.mxu0 0.0
    %696 = vmatprep.subr.mxu0 0.0
    %697 = vmatpush2.msra.mxu0 0.0
    %698 = vmatprep.subr.mxu0 0.0
    %699 = vmatpush2.msra.mxu0 0.0
    %700 = vmatprep.subr.mxu0 0.0
    %701 = vmatpush2.msra.mxu0 0.0
    %702 = vmatprep.subr.mxu0 0.0
    %703 = vmatpush2.msra.mxu0 0.0
    %704 = vmatprep.subr.mxu0 0.0
    %705 = vmatpush2.msra.mxu0 0.0
    %706 = vmatprep.mubr.f32.mxu0 0.0
    %707 = vmatmul.mubr.f32.gmra.mxu0 %v631
    %v708 = vpop.f32.mrf.mxu0
    %v709 = vadd.f32 0.0, %v708
    %v710 = vpop.f32.mrf.mxu0
    %711 = vmatprep.mubr.f32.mxu0 0.0
    %712 = vmatmul.mubr.f32.gmra.mxu0 %v634
    %v713 = vpop.f32.mrf.mxu0
    %v714 = vadd.f32 0.0, %v713
    %v715 = vpop.f32.mrf.mxu0
    %716 = vmatprep.mubr.f32.mxu0 0.0
    %717 = vmatmul.mubr.f32.gmra.mxu0 %v637
    %v718 = vpop.f32.mrf.mxu0
    %v719 = vadd.f32 0.0, %v718
    %v720 = vpop.f32.mrf.mxu0
    %721 = vmatprep.mubr.f32.mxu0 0.0
    %722 = vmatmul.mubr.f32.gmra.mxu0 %v640
    %v723 = vpop.f32.mrf.mxu0
    %v724 = vadd.f32 0.0, %v723
    %v725 = vpop.f32.mrf.mxu0
    %726 = vdwg.mxu0
    %v727 = vadd.f32 %v514, %v709
    %v728 = vadd.f32 %v519, %v714
    %v729 = vadd.f32 %v524, %v719
    %v730 = vadd.f32 %v529, %v724
    %v731 = vld [vmem:[#allocation2 + $0x18] sm:$0xff]
    %v733 = vsel %vm141, %v92, 0
    %v736 = vsel %vm141, %v93, 0
    %v739 = vsel %vm141, %v94, 0
    %v742 = vsel %vm141, %v95, 0
    %744 = vmatprep.subr.mxu0 0.0
    %745 = vmatpush1.msra.mxu0 0.0
    %746 = vmatprep.subr.mxu0 0.0
    %747 = vmatpush1.msra.mxu0 0.0
    %748 = vmatprep.subr.mxu0 0.0
    %749 = vmatpush1.msra.mxu0 0.0
    %750 = vmatprep.subr.mxu0 0.0
    %751 = vmatpush1.msra.mxu0 0.0
    %752 = vmatprep.subr.mxu0 0.0
    %753 = vmatpush1.msra.mxu0 0.0
    %754 = vmatprep.subr.mxu0 0.0
    %755 = vmatpush1.msra.mxu0 0.0
    %756 = vmatprep.subr.mxu0 0.0
    %757 = vmatpush1.msra.mxu0 0.0
    %758 = vmatprep.subr.mxu0 0.0
    %759 = vmatpush1.msra.mxu0 0.0
    %760 = vmatprep.subr.mxu0 0.0
    %761 = vmatpush1.msra.mxu0 0.0
    %762 = vmatprep.subr.mxu0 0.0
    %763 = vmatpush1.msra.mxu0 0.0
    %764 = vmatprep.subr.mxu0 0.0
    %765 = vmatpush1.msra.mxu0 0.0
    %766 = vmatprep.subr.mxu0 0.0
    %767 = vmatpush1.msra.mxu0 0.0
    %768 = vmatprep.subr.mxu0 0.0
    %769 = vmatpush1.msra.mxu0 %v139
    %770 = vmatprep.subr.mxu0 0.0
    %771 = vmatpush1.msra.mxu0 %v138
    %772 = vmatprep.subr.mxu0 0.0
    %773 = vmatpush1.msra.mxu0 %v137
    %774 = vmatprep.subr.mxu0 0.0
    %775 = vmatpush1.msra.mxu0 %v136
    %776 = vmatprep.subr.mxu0 0.0
    %777 = vmatpush2.msra.mxu0 0.0
    %778 = vmatprep.subr.mxu0 0.0
    %779 = vmatpush2.msra.mxu0 0.0
    %780 = vmatprep.subr.mxu0 0.0
    %781 = vmatpush2.msra.mxu0 0.0
    %782 = vmatprep.subr.mxu0 0.0
    %783 = vmatpush2.msra.mxu0 0.0
    %784 = vmatprep.subr.mxu0 0.0
    %785 = vmatpush2.msra.mxu0 0.0
    %786 = vmatprep.subr.mxu0 0.0
    %787 = vmatpush2.msra.mxu0 0.0
    %788 = vmatprep.subr.mxu0 0.0
    %789 = vmatpush2.msra.mxu0 0.0
    %790 = vmatprep.subr.mxu0 0.0
    %791 = vmatpush2.msra.mxu0 0.0
    %792 = vmatprep.subr.mxu0 0.0
    %793 = vmatpush2.msra.mxu0 0.0
    %794 = vmatprep.subr.mxu0 0.0
    %795 = vmatpush2.msra.mxu0 0.0
    %796 = vmatprep.subr.mxu0 0.0
    %797 = vmatpush2.msra.mxu0 0.0
    %798 = vmatprep.subr.mxu0 0.0
    %799 = vmatpush2.msra.mxu0 0.0
    %800 = vmatprep.subr.mxu0 0.0
    %801 = vmatpush2.msra.mxu0 0.0
    %802 = vmatprep.subr.mxu0 0.0
    %803 = vmatpush2.msra.mxu0 0.0
    %804 = vmatprep.subr.mxu0 0.0
    %805 = vmatpush2.msra.mxu0 0.0
    %806 = vmatprep.subr.mxu0 0.0
    %807 = vmatpush2.msra.mxu0 0.0
    %808 = vmatprep.mubr.f32.mxu0 0.0
    %809 = vmatmul.mubr.f32.gmra.mxu0 %v733
    %v810 = vpop.f32.mrf.mxu0
    %v811 = vadd.f32 0.0, %v810
    %v812 = vpop.f32.mrf.mxu0
    %813 = vmatprep.mubr.f32.mxu0 0.0
    %814 = vmatmul.mubr.f32.gmra.mxu0 %v736
    %v815 = vpop.f32.mrf.mxu0
    %v816 = vadd.f32 0.0, %v815
    %v817 = vpop.f32.mrf.mxu0
    %818 = vmatprep.mubr.f32.mxu0 0.0
    %819 = vmatmul.mubr.f32.gmra.mxu0 %v739
    %v820 = vpop.f32.mrf.mxu0
    %v821 = vadd.f32 0.0, %v820
    %v822 = vpop.f32.mrf.mxu0
    %823 = vmatprep.mubr.f32.mxu0 0.0
    %824 = vmatmul.mubr.f32.gmra.mxu0 %v742
    %v825 = vpop.f32.mrf.mxu0
    %v826 = vadd.f32 0.0, %v825
    %v827 = vpop.f32.mrf.mxu0
    %828 = vdwg.mxu0
    %v830 = vsel %vm337, %v811, 0
    %v833 = vsel %vm337, %v816, 0
    %v836 = vsel %vm337, %v821, 0
    %v839 = vsel %vm337, %v826, 0
    %841 = vmatprep.subr.mxu0 0.0
    %842 = vmatpush1.msra.mxu0 0.0
    %843 = vmatprep.subr.mxu0 0.0
    %844 = vmatpush1.msra.mxu0 0.0
    %845 = vmatprep.subr.mxu0 0.0
    %846 = vmatpush1.msra.mxu0 0.0
    %847 = vmatprep.subr.mxu0 0.0
    %848 = vmatpush1.msra.mxu0 0.0
    %849 = vmatprep.subr.mxu0 0.0
    %850 = vmatpush1.msra.mxu0 0.0
    %851 = vmatprep.subr.mxu0 0.0
    %852 = vmatpush1.msra.mxu0 0.0
    %853 = vmatprep.subr.mxu0 0.0
    %854 = vmatpush1.msra.mxu0 0.0
    %855 = vmatprep.subr.mxu0 0.0
    %856 = vmatpush1.msra.mxu0 0.0
    %857 = vmatprep.subr.mxu0 0.0
    %858 = vmatpush1.msra.mxu0 0.0
    %859 = vmatprep.subr.mxu0 0.0
    %860 = vmatpush1.msra.mxu0 0.0
    %861 = vmatprep.subr.mxu0 0.0
    %862 = vmatpush1.msra.mxu0 0.0
    %863 = vmatprep.subr.mxu0 0.0
    %864 = vmatpush1.msra.mxu0 0.0
    %865 = vmatprep.subr.mxu0 0.0
    %866 = vmatpush1.msra.mxu0 0.0
    %867 = vmatprep.subr.mxu0 0.0
    %868 = vmatpush1.msra.mxu0 0.0
    %869 = vmatprep.subr.mxu0 0.0
    %870 = vmatpush1.msra.mxu0 0.0
    %871 = vmatprep.subr.mxu0 0.0
    %872 = vmatpush1.msra.mxu0 %v731
    %873 = vmatprep.subr.mxu0 0.0
    %874 = vmatpush2.msra.mxu0 0.0
    %875 = vmatprep.subr.mxu0 0.0
    %876 = vmatpush2.msra.mxu0 0.0
    %877 = vmatprep.subr.mxu0 0.0
    %878 = vmatpush2.msra.mxu0 0.0
    %879 = vmatprep.subr.mxu0 0.0
    %880 = vmatpush2.msra.mxu0 0.0
    %881 = vmatprep.subr.mxu0 0.0
    %882 = vmatpush2.msra.mxu0 0.0
    %883 = vmatprep.subr.mxu0 0.0
    %884 = vmatpush2.msra.mxu0 0.0
    %885 = vmatprep.subr.mxu0 0.0
    %886 = vmatpush2.msra.mxu0 0.0
    %887 = vmatprep.subr.mxu0 0.0
    %888 = vmatpush2.msra.mxu0 0.0
    %889 = vmatprep.subr.mxu0 0.0
    %890 = vmatpush2.msra.mxu0 0.0
    %891 = vmatprep.subr.mxu0 0.0
    %892 = vmatpush2.msra.mxu0 0.0
    %893 = vmatprep.subr.mxu0 0.0
    %894 = vmatpush2.msra.mxu0 0.0
    %895 = vmatprep.subr.mxu0 0.0
    %896 = vmatpush2.msra.mxu0 0.0
    %897 = vmatprep.subr.mxu0 0.0
    %898 = vmatpush2.msra.mxu0 0.0
    %899 = vmatprep.subr.mxu0 0.0
    %900 = vmatpush2.msra.mxu0 0.0
    %901 = vmatprep.subr.mxu0 0.0
    %902 = vmatpush2.msra.mxu0 0.0
    %903 = vmatprep.subr.mxu0 0.0
    %904 = vmatpush2.msra.mxu0 0.0
    %905 = vmatprep.mubr.f32.mxu0 0.0
    %906 = vmatmul.mubr.f32.gmra.mxu0 %v830
    %v907 = vpop.f32.mrf.mxu0
    %v908 = vadd.f32 0.0, %v907
    %v909 = vpop.f32.mrf.mxu0
    %910 = vmatprep.mubr.f32.mxu0 0.0
    %911 = vmatmul.mubr.f32.gmra.mxu0 %v833
    %v912 = vpop.f32.mrf.mxu0
    %v913 = vadd.f32 0.0, %v912
    %v914 = vpop.f32.mrf.mxu0
    %915 = vmatprep.mubr.f32.mxu0 0.0
    %916 = vmatmul.mubr.f32.gmra.mxu0 %v836
    %v917 = vpop.f32.mrf.mxu0
    %v918 = vadd.f32 0.0, %v917
    %v919 = vpop.f32.mrf.mxu0
    %920 = vmatprep.mubr.f32.mxu0 0.0
    %921 = vmatmul.mubr.f32.gmra.mxu0 %v839
    %v922 = vpop.f32.mrf.mxu0
    %v923 = vadd.f32 0.0, %v922
    %v924 = vpop.f32.mrf.mxu0
    %925 = vdwg.mxu0
    %v926 = vadd.f32 %v727, %v908
    %v927 = vadd.f32 %v728, %v913
    %v928 = vadd.f32 %v729, %v918
    %v929 = vadd.f32 %v730, %v923
    %v930 = vld [vmem:[#allocation2 + $0x20] sm:$0xff]
    %v932 = vsel %vm141, %v104, 0
    %v935 = vsel %vm141, %v105, 0
    %v938 = vsel %vm141, %v106, 0
    %v941 = vsel %vm141, %v107, 0
    %943 = vmatprep.subr.mxu0 0.0
    %944 = vmatpush1.msra.mxu0 0.0
    %945 = vmatprep.subr.mxu0 0.0
    %946 = vmatpush1.msra.mxu0 0.0
    %947 = vmatprep.subr.mxu0 0.0
    %948 = vmatpush1.msra.mxu0 0.0
    %949 = vmatprep.subr.mxu0 0.0
    %950 = vmatpush1.msra.mxu0 0.0
    %951 = vmatprep.subr.mxu0 0.0
    %952 = vmatpush1.msra.mxu0 0.0
    %953 = vmatprep.subr.mxu0 0.0
    %954 = vmatpush1.msra.mxu0 0.0
    %955 = vmatprep.subr.mxu0 0.0
    %956 = vmatpush1.msra.mxu0 0.0
    %957 = vmatprep.subr.mxu0 0.0
    %958 = vmatpush1.msra.mxu0 0.0
    %959 = vmatprep.subr.mxu0 0.0
    %960 = vmatpush1.msra.mxu0 0.0
    %961 = vmatprep.subr.mxu0 0.0
    %962 = vmatpush1.msra.mxu0 0.0
    %963 = vmatprep.subr.mxu0 0.0
    %964 = vmatpush1.msra.mxu0 0.0
    %965 = vmatprep.subr.mxu0 0.0
    %966 = vmatpush1.msra.mxu0 0.0
    %967 = vmatprep.subr.mxu0 0.0
    %968 = vmatpush1.msra.mxu0 %v139
    %969 = vmatprep.subr.mxu0 0.0
    %970 = vmatpush1.msra.mxu0 %v138
    %971 = vmatprep.subr.mxu0 0.0
    %972 = vmatpush1.msra.mxu0 %v137
    %973 = vmatprep.subr.mxu0 0.0
    %974 = vmatpush1.msra.mxu0 %v136
    %975 = vmatprep.subr.mxu0 0.0
    %976 = vmatpush2.msra.mxu0 0.0
    %977 = vmatprep.subr.mxu0 0.0
    %978 = vmatpush2.msra.mxu0 0.0
    %979 = vmatprep.subr.mxu0 0.0
    %980 = vmatpush2.msra.mxu0 0.0
    %981 = vmatprep.subr.mxu0 0.0
    %982 = vmatpush2.msra.mxu0 0.0
    %983 = vmatprep.subr.mxu0 0.0
    %984 = vmatpush2.msra.mxu0 0.0
    %985 = vmatprep.subr.mxu0 0.0
    %986 = vmatpush2.msra.mxu0 0.0
    %987 = vmatprep.subr.mxu0 0.0
    %988 = vmatpush2.msra.mxu0 0.0
    %989 = vmatprep.subr.mxu0 0.0
    %990 = vmatpush2.msra.mxu0 0.0
    %991 = vmatprep.subr.mxu0 0.0
    %992 = vmatpush2.msra.mxu0 0.0
    %993 = vmatprep.subr.mxu0 0.0
    %994 = vmatpush2.msra.mxu0 0.0
    %995 = vmatprep.subr.mxu0 0.0
    %996 = vmatpush2.msra.mxu0 0.0
    %997 = vmatprep.subr.mxu0 0.0
    %998 = vmatpush2.msra.mxu0 0.0
    %999 = vmatprep.subr.mxu0 0.0
    %1000 = vmatpush2.msra.mxu0 0.0
    %1001 = vmatprep.subr.mxu0 0.0
    %1002 = vmatpush2.msra.mxu0 0.0
    %1003 = vmatprep.subr.mxu0 0.0
    %1004 = vmatpush2.msra.mxu0 0.0
    %1005 = vmatprep.subr.mxu0 0.0
    %1006 = vmatpush2.msra.mxu0 0.0
    %1007 = vmatprep.mubr.f32.mxu0 0.0
    %1008 = vmatmul.mubr.f32.gmra.mxu0 %v932
    %v1009 = vpop.f32.mrf.mxu0
    %v1010 = vadd.f32 0.0, %v1009
    %v1011 = vpop.f32.mrf.mxu0
    %1012 = vmatprep.mubr.f32.mxu0 0.0
    %1013 = vmatmul.mubr.f32.gmra.mxu0 %v935
    %v1014 = vpop.f32.mrf.mxu0
    %v1015 = vadd.f32 0.0, %v1014
    %v1016 = vpop.f32.mrf.mxu0
    %1017 = vmatprep.mubr.f32.mxu0 0.0
    %1018 = vmatmul.mubr.f32.gmra.mxu0 %v938
    %v1019 = vpop.f32.mrf.mxu0
    %v1020 = vadd.f32 0.0, %v1019
    %v1021 = vpop.f32.mrf.mxu0
    %1022 = vmatprep.mubr.f32.mxu0 0.0
    %1023 = vmatmul.mubr.f32.gmra.mxu0 %v941
    %v1024 = vpop.f32.mrf.mxu0
    %v1025 = vadd.f32 0.0, %v1024
    %v1026 = vpop.f32.mrf.mxu0
    %1027 = vdwg.mxu0
    %v1029 = vsel %vm337, %v1010, 0
    %v1032 = vsel %vm337, %v1015, 0
    %v1035 = vsel %vm337, %v1020, 0
    %v1038 = vsel %vm337, %v1025, 0
    %1040 = vmatprep.subr.mxu0 0.0
    %1041 = vmatpush1.msra.mxu0 0.0
    %1042 = vmatprep.subr.mxu0 0.0
    %1043 = vmatpush1.msra.mxu0 0.0
    %1044 = vmatprep.subr.mxu0 0.0
    %1045 = vmatpush1.msra.mxu0 0.0
    %1046 = vmatprep.subr.mxu0 0.0
    %1047 = vmatpush1.msra.mxu0 0.0
    %1048 = vmatprep.subr.mxu0 0.0
    %1049 = vmatpush1.msra.mxu0 0.0
    %1050 = vmatprep.subr.mxu0 0.0
    %1051 = vmatpush1.msra.mxu0 0.0
    %1052 = vmatprep.subr.mxu0 0.0
    %1053 = vmatpush1.msra.mxu0 0.0
    %1054 = vmatprep.subr.mxu0 0.0
    %1055 = vmatpush1.msra.mxu0 0.0
    %1056 = vmatprep.subr.mxu0 0.0
    %1057 = vmatpush1.msra.mxu0 0.0
    %1058 = vmatprep.subr.mxu0 0.0
    %1059 = vmatpush1.msra.mxu0 0.0
    %1060 = vmatprep.subr.mxu0 0.0
    %1061 = vmatpush1.msra.mxu0 0.0
    %1062 = vmatprep.subr.mxu0 0.0
    %1063 = vmatpush1.msra.mxu0 0.0
    %1064 = vmatprep.subr.mxu0 0.0
    %1065 = vmatpush1.msra.mxu0 0.0
    %1066 = vmatprep.subr.mxu0 0.0
    %1067 = vmatpush1.msra.mxu0 0.0
    %1068 = vmatprep.subr.mxu0 0.0
    %1069 = vmatpush1.msra.mxu0 0.0
    %1070 = vmatprep.subr.mxu0 0.0
    %1071 = vmatpush1.msra.mxu0 %v930
    %1072 = vmatprep.subr.mxu0 0.0
    %1073 = vmatpush2.msra.mxu0 0.0
    %1074 = vmatprep.subr.mxu0 0.0
    %1075 = vmatpush2.msra.mxu0 0.0
    %1076 = vmatprep.subr.mxu0 0.0
    %1077 = vmatpush2.msra.mxu0 0.0
    %1078 = vmatprep.subr.mxu0 0.0
    %1079 = vmatpush2.msra.mxu0 0.0
    %1080 = vmatprep.subr.mxu0 0.0
    %1081 = vmatpush2.msra.mxu0 0.0
    %1082 = vmatprep.subr.mxu0 0.0
    %1083 = vmatpush2.msra.mxu0 0.0
    %1084 = vmatprep.subr.mxu0 0.0
    %1085 = vmatpush2.msra.mxu0 0.0
    %1086 = vmatprep.subr.mxu0 0.0
    %1087 = vmatpush2.msra.mxu0 0.0
    %1088 = vmatprep.subr.mxu0 0.0
    %1089 = vmatpush2.msra.mxu0 0.0
    %1090 = vmatprep.subr.mxu0 0.0
    %1091 = vmatpush2.msra.mxu0 0.0
    %1092 = vmatprep.subr.mxu0 0.0
    %1093 = vmatpush2.msra.mxu0 0.0
    %1094 = vmatprep.subr.mxu0 0.0
    %1095 = vmatpush2.msra.mxu0 0.0
    %1096 = vmatprep.subr.mxu0 0.0
    %1097 = vmatpush2.msra.mxu0 0.0
    %1098 = vmatprep.subr.mxu0 0.0
    %1099 = vmatpush2.msra.mxu0 0.0
    %1100 = vmatprep.subr.mxu0 0.0
    %1101 = vmatpush2.msra.mxu0 0.0
    %1102 = vmatprep.subr.mxu0 0.0
    %1103 = vmatpush2.msra.mxu0 0.0
    %1104 = vmatprep.mubr.f32.mxu0 0.0
    %1105 = vmatmul.mubr.f32.gmra.mxu0 %v1029
    %v1106 = vpop.f32.mrf.mxu0
    %v1107 = vadd.f32 0.0, %v1106
    %v1108 = vpop.f32.mrf.mxu0
    %1109 = vmatprep.mubr.f32.mxu0 0.0
    %1110 = vmatmul.mubr.f32.gmra.mxu0 %v1032
    %v1111 = vpop.f32.mrf.mxu0
    %v1112 = vadd.f32 0.0, %v1111
    %v1113 = vpop.f32.mrf.mxu0
    %1114 = vmatprep.mubr.f32.mxu0 0.0
    %1115 = vmatmul.mubr.f32.gmra.mxu0 %v1035
    %v1116 = vpop.f32.mrf.mxu0
    %v1117 = vadd.f32 0.0, %v1116
    %v1118 = vpop.f32.mrf.mxu0
    %1119 = vmatprep.mubr.f32.mxu0 0.0
    %1120 = vmatmul.mubr.f32.gmra.mxu0 %v1038
    %v1121 = vpop.f32.mrf.mxu0
    %v1122 = vadd.f32 0.0, %v1121
    %v1123 = vpop.f32.mrf.mxu0
    %1124 = vdwg.mxu0
    %v1125 = vadd.f32 %v926, %v1107
    %v1126 = vadd.f32 %v927, %v1112
    %v1127 = vadd.f32 %v928, %v1117
    %v1128 = vadd.f32 %v929, %v1122
    %v1129 = vld [vmem:[#allocation2 + $0x28] sm:$0xff]
    %v1131 = vsel %vm141, %v116, 0
    %v1134 = vsel %vm141, %v117, 0
    %v1137 = vsel %vm141, %v118, 0
    %v1140 = vsel %vm141, %v119, 0
    %1142 = vmatprep.subr.mxu0 0.0
    %1143 = vmatpush1.msra.mxu0 0.0
    %1144 = vmatprep.subr.mxu0 0.0
    %1145 = vmatpush1.msra.mxu0 0.0
    %1146 = vmatprep.subr.mxu0 0.0
    %1147 = vmatpush1.msra.mxu0 0.0
    %1148 = vmatprep.subr.mxu0 0.0
    %1149 = vmatpush1.msra.mxu0 0.0
    %1150 = vmatprep.subr.mxu0 0.0
    %1151 = vmatpush1.msra.mxu0 0.0
    %1152 = vmatprep.subr.mxu0 0.0
    %1153 = vmatpush1.msra.mxu0 0.0
    %1154 = vmatprep.subr.mxu0 0.0
    %1155 = vmatpush1.msra.mxu0 0.0
    %1156 = vmatprep.subr.mxu0 0.0
    %1157 = vmatpush1.msra.mxu0 0.0
    %1158 = vmatprep.subr.mxu0 0.0
    %1159 = vmatpush1.msra.mxu0 0.0
    %1160 = vmatprep.subr.mxu0 0.0
    %1161 = vmatpush1.msra.mxu0 0.0
    %1162 = vmatprep.subr.mxu0 0.0
    %1163 = vmatpush1.msra.mxu0 0.0
    %1164 = vmatprep.subr.mxu0 0.0
    %1165 = vmatpush1.msra.mxu0 0.0
    %1166 = vmatprep.subr.mxu0 0.0
    %1167 = vmatpush1.msra.mxu0 %v139
    %1168 = vmatprep.subr.mxu0 0.0
    %1169 = vmatpush1.msra.mxu0 %v138
    %1170 = vmatprep.subr.mxu0 0.0
    %1171 = vmatpush1.msra.mxu0 %v137
    %1172 = vmatprep.subr.mxu0 0.0
    %1173 = vmatpush1.msra.mxu0 %v136
    %1174 = vmatprep.subr.mxu0 0.0
    %1175 = vmatpush2.msra.mxu0 0.0
    %1176 = vmatprep.subr.mxu0 0.0
    %1177 = vmatpush2.msra.mxu0 0.0
    %1178 = vmatprep.subr.mxu0 0.0
    %1179 = vmatpush2.msra.mxu0 0.0
    %1180 = vmatprep.subr.mxu0 0.0
    %1181 = vmatpush2.msra.mxu0 0.0
    %1182 = vmatprep.subr.mxu0 0.0
    %1183 = vmatpush2.msra.mxu0 0.0
    %1184 = vmatprep.subr.mxu0 0.0
    %1185 = vmatpush2.msra.mxu0 0.0
    %1186 = vmatprep.subr.mxu0 0.0
    %1187 = vmatpush2.msra.mxu0 0.0
    %1188 = vmatprep.subr.mxu0 0.0
    %1189 = vmatpush2.msra.mxu0 0.0
    %1190 = vmatprep.subr.mxu0 0.0
    %1191 = vmatpush2.msra.mxu0 0.0
    %1192 = vmatprep.subr.mxu0 0.0
    %1193 = vmatpush2.msra.mxu0 0.0
    %1194 = vmatprep.subr.mxu0 0.0
    %1195 = vmatpush2.msra.mxu0 0.0
    %1196 = vmatprep.subr.mxu0 0.0
    %1197 = vmatpush2.msra.mxu0 0.0
    %1198 = vmatprep.subr.mxu0 0.0
    %1199 = vmatpush2.msra.mxu0 0.0
    %1200 = vmatprep.subr.mxu0 0.0
    %1201 = vmatpush2.msra.mxu0 0.0
    %1202 = vmatprep.subr.mxu0 0.0
    %1203 = vmatpush2.msra.mxu0 0.0
    %1204 = vmatprep.subr.mxu0 0.0
    %1205 = vmatpush2.msra.mxu0 0.0
    %1206 = vmatprep.mubr.f32.mxu0 0.0
    %1207 = vmatmul.mubr.f32.gmra.mxu0 %v1131
    %v1208 = vpop.f32.mrf.mxu0
    %v1209 = vadd.f32 0.0, %v1208
    %v1210 = vpop.f32.mrf.mxu0
    %1211 = vmatprep.mubr.f32.mxu0 0.0
    %1212 = vmatmul.mubr.f32.gmra.mxu0 %v1134
    %v1213 = vpop.f32.mrf.mxu0
    %v1214 = vadd.f32 0.0, %v1213
    %v1215 = vpop.f32.mrf.mxu0
    %1216 = vmatprep.mubr.f32.mxu0 0.0
    %1217 = vmatmul.mubr.f32.gmra.mxu0 %v1137
    %v1218 = vpop.f32.mrf.mxu0
    %v1219 = vadd.f32 0.0, %v1218
    %v1220 = vpop.f32.mrf.mxu0
    %1221 = vmatprep.mubr.f32.mxu0 0.0
    %1222 = vmatmul.mubr.f32.gmra.mxu0 %v1140
    %v1223 = vpop.f32.mrf.mxu0
    %v1224 = vadd.f32 0.0, %v1223
    %v1225 = vpop.f32.mrf.mxu0
    %1226 = vdwg.mxu0
    %v1228 = vsel %vm337, %v1209, 0
    %v1231 = vsel %vm337, %v1214, 0
    %v1234 = vsel %vm337, %v1219, 0
    %v1237 = vsel %vm337, %v1224, 0
    %1239 = vmatprep.subr.mxu0 0.0
    %1240 = vmatpush1.msra.mxu0 0.0
    %1241 = vmatprep.subr.mxu0 0.0
    %1242 = vmatpush1.msra.mxu0 0.0
    %1243 = vmatprep.subr.mxu0 0.0
    %1244 = vmatpush1.msra.mxu0 0.0
    %1245 = vmatprep.subr.mxu0 0.0
    %1246 = vmatpush1.msra.mxu0 0.0
    %1247 = vmatprep.subr.mxu0 0.0
    %1248 = vmatpush1.msra.mxu0 0.0
    %1249 = vmatprep.subr.mxu0 0.0
    %1250 = vmatpush1.msra.mxu0 0.0
    %1251 = vmatprep.subr.mxu0 0.0
    %1252 = vmatpush1.msra.mxu0 0.0
    %1253 = vmatprep.subr.mxu0 0.0
    %1254 = vmatpush1.msra.mxu0 0.0
    %1255 = vmatprep.subr.mxu0 0.0
    %1256 = vmatpush1.msra.mxu0 0.0
    %1257 = vmatprep.subr.mxu0 0.0
    %1258 = vmatpush1.msra.mxu0 0.0
    %1259 = vmatprep.subr.mxu0 0.0
    %1260 = vmatpush1.msra.mxu0 0.0
    %1261 = vmatprep.subr.mxu0 0.0
    %1262 = vmatpush1.msra.mxu0 0.0
    %1263 = vmatprep.subr.mxu0 0.0
    %1264 = vmatpush1.msra.mxu0 0.0
    %1265 = vmatprep.subr.mxu0 0.0
    %1266 = vmatpush1.msra.mxu0 0.0
    %1267 = vmatprep.subr.mxu0 0.0
    %1268 = vmatpush1.msra.mxu0 0.0
    %1269 = vmatprep.subr.mxu0 0.0
    %1270 = vmatpush1.msra.mxu0 %v1129
    %1271 = vmatprep.subr.mxu0 0.0
    %1272 = vmatpush2.msra.mxu0 0.0
    %1273 = vmatprep.subr.mxu0 0.0
    %1274 = vmatpush2.msra.mxu0 0.0
    %1275 = vmatprep.subr.mxu0 0.0
    %1276 = vmatpush2.msra.mxu0 0.0
    %1277 = vmatprep.subr.mxu0 0.0
    %1278 = vmatpush2.msra.mxu0 0.0
    %1279 = vmatprep.subr.mxu0 0.0
    %1280 = vmatpush2.msra.mxu0 0.0
    %1281 = vmatprep.subr.mxu0 0.0
    %1282 = vmatpush2.msra.mxu0 0.0
    %1283 = vmatprep.subr.mxu0 0.0
    %1284 = vmatpush2.msra.mxu0 0.0
    %1285 = vmatprep.subr.mxu0 0.0
    %1286 = vmatpush2.msra.mxu0 0.0
    %1287 = vmatprep.subr.mxu0 0.0
    %1288 = vmatpush2.msra.mxu0 0.0
    %1289 = vmatprep.subr.mxu0 0.0
    %1290 = vmatpush2.msra.mxu0 0.0
    %1291 = vmatprep.subr.mxu0 0.0
    %1292 = vmatpush2.msra.mxu0 0.0
    %1293 = vmatprep.subr.mxu0 0.0
    %1294 = vmatpush2.msra.mxu0 0.0
    %1295 = vmatprep.subr.mxu0 0.0
    %1296 = vmatpush2.msra.mxu0 0.0
    %1297 = vmatprep.subr.mxu0 0.0
    %1298 = vmatpush2.msra.mxu0 0.0
    %1299 = vmatprep.subr.mxu0 0.0
    %1300 = vmatpush2.msra.mxu0 0.0
    %1301 = vmatprep.subr.mxu0 0.0
    %1302 = vmatpush2.msra.mxu0 0.0
    %1303 = vmatprep.mubr.f32.mxu0 0.0
    %1304 = vmatmul.mubr.f32.gmra.mxu0 %v1228
    %v1305 = vpop.f32.mrf.mxu0
    %v1306 = vadd.f32 0.0, %v1305
    %v1307 = vpop.f32.mrf.mxu0
    %1308 = vmatprep.mubr.f32.mxu0 0.0
    %1309 = vmatmul.mubr.f32.gmra.mxu0 %v1231
    %v1310 = vpop.f32.mrf.mxu0
    %v1311 = vadd.f32 0.0, %v1310
    %v1312 = vpop.f32.mrf.mxu0
    %1313 = vmatprep.mubr.f32.mxu0 0.0
    %1314 = vmatmul.mubr.f32.gmra.mxu0 %v1234
    %v1315 = vpop.f32.mrf.mxu0
    %v1316 = vadd.f32 0.0, %v1315
    %v1317 = vpop.f32.mrf.mxu0
    %1318 = vmatprep.mubr.f32.mxu0 0.0
    %1319 = vmatmul.mubr.f32.gmra.mxu0 %v1237
    %v1320 = vpop.f32.mrf.mxu0
    %v1321 = vadd.f32 0.0, %v1320
    %v1322 = vpop.f32.mrf.mxu0
    %1323 = vdwg.mxu0
    %v1324 = vadd.f32 %v1125, %v1306
    %v1325 = vadd.f32 %v1126, %v1311
    %v1326 = vadd.f32 %v1127, %v1316
    %v1327 = vadd.f32 %v1128, %v1321
    %v1328 = vld [vmem:[#allocation2 + $0x30] sm:$0xff]
    %v1330 = vsel %vm141, %v128, 0
    %v1333 = vsel %vm141, %v129, 0
    %v1336 = vsel %vm141, %v130, 0
    %v1339 = vsel %vm141, %v131, 0
    %1341 = vmatprep.subr.mxu0 0.0
    %1342 = vmatpush1.msra.mxu0 0.0
    %1343 = vmatprep.subr.mxu0 0.0
    %1344 = vmatpush1.msra.mxu0 0.0
    %1345 = vmatprep.subr.mxu0 0.0
    %1346 = vmatpush1.msra.mxu0 0.0
    %1347 = vmatprep.subr.mxu0 0.0
    %1348 = vmatpush1.msra.mxu0 0.0
    %1349 = vmatprep.subr.mxu0 0.0
    %1350 = vmatpush1.msra.mxu0 0.0
    %1351 = vmatprep.subr.mxu0 0.0
    %1352 = vmatpush1.msra.mxu0 0.0
    %1353 = vmatprep.subr.mxu0 0.0
    %1354 = vmatpush1.msra.mxu0 0.0
    %1355 = vmatprep.subr.mxu0 0.0
    %1356 = vmatpush1.msra.mxu0 0.0
    %1357 = vmatprep.subr.mxu0 0.0
    %1358 = vmatpush1.msra.mxu0 0.0
    %1359 = vmatprep.subr.mxu0 0.0
    %1360 = vmatpush1.msra.mxu0 0.0
    %1361 = vmatprep.subr.mxu0 0.0
    %1362 = vmatpush1.msra.mxu0 0.0
    %1363 = vmatprep.subr.mxu0 0.0
    %1364 = vmatpush1.msra.mxu0 0.0
    %1365 = vmatprep.subr.mxu0 0.0
    %1366 = vmatpush1.msra.mxu0 %v139
    %1367 = vmatprep.subr.mxu0 0.0
    %1368 = vmatpush1.msra.mxu0 %v138
    %1369 = vmatprep.subr.mxu0 0.0
    %1370 = vmatpush1.msra.mxu0 %v137
    %1371 = vmatprep.subr.mxu0 0.0
    %1372 = vmatpush1.msra.mxu0 %v136
    %1373 = vmatprep.subr.mxu0 0.0
    %1374 = vmatpush2.msra.mxu0 0.0
    %1375 = vmatprep.subr.mxu0 0.0
    %1376 = vmatpush2.msra.mxu0 0.0
    %1377 = vmatprep.subr.mxu0 0.0
    %1378 = vmatpush2.msra.mxu0 0.0
    %1379 = vmatprep.subr.mxu0 0.0
    %1380 = vmatpush2.msra.mxu0 0.0
    %1381 = vmatprep.subr.mxu0 0.0
    %1382 = vmatpush2.msra.mxu0 0.0
    %1383 = vmatprep.subr.mxu0 0.0
    %1384 = vmatpush2.msra.mxu0 0.0
    %1385 = vmatprep.subr.mxu0 0.0
    %1386 = vmatpush2.msra.mxu0 0.0
    %1387 = vmatprep.subr.mxu0 0.0
    %1388 = vmatpush2.msra.mxu0 0.0
    %1389 = vmatprep.subr.mxu0 0.0
    %1390 = vmatpush2.msra.mxu0 0.0
    %1391 = vmatprep.subr.mxu0 0.0
    %1392 = vmatpush2.msra.mxu0 0.0
    %1393 = vmatprep.subr.mxu0 0.0
    %1394 = vmatpush2.msra.mxu0 0.0
    %1395 = vmatprep.subr.mxu0 0.0
    %1396 = vmatpush2.msra.mxu0 0.0
    %1397 = vmatprep.subr.mxu0 0.0
    %1398 = vmatpush2.msra.mxu0 0.0
    %1399 = vmatprep.subr.mxu0 0.0
    %1400 = vmatpush2.msra.mxu0 0.0
    %1401 = vmatprep.subr.mxu0 0.0
    %1402 = vmatpush2.msra.mxu0 0.0
    %1403 = vmatprep.subr.mxu0 0.0
    %1404 = vmatpush2.msra.mxu0 0.0
    %1405 = vmatprep.mubr.f32.mxu0 0.0
    %1406 = vmatmul.mubr.f32.gmra.mxu0 %v1330
    %v1407 = vpop.f32.mrf.mxu0
    %v1408 = vadd.f32 0.0, %v1407
    %v1409 = vpop.f32.mrf.mxu0
    %1410 = vmatprep.mubr.f32.mxu0 0.0
    %1411 = vmatmul.mubr.f32.gmra.mxu0 %v1333
    %v1412 = vpop.f32.mrf.mxu0
    %v1413 = vadd.f32 0.0, %v1412
    %v1414 = vpop.f32.mrf.mxu0
    %1415 = vmatprep.mubr.f32.mxu0 0.0
    %1416 = vmatmul.mubr.f32.gmra.mxu0 %v1336
    %v1417 = vpop.f32.mrf.mxu0
    %v1418 = vadd.f32 0.0, %v1417
    %v1419 = vpop.f32.mrf.mxu0
    %1420 = vmatprep.mubr.f32.mxu0 0.0
    %1421 = vmatmul.mubr.f32.gmra.mxu0 %v1339
    %v1422 = vpop.f32.mrf.mxu0
    %v1423 = vadd.f32 0.0, %v1422
    %v1424 = vpop.f32.mrf.mxu0
    %1425 = vdwg.mxu0
    %v1427 = vsel %vm337, %v1408, 0
    %v1430 = vsel %vm337, %v1413, 0
    %v1433 = vsel %vm337, %v1418, 0
    %v1436 = vsel %vm337, %v1423, 0
    %1438 = vmatprep.subr.mxu0 0.0
    %1439 = vmatpush1.msra.mxu0 0.0
    %1440 = vmatprep.subr.mxu0 0.0
    %1441 = vmatpush1.msra.mxu0 0.0
    %1442 = vmatprep.subr.mxu0 0.0
    %1443 = vmatpush1.msra.mxu0 0.0
    %1444 = vmatprep.subr.mxu0 0.0
    %1445 = vmatpush1.msra.mxu0 0.0
    %1446 = vmatprep.subr.mxu0 0.0
    %1447 = vmatpush1.msra.mxu0 0.0
    %1448 = vmatprep.subr.mxu0 0.0
    %1449 = vmatpush1.msra.mxu0 0.0
    %1450 = vmatprep.subr.mxu0 0.0
    %1451 = vmatpush1.msra.mxu0 0.0
    %1452 = vmatprep.subr.mxu0 0.0
    %1453 = vmatpush1.msra.mxu0 0.0
    %1454 = vmatprep.subr.mxu0 0.0
    %1455 = vmatpush1.msra.mxu0 0.0
    %1456 = vmatprep.subr.mxu0 0.0
    %1457 = vmatpush1.msra.mxu0 0.0
    %1458 = vmatprep.subr.mxu0 0.0
    %1459 = vmatpush1.msra.mxu0 0.0
    %1460 = vmatprep.subr.mxu0 0.0
    %1461 = vmatpush1.msra.mxu0 0.0
    %1462 = vmatprep.subr.mxu0 0.0
    %1463 = vmatpush1.msra.mxu0 0.0
    %1464 = vmatprep.subr.mxu0 0.0
    %1465 = vmatpush1.msra.mxu0 0.0
    %1466 = vmatprep.subr.mxu0 0.0
    %1467 = vmatpush1.msra.mxu0 0.0
    %1468 = vmatprep.subr.mxu0 0.0
    %1469 = vmatpush1.msra.mxu0 %v1328
    %1470 = vmatprep.subr.mxu0 0.0
    %1471 = vmatpush2.msra.mxu0 0.0
    %1472 = vmatprep.subr.mxu0 0.0
    %1473 = vmatpush2.msra.mxu0 0.0
    %1474 = vmatprep.subr.mxu0 0.0
    %1475 = vmatpush2.msra.mxu0 0.0
    %1476 = vmatprep.subr.mxu0 0.0
    %1477 = vmatpush2.msra.mxu0 0.0
    %1478 = vmatprep.subr.mxu0 0.0
    %1479 = vmatpush2.msra.mxu0 0.0
    %1480 = vmatprep.subr.mxu0 0.0
    %1481 = vmatpush2.msra.mxu0 0.0
    %1482 = vmatprep.subr.mxu0 0.0
    %1483 = vmatpush2.msra.mxu0 0.0
    %1484 = vmatprep.subr.mxu0 0.0
    %1485 = vmatpush2.msra.mxu0 0.0
    %1486 = vmatprep.subr.mxu0 0.0
    %1487 = vmatpush2.msra.mxu0 0.0
    %1488 = vmatprep.subr.mxu0 0.0
    %1489 = vmatpush2.msra.mxu0 0.0
    %1490 = vmatprep.subr.mxu0 0.0
    %1491 = vmatpush2.msra.mxu0 0.0
    %1492 = vmatprep.subr.mxu0 0.0
    %1493 = vmatpush2.msra.mxu0 0.0
    %1494 = vmatprep.subr.mxu0 0.0
    %1495 = vmatpush2.msra.mxu0 0.0
    %1496 = vmatprep.subr.mxu0 0.0
    %1497 = vmatpush2.msra.mxu0 0.0
    %1498 = vmatprep.subr.mxu0 0.0
    %1499 = vmatpush2.msra.mxu0 0.0
    %1500 = vmatprep.subr.mxu0 0.0
    %1501 = vmatpush2.msra.mxu0 0.0
    %1502 = vmatprep.mubr.f32.mxu0 0.0
    %1503 = vmatmul.mubr.f32.gmra.mxu0 %v1427
    %v1504 = vpop.f32.mrf.mxu0
    %v1505 = vadd.f32 0.0, %v1504
    %v1506 = vpop.f32.mrf.mxu0
    %1507 = vmatprep.mubr.f32.mxu0 0.0
    %1508 = vmatmul.mubr.f32.gmra.mxu0 %v1430
    %v1509 = vpop.f32.mrf.mxu0
    %v1510 = vadd.f32 0.0, %v1509
    %v1511 = vpop.f32.mrf.mxu0
    %1512 = vmatprep.mubr.f32.mxu0 0.0
    %1513 = vmatmul.mubr.f32.gmra.mxu0 %v1433
    %v1514 = vpop.f32.mrf.mxu0
    %v1515 = vadd.f32 0.0, %v1514
    %v1516 = vpop.f32.mrf.mxu0
    %1517 = vmatprep.mubr.f32.mxu0 0.0
    %1518 = vmatmul.mubr.f32.gmra.mxu0 %v1436
    %v1519 = vpop.f32.mrf.mxu0
    %v1520 = vadd.f32 0.0, %v1519
    %v1521 = vpop.f32.mrf.mxu0
    %1522 = vdwg.mxu0
    %v1523 = vadd.f32 %v1324, %v1505
    %v1524 = vadd.f32 %v1325, %v1510
    %v1525 = vadd.f32 %v1326, %v1515
    %v1526 = vadd.f32 %v1327, %v1520
    %v1527 = vlaneseq
    %v1528 = vshrl.u32 %v1527, 7
    %v1529 = vsub.s32 0, %v1528
    %v1530 = vrot.slane %v132, %v1529
    %v1531 = vadd.f32 %v1523, %v1530
    %v1532 = vadd.f32 %v1524, %v1530
    %v1533 = vadd.f32 %v1525, %v1530
    %v1534 = vadd.f32 %v1526, %v1530
    %v1535 = vmax.f32 %v1531, 0.0
    %v1536 = vmax.f32 %v1532, 0.0
    %v1537 = vmax.f32 %v1533, 0.0
    %v1538 = vmax.f32 %v1534, 0.0
    %v1539 = vld [vmem:[#allocation2 + $0x38] sm:$0xff]
    %v1540 = vld [vmem:[#allocation2 + $0x40] sm:$0xff]
    %v1541 = vld [vmem:[#allocation2 + $0x48] sm:$0xff]
    %1542 = vmatprep.subr.mxu0 0.0
    %1543 = vmatpush1.msra.mxu0 0.0
    %1544 = vmatprep.subr.mxu0 0.0
    %1545 = vmatpush1.msra.mxu0 0.0
    %1546 = vmatprep.subr.mxu0 0.0
    %1547 = vmatpush1.msra.mxu0 0.0
    %1548 = vmatprep.subr.mxu0 0.0
    %1549 = vmatpush1.msra.mxu0 0.0
    %1550 = vmatprep.subr.mxu0 0.0
    %1551 = vmatpush1.msra.mxu0 0.0
    %1552 = vmatprep.subr.mxu0 0.0
    %1553 = vmatpush1.msra.mxu0 0.0
    %1554 = vmatprep.subr.mxu0 0.0
    %1555 = vmatpush1.msra.mxu0 0.0
    %1556 = vmatprep.subr.mxu0 0.0
    %1557 = vmatpush1.msra.mxu0 0.0
    %1558 = vmatprep.subr.mxu0 0.0
    %1559 = vmatpush1.msra.mxu0 0.0
    %1560 = vmatprep.subr.mxu0 0.0
    %1561 = vmatpush1.msra.mxu0 0.0
    %1562 = vmatprep.subr.mxu0 0.0
    %1563 = vmatpush1.msra.mxu0 0.0
    %1564 = vmatprep.subr.mxu0 0.0
    %1565 = vmatpush1.msra.mxu0 0.0
    %1566 = vmatprep.subr.mxu0 0.0
    %1567 = vmatpush1.msra.mxu0 %v1538
    %1568 = vmatprep.subr.mxu0 0.0
    %1569 = vmatpush1.msra.mxu0 %v1537
    %1570 = vmatprep.subr.mxu0 0.0
    %1571 = vmatpush1.msra.mxu0 %v1536
    %1572 = vmatprep.subr.mxu0 0.0
    %1573 = vmatpush1.msra.mxu0 %v1535
    %1574 = vmatprep.subr.mxu0 0.0
    %1575 = vmatpush2.msra.mxu0 0.0
    %1576 = vmatprep.subr.mxu0 0.0
    %1577 = vmatpush2.msra.mxu0 0.0
    %1578 = vmatprep.subr.mxu0 0.0
    %1579 = vmatpush2.msra.mxu0 0.0
    %1580 = vmatprep.subr.mxu0 0.0
    %1581 = vmatpush2.msra.mxu0 0.0
    %1582 = vmatprep.subr.mxu0 0.0
    %1583 = vmatpush2.msra.mxu0 0.0
    %1584 = vmatprep.subr.mxu0 0.0
    %1585 = vmatpush2.msra.mxu0 0.0
    %1586 = vmatprep.subr.mxu0 0.0
    %1587 = vmatpush2.msra.mxu0 0.0
    %1588 = vmatprep.subr.mxu0 0.0
    %1589 = vmatpush2.msra.mxu0 0.0
    %1590 = vmatprep.subr.mxu0 0.0
    %1591 = vmatpush2.msra.mxu0 0.0
    %1592 = vmatprep.subr.mxu0 0.0
    %1593 = vmatpush2.msra.mxu0 0.0
    %1594 = vmatprep.subr.mxu0 0.0
    %1595 = vmatpush2.msra.mxu0 0.0
    %1596 = vmatprep.subr.mxu0 0.0
    %1597 = vmatpush2.msra.mxu0 0.0
    %1598 = vmatprep.subr.mxu0 0.0
    %1599 = vmatpush2.msra.mxu0 0.0
    %1600 = vmatprep.subr.mxu0 0.0
    %1601 = vmatpush2.msra.mxu0 0.0
    %1602 = vmatprep.subr.mxu0 0.0
    %1603 = vmatpush2.msra.mxu0 0.0
    %1604 = vmatprep.subr.mxu0 0.0
    %1605 = vmatpush2.msra.mxu0 0.0
    %1606 = vmatprep.mubr.f32.mxu0 0.0
    %1607 = vmatmul.mubr.f32.gmra.mxu0 %v143
    %v1608 = vpop.f32.mrf.mxu0
    %v1609 = vadd.f32 0.0, %v1608
    %v1610 = vpop.f32.mrf.mxu0
    %1611 = vmatprep.mubr.f32.mxu0 0.0
    %1612 = vmatmul.mubr.f32.gmra.mxu0 %v146
    %v1613 = vpop.f32.mrf.mxu0
    %v1614 = vadd.f32 0.0, %v1613
    %v1615 = vpop.f32.mrf.mxu0
    %1616 = vmatprep.mubr.f32.mxu0 0.0
    %1617 = vmatmul.mubr.f32.gmra.mxu0 %v149
    %v1618 = vpop.f32.mrf.mxu0
    %v1619 = vadd.f32 0.0, %v1618
    %v1620 = vpop.f32.mrf.mxu0
    %1621 = vmatprep.mubr.f32.mxu0 0.0
    %1622 = vmatmul.mubr.f32.gmra.mxu0 %v152
    %v1623 = vpop.f32.mrf.mxu0
    %v1624 = vadd.f32 0.0, %v1623
    %v1625 = vpop.f32.mrf.mxu0
    %1626 = vdwg.mxu0
    %v1627 = vld [vmem:[#allocation2 + $0x50] sm:$0xff]
    %v1628 = vld [vmem:[#allocation2 + $0x58] sm:$0xff]
    %v1629 = vld [vmem:[#allocation2 + $0x60] sm:$0xff]
    %1630 = vmatprep.subr.mxu0 0.0
    %1631 = vmatpush1.msra.mxu0 0.0
    %1632 = vmatprep.subr.mxu0 0.0
    %1633 = vmatpush1.msra.mxu0 0.0
    %1634 = vmatprep.subr.mxu0 0.0
    %1635 = vmatpush1.msra.mxu0 0.0
    %1636 = vmatprep.subr.mxu0 0.0
    %1637 = vmatpush1.msra.mxu0 0.0
    %1638 = vmatprep.subr.mxu0 0.0
    %1639 = vmatpush1.msra.mxu0 0.0
    %1640 = vmatprep.subr.mxu0 0.0
    %1641 = vmatpush1.msra.mxu0 0.0
    %1642 = vmatprep.subr.mxu0 0.0
    %1643 = vmatpush1.msra.mxu0 0.0
    %1644 = vmatprep.subr.mxu0 0.0
    %1645 = vmatpush1.msra.mxu0 0.0
    %1646 = vmatprep.subr.mxu0 0.0
    %1647 = vmatpush1.msra.mxu0 0.0
    %1648 = vmatprep.subr.mxu0 0.0
    %1649 = vmatpush1.msra.mxu0 0.0
    %1650 = vmatprep.subr.mxu0 0.0
    %1651 = vmatpush1.msra.mxu0 0.0
    %1652 = vmatprep.subr.mxu0 0.0
    %1653 = vmatpush1.msra.mxu0 0.0
    %1654 = vmatprep.subr.mxu0 0.0
    %1655 = vmatpush1.msra.mxu0 %v1538
    %1656 = vmatprep.subr.mxu0 0.0
    %1657 = vmatpush1.msra.mxu0 %v1537
    %1658 = vmatprep.subr.mxu0 0.0
    %1659 = vmatpush1.msra.mxu0 %v1536
    %1660 = vmatprep.subr.mxu0 0.0
    %1661 = vmatpush1.msra.mxu0 %v1535
    %1662 = vmatprep.subr.mxu0 0.0
    %1663 = vmatpush2.msra.mxu0 0.0
    %1664 = vmatprep.subr.mxu0 0.0
    %1665 = vmatpush2.msra.mxu0 0.0
    %1666 = vmatprep.subr.mxu0 0.0
    %1667 = vmatpush2.msra.mxu0 0.0
    %1668 = vmatprep.subr.mxu0 0.0
    %1669 = vmatpush2.msra.mxu0 0.0
    %1670 = vmatprep.subr.mxu0 0.0
    %1671 = vmatpush2.msra.mxu0 0.0
    %1672 = vmatprep.subr.mxu0 0.0
    %1673 = vmatpush2.msra.mxu0 0.0
    %1674 = vmatprep.subr.mxu0 0.0
    %1675 = vmatpush2.msra.mxu0 0.0
    %1676 = vmatprep.subr.mxu0 0.0
    %1677 = vmatpush2.msra.mxu0 0.0
    %1678 = vmatprep.subr.mxu0 0.0
    %1679 = vmatpush2.msra.mxu0 0.0
    %1680 = vmatprep.subr.mxu0 0.0
    %1681 = vmatpush2.msra.mxu0 0.0
    %1682 = vmatprep.subr.mxu0 0.0
    %1683 = vmatpush2.msra.mxu0 0.0
    %1684 = vmatprep.subr.mxu0 0.0
    %1685 = vmatpush2.msra.mxu0 0.0
    %1686 = vmatprep.subr.mxu0 0.0
    %1687 = vmatpush2.msra.mxu0 0.0
    %1688 = vmatprep.subr.mxu0 0.0
    %1689 = vmatpush2.msra.mxu0 0.0
    %1690 = vmatprep.subr.mxu0 0.0
    %1691 = vmatpush2.msra.mxu0 0.0
    %1692 = vmatprep.subr.mxu0 0.0
    %1693 = vmatpush2.msra.mxu0 0.0
    %1694 = vmatprep.mubr.f32.mxu0 0.0
    %1695 = vmatmul.mubr.f32.gmra.mxu0 %v241
    %v1696 = vpop.f32.mrf.mxu0
    %v1697 = vadd.f32 0.0, %v1696
    %v1698 = vpop.f32.mrf.mxu0
    %1699 = vmatprep.mubr.f32.mxu0 0.0
    %1700 = vmatmul.mubr.f32.gmra.mxu0 %v244
    %v1701 = vpop.f32.mrf.mxu0
    %v1702 = vadd.f32 0.0, %v1701
    %v1703 = vpop.f32.mrf.mxu0
    %1704 = vmatprep.mubr.f32.mxu0 0.0
    %1705 = vmatmul.mubr.f32.gmra.mxu0 %v247
    %v1706 = vpop.f32.mrf.mxu0
    %v1707 = vadd.f32 0.0, %v1706
    %v1708 = vpop.f32.mrf.mxu0
    %1709 = vmatprep.mubr.f32.mxu0 0.0
    %1710 = vmatmul.mubr.f32.gmra.mxu0 %v250
    %v1711 = vpop.f32.mrf.mxu0
    %v1712 = vadd.f32 0.0, %v1711
    %v1713 = vpop.f32.mrf.mxu0
    %1714 = vdwg.mxu0
    %vm1715 = vcmask 195584
    %v1717 = vsel %vm1715, %v1697, 0
    %v1720 = vsel %vm1715, %v1702, 0
    %v1723 = vsel %vm1715, %v1707, 0
    %v1726 = vsel %vm1715, %v1712, 0
    %1728 = vmatprep.subr.mxu0 0.0
    %1729 = vmatpush1.msra.mxu0 0.0
    %1730 = vmatprep.subr.mxu0 0.0
    %1731 = vmatpush1.msra.mxu0 0.0
    %1732 = vmatprep.subr.mxu0 0.0
    %1733 = vmatpush1.msra.mxu0 0.0
    %1734 = vmatprep.subr.mxu0 0.0
    %1735 = vmatpush1.msra.mxu0 0.0
    %1736 = vmatprep.subr.mxu0 0.0
    %1737 = vmatpush1.msra.mxu0 0.0
    %1738 = vmatprep.subr.mxu0 0.0
    %1739 = vmatpush1.msra.mxu0 0.0
    %1740 = vmatprep.subr.mxu0 0.0
    %1741 = vmatpush1.msra.mxu0 0.0
    %1742 = vmatprep.subr.mxu0 0.0
    %1743 = vmatpush1.msra.mxu0 0.0
    %1744 = vmatprep.subr.mxu0 0.0
    %1745 = vmatpush1.msra.mxu0 0.0
    %1746 = vmatprep.subr.mxu0 0.0
    %1747 = vmatpush1.msra.mxu0 0.0
    %1748 = vmatprep.subr.mxu0 0.0
    %1749 = vmatpush1.msra.mxu0 0.0
    %1750 = vmatprep.subr.mxu0 0.0
    %1751 = vmatpush1.msra.mxu0 0.0
    %1752 = vmatprep.subr.mxu0 0.0
    %1753 = vmatpush1.msra.mxu0 0.0
    %1754 = vmatprep.subr.mxu0 0.0
    %1755 = vmatpush1.msra.mxu0 %v1629
    %1756 = vmatprep.subr.mxu0 0.0
    %1757 = vmatpush1.msra.mxu0 %v1628
    %1758 = vmatprep.subr.mxu0 0.0
    %1759 = vmatpush1.msra.mxu0 %v1627
    %1760 = vmatprep.subr.mxu0 0.0
    %1761 = vmatpush2.msra.mxu0 0.0
    %1762 = vmatprep.subr.mxu0 0.0
    %1763 = vmatpush2.msra.mxu0 0.0
    %1764 = vmatprep.subr.mxu0 0.0
    %1765 = vmatpush2.msra.mxu0 0.0
    %1766 = vmatprep.subr.mxu0 0.0
    %1767 = vmatpush2.msra.mxu0 0.0
    %1768 = vmatprep.subr.mxu0 0.0
    %1769 = vmatpush2.msra.mxu0 0.0
    %1770 = vmatprep.subr.mxu0 0.0
    %1771 = vmatpush2.msra.mxu0 0.0
    %1772 = vmatprep.subr.mxu0 0.0
    %1773 = vmatpush2.msra.mxu0 0.0
    %1774 = vmatprep.subr.mxu0 0.0
    %1775 = vmatpush2.msra.mxu0 0.0
    %1776 = vmatprep.subr.mxu0 0.0
    %1777 = vmatpush2.msra.mxu0 0.0
    %1778 = vmatprep.subr.mxu0 0.0
    %1779 = vmatpush2.msra.mxu0 0.0
    %1780 = vmatprep.subr.mxu0 0.0
    %1781 = vmatpush2.msra.mxu0 0.0
    %1782 = vmatprep.subr.mxu0 0.0
    %1783 = vmatpush2.msra.mxu0 0.0
    %1784 = vmatprep.subr.mxu0 0.0
    %1785 = vmatpush2.msra.mxu0 0.0
    %1786 = vmatprep.subr.mxu0 0.0
    %1787 = vmatpush2.msra.mxu0 0.0
    %1788 = vmatprep.subr.mxu0 0.0
    %1789 = vmatpush2.msra.mxu0 0.0
    %1790 = vmatprep.subr.mxu0 0.0
    %1791 = vmatpush2.msra.mxu0 0.0
    %1792 = vmatprep.mubr.f32.mxu0 0.0
    %1793 = vmatmul.mubr.f32.gmra.mxu0 %v1717
    %v1794 = vpop.f32.mrf.mxu0
    %v1795 = vadd.f32 0.0, %v1794
    %v1796 = vpop.f32.mrf.mxu0
    %1797 = vmatprep.mubr.f32.mxu0 0.0
    %1798 = vmatmul.mubr.f32.gmra.mxu0 %v1720
    %v1799 = vpop.f32.mrf.mxu0
    %v1800 = vadd.f32 0.0, %v1799
    %v1801 = vpop.f32.mrf.mxu0
    %1802 = vmatprep.mubr.f32.mxu0 0.0
    %1803 = vmatmul.mubr.f32.gmra.mxu0 %v1723
    %v1804 = vpop.f32.mrf.mxu0
    %v1805 = vadd.f32 0.0, %v1804
    %v1806 = vpop.f32.mrf.mxu0
    %1807 = vmatprep.mubr.f32.mxu0 0.0
    %1808 = vmatmul.mubr.f32.gmra.mxu0 %v1726
    %v1809 = vpop.f32.mrf.mxu0
    %v1810 = vadd.f32 0.0, %v1809
    %v1811 = vpop.f32.mrf.mxu0
    %1812 = vdwg.mxu0
    %v1814 = vsel %vm1715, %v1609, 0
    %v1817 = vsel %vm1715, %v1614, 0
    %v1820 = vsel %vm1715, %v1619, 0
    %v1823 = vsel %vm1715, %v1624, 0
    %1825 = vmatprep.subr.mxu0 0.0
    %1826 = vmatpush1.msra.mxu0 0.0
    %1827 = vmatprep.subr.mxu0 0.0
    %1828 = vmatpush1.msra.mxu0 0.0
    %1829 = vmatprep.subr.mxu0 0.0
    %1830 = vmatpush1.msra.mxu0 0.0
    %1831 = vmatprep.subr.mxu0 0.0
    %1832 = vmatpush1.msra.mxu0 0.0
    %1833 = vmatprep.subr.mxu0 0.0
    %1834 = vmatpush1.msra.mxu0 0.0
    %1835 = vmatprep.subr.mxu0 0.0
    %1836 = vmatpush1.msra.mxu0 0.0
    %1837 = vmatprep.subr.mxu0 0.0
    %1838 = vmatpush1.msra.mxu0 0.0
    %1839 = vmatprep.subr.mxu0 0.0
    %1840 = vmatpush1.msra.mxu0 0.0
    %1841 = vmatprep.subr.mxu0 0.0
    %1842 = vmatpush1.msra.mxu0 0.0
    %1843 = vmatprep.subr.mxu0 0.0
    %1844 = vmatpush1.msra.mxu0 0.0
    %1845 = vmatprep.subr.mxu0 0.0
    %1846 = vmatpush1.msra.mxu0 0.0
    %1847 = vmatprep.subr.mxu0 0.0
    %1848 = vmatpush1.msra.mxu0 0.0
    %1849 = vmatprep.subr.mxu0 0.0
    %1850 = vmatpush1.msra.mxu0 0.0
    %1851 = vmatprep.subr.mxu0 0.0
    %1852 = vmatpush1.msra.mxu0 %v1541
    %1853 = vmatprep.subr.mxu0 0.0
    %1854 = vmatpush1.msra.mxu0 %v1540
    %1855 = vmatprep.subr.mxu0 0.0
    %1856 = vmatpush1.msra.mxu0 %v1539
    %1857 = vmatprep.subr.mxu0 0.0
    %1858 = vmatpush2.msra.mxu0 0.0
    %1859 = vmatprep.subr.mxu0 0.0
    %1860 = vmatpush2.msra.mxu0 0.0
    %1861 = vmatprep.subr.mxu0 0.0
    %1862 = vmatpush2.msra.mxu0 0.0
    %1863 = vmatprep.subr.mxu0 0.0
    %1864 = vmatpush2.msra.mxu0 0.0
    %1865 = vmatprep.subr.mxu0 0.0
    %1866 = vmatpush2.msra.mxu0 0.0
    %1867 = vmatprep.subr.mxu0 0.0
    %1868 = vmatpush2.msra.mxu0 0.0
    %1869 = vmatprep.subr.mxu0 0.0
    %1870 = vmatpush2.msra.mxu0 0.0
    %1871 = vmatprep.subr.mxu0 0.0
    %1872 = vmatpush2.msra.mxu0 0.0
    %1873 = vmatprep.subr.mxu0 0.0
    %1874 = vmatpush2.msra.mxu0 0.0
    %1875 = vmatprep.subr.mxu0 0.0
    %1876 = vmatpush2.msra.mxu0 0.0
    %1877 = vmatprep.subr.mxu0 0.0
    %1878 = vmatpush2.msra.mxu0 0.0
    %1879 = vmatprep.subr.mxu0 0.0
    %1880 = vmatpush2.msra.mxu0 0.0
    %1881 = vmatprep.subr.mxu0 0.0
    %1882 = vmatpush2.msra.mxu0 0.0
    %1883 = vmatprep.subr.mxu0 0.0
    %1884 = vmatpush2.msra.mxu0 0.0
    %1885 = vmatprep.subr.mxu0 0.0
    %1886 = vmatpush2.msra.mxu0 0.0
    %1887 = vmatprep.subr.mxu0 0.0
    %1888 = vmatpush2.msra.mxu0 0.0
    %1889 = vmatprep.mubr.f32.mxu0 0.0
    %1890 = vmatmul.mubr.f32.gmra.mxu0 %v1814
    %v1891 = vpop.f32.mrf.mxu0
    %v1892 = vadd.f32 %v1795, %v1891
    %v1893 = vpop.f32.mrf.mxu0
    %1894 = vmatprep.mubr.f32.mxu0 0.0
    %1895 = vmatmul.mubr.f32.gmra.mxu0 %v1817
    %v1896 = vpop.f32.mrf.mxu0
    %v1897 = vadd.f32 %v1800, %v1896
    %v1898 = vpop.f32.mrf.mxu0
    %1899 = vmatprep.mubr.f32.mxu0 0.0
    %1900 = vmatmul.mubr.f32.gmra.mxu0 %v1820
    %v1901 = vpop.f32.mrf.mxu0
    %v1902 = vadd.f32 %v1805, %v1901
    %v1903 = vpop.f32.mrf.mxu0
    %1904 = vmatprep.mubr.f32.mxu0 0.0
    %1905 = vmatmul.mubr.f32.gmra.mxu0 %v1823
    %v1906 = vpop.f32.mrf.mxu0
    %v1907 = vadd.f32 %v1810, %v1906
    %v1908 = vpop.f32.mrf.mxu0
    %1909 = vdwg.mxu0
    %v1910 = vld [vmem:[#allocation2 + $0x68] sm:$0xff]
    %v1911 = vld [vmem:[#allocation2 + $0x70] sm:$0xff]
    %v1912 = vld [vmem:[#allocation2 + $0x78] sm:$0xff]
    %1913 = vmatprep.subr.mxu0 0.0
    %1914 = vmatpush1.msra.mxu0 0.0
    %1915 = vmatprep.subr.mxu0 0.0
    %1916 = vmatpush1.msra.mxu0 0.0
    %1917 = vmatprep.subr.mxu0 0.0
    %1918 = vmatpush1.msra.mxu0 0.0
    %1919 = vmatprep.subr.mxu0 0.0
    %1920 = vmatpush1.msra.mxu0 0.0
    %1921 = vmatprep.subr.mxu0 0.0
    %1922 = vmatpush1.msra.mxu0 0.0
    %1923 = vmatprep.subr.mxu0 0.0
    %1924 = vmatpush1.msra.mxu0 0.0
    %1925 = vmatprep.subr.mxu0 0.0
    %1926 = vmatpush1.msra.mxu0 0.0
    %1927 = vmatprep.subr.mxu0 0.0
    %1928 = vmatpush1.msra.mxu0 0.0
    %1929 = vmatprep.subr.mxu0 0.0
    %1930 = vmatpush1.msra.mxu0 0.0
    %1931 = vmatprep.subr.mxu0 0.0
    %1932 = vmatpush1.msra.mxu0 0.0
    %1933 = vmatprep.subr.mxu0 0.0
    %1934 = vmatpush1.msra.mxu0 0.0
    %1935 = vmatprep.subr.mxu0 0.0
    %1936 = vmatpush1.msra.mxu0 0.0
    %1937 = vmatprep.subr.mxu0 0.0
    %1938 = vmatpush1.msra.mxu0 %v1538
    %1939 = vmatprep.subr.mxu0 0.0
    %1940 = vmatpush1.msra.mxu0 %v1537
    %1941 = vmatprep.subr.mxu0 0.0
    %1942 = vmatpush1.msra.mxu0 %v1536
    %1943 = vmatprep.subr.mxu0 0.0
    %1944 = vmatpush1.msra.mxu0 %v1535
    %1945 = vmatprep.subr.mxu0 0.0
    %1946 = vmatpush2.msra.mxu0 0.0
    %1947 = vmatprep.subr.mxu0 0.0
    %1948 = vmatpush2.msra.mxu0 0.0
    %1949 = vmatprep.subr.mxu0 0.0
    %1950 = vmatpush2.msra.mxu0 0.0
    %1951 = vmatprep.subr.mxu0 0.0
    %1952 = vmatpush2.msra.mxu0 0.0
    %1953 = vmatprep.subr.mxu0 0.0
    %1954 = vmatpush2.msra.mxu0 0.0
    %1955 = vmatprep.subr.mxu0 0.0
    %1956 = vmatpush2.msra.mxu0 0.0
    %1957 = vmatprep.subr.mxu0 0.0
    %1958 = vmatpush2.msra.mxu0 0.0
    %1959 = vmatprep.subr.mxu0 0.0
    %1960 = vmatpush2.msra.mxu0 0.0
    %1961 = vmatprep.subr.mxu0 0.0
    %1962 = vmatpush2.msra.mxu0 0.0
    %1963 = vmatprep.subr.mxu0 0.0
    %1964 = vmatpush2.msra.mxu0 0.0
    %1965 = vmatprep.subr.mxu0 0.0
    %1966 = vmatpush2.msra.mxu0 0.0
    %1967 = vmatprep.subr.mxu0 0.0
    %1968 = vmatpush2.msra.mxu0 0.0
    %1969 = vmatprep.subr.mxu0 0.0
    %1970 = vmatpush2.msra.mxu0 0.0
    %1971 = vmatprep.subr.mxu0 0.0
    %1972 = vmatpush2.msra.mxu0 0.0
    %1973 = vmatprep.subr.mxu0 0.0
    %1974 = vmatpush2.msra.mxu0 0.0
    %1975 = vmatprep.subr.mxu0 0.0
    %1976 = vmatpush2.msra.mxu0 0.0
    %1977 = vmatprep.mubr.f32.mxu0 0.0
    %1978 = vmatmul.mubr.f32.gmra.mxu0 %v534
    %v1979 = vpop.f32.mrf.mxu0
    %v1980 = vadd.f32 0.0, %v1979
    %v1981 = vpop.f32.mrf.mxu0
    %1982 = vmatprep.mubr.f32.mxu0 0.0
    %1983 = vmatmul.mubr.f32.gmra.mxu0 %v537
    %v1984 = vpop.f32.mrf.mxu0
    %v1985 = vadd.f32 0.0, %v1984
    %v1986 = vpop.f32.mrf.mxu0
    %1987 = vmatprep.mubr.f32.mxu0 0.0
    %1988 = vmatmul.mubr.f32.gmra.mxu0 %v540
    %v1989 = vpop.f32.mrf.mxu0
    %v1990 = vadd.f32 0.0, %v1989
    %v1991 = vpop.f32.mrf.mxu0
    %1992 = vmatprep.mubr.f32.mxu0 0.0
    %1993 = vmatmul.mubr.f32.gmra.mxu0 %v543
    %v1994 = vpop.f32.mrf.mxu0
    %v1995 = vadd.f32 0.0, %v1994
    %v1996 = vpop.f32.mrf.mxu0
    %1997 = vdwg.mxu0
    %v1999 = vsel %vm1715, %v1980, 0
    %v2002 = vsel %vm1715, %v1985, 0
    %v2005 = vsel %vm1715, %v1990, 0
    %v2008 = vsel %vm1715, %v1995, 0
    %2010 = vmatprep.subr.mxu0 0.0
    %2011 = vmatpush1.msra.mxu0 0.0
    %2012 = vmatprep.subr.mxu0 0.0
    %2013 = vmatpush1.msra.mxu0 0.0
    %2014 = vmatprep.subr.mxu0 0.0
    %2015 = vmatpush1.msra.mxu0 0.0
    %2016 = vmatprep.subr.mxu0 0.0
    %2017 = vmatpush1.msra.mxu0 0.0
    %2018 = vmatprep.subr.mxu0 0.0
    %2019 = vmatpush1.msra.mxu0 0.0
    %2020 = vmatprep.subr.mxu0 0.0
    %2021 = vmatpush1.msra.mxu0 0.0
    %2022 = vmatprep.subr.mxu0 0.0
    %2023 = vmatpush1.msra.mxu0 0.0
    %2024 = vmatprep.subr.mxu0 0.0
    %2025 = vmatpush1.msra.mxu0 0.0
    %2026 = vmatprep.subr.mxu0 0.0
    %2027 = vmatpush1.msra.mxu0 0.0
    %2028 = vmatprep.subr.mxu0 0.0
    %2029 = vmatpush1.msra.mxu0 0.0
    %2030 = vmatprep.subr.mxu0 0.0
    %2031 = vmatpush1.msra.mxu0 0.0
    %2032 = vmatprep.subr.mxu0 0.0
    %2033 = vmatpush1.msra.mxu0 0.0
    %2034 = vmatprep.subr.mxu0 0.0
    %2035 = vmatpush1.msra.mxu0 0.0
    %2036 = vmatprep.subr.mxu0 0.0
    %2037 = vmatpush1.msra.mxu0 %v1912
    %2038 = vmatprep.subr.mxu0 0.0
    %2039 = vmatpush1.msra.mxu0 %v1911
    %2040 = vmatprep.subr.mxu0 0.0
    %2041 = vmatpush1.msra.mxu0 %v1910
    %2042 = vmatprep.subr.mxu0 0.0
    %2043 = vmatpush2.msra.mxu0 0.0
    %2044 = vmatprep.subr.mxu0 0.0
    %2045 = vmatpush2.msra.mxu0 0.0
    %2046 = vmatprep.subr.mxu0 0.0
    %2047 = vmatpush2.msra.mxu0 0.0
    %2048 = vmatprep.subr.mxu0 0.0
    %2049 = vmatpush2.msra.mxu0 0.0
    %2050 = vmatprep.subr.mxu0 0.0
    %2051 = vmatpush2.msra.mxu0 0.0
    %2052 = vmatprep.subr.mxu0 0.0
    %2053 = vmatpush2.msra.mxu0 0.0
    %2054 = vmatprep.subr.mxu0 0.0
    %2055 = vmatpush2.msra.mxu0 0.0
    %2056 = vmatprep.subr.mxu0 0.0
    %2057 = vmatpush2.msra.mxu0 0.0
    %2058 = vmatprep.subr.mxu0 0.0
    %2059 = vmatpush2.msra.mxu0 0.0
    %2060 = vmatprep.subr.mxu0 0.0
    %2061 = vmatpush2.msra.mxu0 0.0
    %2062 = vmatprep.subr.mxu0 0.0
    %2063 = vmatpush2.msra.mxu0 0.0
    %2064 = vmatprep.subr.mxu0 0.0
    %2065 = vmatpush2.msra.mxu0 0.0
    %2066 = vmatprep.subr.mxu0 0.0
    %2067 = vmatpush2.msra.mxu0 0.0
    %2068 = vmatprep.subr.mxu0 0.0
    %2069 = vmatpush2.msra.mxu0 0.0
    %2070 = vmatprep.subr.mxu0 0.0
    %2071 = vmatpush2.msra.mxu0 0.0
    %2072 = vmatprep.subr.mxu0 0.0
    %2073 = vmatpush2.msra.mxu0 0.0
    %2074 = vmatprep.mubr.f32.mxu0 0.0
    %2075 = vmatmul.mubr.f32.gmra.mxu0 %v1999
    %v2076 = vpop.f32.mrf.mxu0
    %v2077 = vadd.f32 0.0, %v2076
    %v2078 = vpop.f32.mrf.mxu0
    %2079 = vmatprep.mubr.f32.mxu0 0.0
    %2080 = vmatmul.mubr.f32.gmra.mxu0 %v2002
    %v2081 = vpop.f32.mrf.mxu0
    %v2082 = vadd.f32 0.0, %v2081
    %v2083 = vpop.f32.mrf.mxu0
    %2084 = vmatprep.mubr.f32.mxu0 0.0
    %2085 = vmatmul.mubr.f32.gmra.mxu0 %v2005
    %v2086 = vpop.f32.mrf.mxu0
    %v2087 = vadd.f32 0.0, %v2086
    %v2088 = vpop.f32.mrf.mxu0
    %2089 = vmatprep.mubr.f32.mxu0 0.0
    %2090 = vmatmul.mubr.f32.gmra.mxu0 %v2008
    %v2091 = vpop.f32.mrf.mxu0
    %v2092 = vadd.f32 0.0, %v2091
    %v2093 = vpop.f32.mrf.mxu0
    %2094 = vdwg.mxu0
    %v2095 = vadd.f32 %v1892, %v2077
    %v2096 = vadd.f32 %v1897, %v2082
    %v2097 = vadd.f32 %v1902, %v2087
    %v2098 = vadd.f32 %v1907, %v2092
    %v2099 = vld [vmem:[#allocation2 + $0x80] sm:$0xff]
    %v2100 = vld [vmem:[#allocation2 + $0x88] sm:$0xff]
    %v2101 = vld [vmem:[#allocation2 + $0x90] sm:$0xff]
    %2102 = vmatprep.subr.mxu0 0.0
    %2103 = vmatpush1.msra.mxu0 0.0
    %2104 = vmatprep.subr.mxu0 0.0
    %2105 = vmatpush1.msra.mxu0 0.0
    %2106 = vmatprep.subr.mxu0 0.0
    %2107 = vmatpush1.msra.mxu0 0.0
    %2108 = vmatprep.subr.mxu0 0.0
    %2109 = vmatpush1.msra.mxu0 0.0
    %2110 = vmatprep.subr.mxu0 0.0
    %2111 = vmatpush1.msra.mxu0 0.0
    %2112 = vmatprep.subr.mxu0 0.0
    %2113 = vmatpush1.msra.mxu0 0.0
    %2114 = vmatprep.subr.mxu0 0.0
    %2115 = vmatpush1.msra.mxu0 0.0
    %2116 = vmatprep.subr.mxu0 0.0
    %2117 = vmatpush1.msra.mxu0 0.0
    %2118 = vmatprep.subr.mxu0 0.0
    %2119 = vmatpush1.msra.mxu0 0.0
    %2120 = vmatprep.subr.mxu0 0.0
    %2121 = vmatpush1.msra.mxu0 0.0
    %2122 = vmatprep.subr.mxu0 0.0
    %2123 = vmatpush1.msra.mxu0 0.0
    %2124 = vmatprep.subr.mxu0 0.0
    %2125 = vmatpush1.msra.mxu0 0.0
    %2126 = vmatprep.subr.mxu0 0.0
    %2127 = vmatpush1.msra.mxu0 %v1538
    %2128 = vmatprep.subr.mxu0 0.0
    %2129 = vmatpush1.msra.mxu0 %v1537
    %2130 = vmatprep.subr.mxu0 0.0
    %2131 = vmatpush1.msra.mxu0 %v1536
    %2132 = vmatprep.subr.mxu0 0.0
    %2133 = vmatpush1.msra.mxu0 %v1535
    %2134 = vmatprep.subr.mxu0 0.0
    %2135 = vmatpush2.msra.mxu0 0.0
    %2136 = vmatprep.subr.mxu0 0.0
    %2137 = vmatpush2.msra.mxu0 0.0
    %2138 = vmatprep.subr.mxu0 0.0
    %2139 = vmatpush2.msra.mxu0 0.0
    %2140 = vmatprep.subr.mxu0 0.0
    %2141 = vmatpush2.msra.mxu0 0.0
    %2142 = vmatprep.subr.mxu0 0.0
    %2143 = vmatpush2.msra.mxu0 0.0
    %2144 = vmatprep.subr.mxu0 0.0
    %2145 = vmatpush2.msra.mxu0 0.0
    %2146 = vmatprep.subr.mxu0 0.0
    %2147 = vmatpush2.msra.mxu0 0.0
    %2148 = vmatprep.subr.mxu0 0.0
    %2149 = vmatpush2.msra.mxu0 0.0
    %2150 = vmatprep.subr.mxu0 0.0
    %2151 = vmatpush2.msra.mxu0 0.0
    %2152 = vmatprep.subr.mxu0 0.0
    %2153 = vmatpush2.msra.mxu0 0.0
    %2154 = vmatprep.subr.mxu0 0.0
    %2155 = vmatpush2.msra.mxu0 0.0
    %2156 = vmatprep.subr.mxu0 0.0
    %2157 = vmatpush2.msra.mxu0 0.0
    %2158 = vmatprep.subr.mxu0 0.0
    %2159 = vmatpush2.msra.mxu0 0.0
    %2160 = vmatprep.subr.mxu0 0.0
    %2161 = vmatpush2.msra.mxu0 0.0
    %2162 = vmatprep.subr.mxu0 0.0
    %2163 = vmatpush2.msra.mxu0 0.0
    %2164 = vmatprep.subr.mxu0 0.0
    %2165 = vmatpush2.msra.mxu0 0.0
    %2166 = vmatprep.mubr.f32.mxu0 0.0
    %2167 = vmatmul.mubr.f32.gmra.mxu0 %v733
    %v2168 = vpop.f32.mrf.mxu0
    %v2169 = vadd.f32 0.0, %v2168
    %v2170 = vpop.f32.mrf.mxu0
    %2171 = vmatprep.mubr.f32.mxu0 0.0
    %2172 = vmatmul.mubr.f32.gmra.mxu0 %v736
    %v2173 = vpop.f32.mrf.mxu0
    %v2174 = vadd.f32 0.0, %v2173
    %v2175 = vpop.f32.mrf.mxu0
    %2176 = vmatprep.mubr.f32.mxu0 0.0
    %2177 = vmatmul.mubr.f32.gmra.mxu0 %v739
    %v2178 = vpop.f32.mrf.mxu0
    %v2179 = vadd.f32 0.0, %v2178
    %v2180 = vpop.f32.mrf.mxu0
    %2181 = vmatprep.mubr.f32.mxu0 0.0
    %2182 = vmatmul.mubr.f32.gmra.mxu0 %v742
    %v2183 = vpop.f32.mrf.mxu0
    %v2184 = vadd.f32 0.0, %v2183
    %v2185 = vpop.f32.mrf.mxu0
    %2186 = vdwg.mxu0
    %v2188 = vsel %vm1715, %v2169, 0
    %v2191 = vsel %vm1715, %v2174, 0
    %v2194 = vsel %vm1715, %v2179, 0
    %v2197 = vsel %vm1715, %v2184, 0
    %2199 = vmatprep.subr.mxu0 0.0
    %2200 = vmatpush1.msra.mxu0 0.0
    %2201 = vmatprep.subr.mxu0 0.0
    %2202 = vmatpush1.msra.mxu0 0.0
    %2203 = vmatprep.subr.mxu0 0.0
    %2204 = vmatpush1.msra.mxu0 0.0
    %2205 = vmatprep.subr.mxu0 0.0
    %2206 = vmatpush1.msra.mxu0 0.0
    %2207 = vmatprep.subr.mxu0 0.0
    %2208 = vmatpush1.msra.mxu0 0.0
    %2209 = vmatprep.subr.mxu0 0.0
    %2210 = vmatpush1.msra.mxu0 0.0
    %2211 = vmatprep.subr.mxu0 0.0
    %2212 = vmatpush1.msra.mxu0 0.0
    %2213 = vmatprep.subr.mxu0 0.0
    %2214 = vmatpush1.msra.mxu0 0.0
    %2215 = vmatprep.subr.mxu0 0.0
    %2216 = vmatpush1.msra.mxu0 0.0
    %2217 = vmatprep.subr.mxu0 0.0
    %2218 = vmatpush1.msra.mxu0 0.0
    %2219 = vmatprep.subr.mxu0 0.0
    %2220 = vmatpush1.msra.mxu0 0.0
    %2221 = vmatprep.subr.mxu0 0.0
    %2222 = vmatpush1.msra.mxu0 0.0
    %2223 = vmatprep.subr.mxu0 0.0
    %2224 = vmatpush1.msra.mxu0 0.0
    %2225 = vmatprep.subr.mxu0 0.0
    %2226 = vmatpush1.msra.mxu0 %v2101
    %2227 = vmatprep.subr.mxu0 0.0
    %2228 = vmatpush1.msra.mxu0 %v2100
    %2229 = vmatprep.subr.mxu0 0.0
    %2230 = vmatpush1.msra.mxu0 %v2099
    %2231 = vmatprep.subr.mxu0 0.0
    %2232 = vmatpush2.msra.mxu0 0.0
    %2233 = vmatprep.subr.mxu0 0.0
    %2234 = vmatpush2.msra.mxu0 0.0
    %2235 = vmatprep.subr.mxu0 0.0
    %2236 = vmatpush2.msra.mxu0 0.0
    %2237 = vmatprep.subr.mxu0 0.0
    %2238 = vmatpush2.msra.mxu0 0.0
    %2239 = vmatprep.subr.mxu0 0.0
    %2240 = vmatpush2.msra.mxu0 0.0
    %2241 = vmatprep.subr.mxu0 0.0
    %2242 = vmatpush2.msra.mxu0 0.0
    %2243 = vmatprep.subr.mxu0 0.0
    %2244 = vmatpush2.msra.mxu0 0.0
    %2245 = vmatprep.subr.mxu0 0.0
    %2246 = vmatpush2.msra.mxu0 0.0
    %2247 = vmatprep.subr.mxu0 0.0
    %2248 = vmatpush2.msra.mxu0 0.0
    %2249 = vmatprep.subr.mxu0 0.0
    %2250 = vmatpush2.msra.mxu0 0.0
    %2251 = vmatprep.subr.mxu0 0.0
    %2252 = vmatpush2.msra.mxu0 0.0
    %2253 = vmatprep.subr.mxu0 0.0
    %2254 = vmatpush2.msra.mxu0 0.0
    %2255 = vmatprep.subr.mxu0 0.0
    %2256 = vmatpush2.msra.mxu0 0.0
    %2257 = vmatprep.subr.mxu0 0.0
    %2258 = vmatpush2.msra.mxu0 0.0
    %2259 = vmatprep.subr.mxu0 0.0
    %2260 = vmatpush2.msra.mxu0 0.0
    %2261 = vmatprep.subr.mxu0 0.0
    %2262 = vmatpush2.msra.mxu0 0.0
    %2263 = vmatprep.mubr.f32.mxu0 0.0
    %2264 = vmatmul.mubr.f32.gmra.mxu0 %v2188
    %v2265 = vpop.f32.mrf.mxu0
    %v2266 = vadd.f32 0.0, %v2265
    %v2267 = vpop.f32.mrf.mxu0
    %2268 = vmatprep.mubr.f32.mxu0 0.0
    %2269 = vmatmul.mubr.f32.gmra.mxu0 %v2191
    %v2270 = vpop.f32.mrf.mxu0
    %v2271 = vadd.f32 0.0, %v2270
    %v2272 = vpop.f32.mrf.mxu0
    %2273 = vmatprep.mubr.f32.mxu0 0.0
    %2274 = vmatmul.mubr.f32.gmra.mxu0 %v2194
    %v2275 = vpop.f32.mrf.mxu0
    %v2276 = vadd.f32 0.0, %v2275
    %v2277 = vpop.f32.mrf.mxu0
    %2278 = vmatprep.mubr.f32.mxu0 0.0
    %2279 = vmatmul.mubr.f32.gmra.mxu0 %v2197
    %v2280 = vpop.f32.mrf.mxu0
    %v2281 = vadd.f32 0.0, %v2280
    %v2282 = vpop.f32.mrf.mxu0
    %2283 = vdwg.mxu0
    %v2284 = vadd.f32 %v2095, %v2266
    %v2285 = vadd.f32 %v2096, %v2271
    %v2286 = vadd.f32 %v2097, %v2276
    %v2287 = vadd.f32 %v2098, %v2281
    %v2288 = vld [vmem:[#allocation2 + $0x98] sm:$0xff]
    %v2289 = vld [vmem:[#allocation2 + $0xa0] sm:$0xff]
    %v2290 = vld [vmem:[#allocation2 + $0xa8] sm:$0xff]
    %2291 = vmatprep.subr.mxu0 0.0
    %2292 = vmatpush1.msra.mxu0 0.0
    %2293 = vmatprep.subr.mxu0 0.0
    %2294 = vmatpush1.msra.mxu0 0.0
    %2295 = vmatprep.subr.mxu0 0.0
    %2296 = vmatpush1.msra.mxu0 0.0
    %2297 = vmatprep.subr.mxu0 0.0
    %2298 = vmatpush1.msra.mxu0 0.0
    %2299 = vmatprep.subr.mxu0 0.0
    %2300 = vmatpush1.msra.mxu0 0.0
    %2301 = vmatprep.subr.mxu0 0.0
    %2302 = vmatpush1.msra.mxu0 0.0
    %2303 = vmatprep.subr.mxu0 0.0
    %2304 = vmatpush1.msra.mxu0 0.0
    %2305 = vmatprep.subr.mxu0 0.0
    %2306 = vmatpush1.msra.mxu0 0.0
    %2307 = vmatprep.subr.mxu0 0.0
    %2308 = vmatpush1.msra.mxu0 0.0
    %2309 = vmatprep.subr.mxu0 0.0
    %2310 = vmatpush1.msra.mxu0 0.0
    %2311 = vmatprep.subr.mxu0 0.0
    %2312 = vmatpush1.msra.mxu0 0.0
    %2313 = vmatprep.subr.mxu0 0.0
    %2314 = vmatpush1.msra.mxu0 0.0
    %2315 = vmatprep.subr.mxu0 0.0
    %2316 = vmatpush1.msra.mxu0 %v1538
    %2317 = vmatprep.subr.mxu0 0.0
    %2318 = vmatpush1.msra.mxu0 %v1537
    %2319 = vmatprep.subr.mxu0 0.0
    %2320 = vmatpush1.msra.mxu0 %v1536
    %2321 = vmatprep.subr.mxu0 0.0
    %2322 = vmatpush1.msra.mxu0 %v1535
    %2323 = vmatprep.subr.mxu0 0.0
    %2324 = vmatpush2.msra.mxu0 0.0
    %2325 = vmatprep.subr.mxu0 0.0
    %2326 = vmatpush2.msra.mxu0 0.0
    %2327 = vmatprep.subr.mxu0 0.0
    %2328 = vmatpush2.msra.mxu0 0.0
    %2329 = vmatprep.subr.mxu0 0.0
    %2330 = vmatpush2.msra.mxu0 0.0
    %2331 = vmatprep.subr.mxu0 0.0
    %2332 = vmatpush2.msra.mxu0 0.0
    %2333 = vmatprep.subr.mxu0 0.0
    %2334 = vmatpush2.msra.mxu0 0.0
    %2335 = vmatprep.subr.mxu0 0.0
    %2336 = vmatpush2.msra.mxu0 0.0
    %2337 = vmatprep.subr.mxu0 0.0
    %2338 = vmatpush2.msra.mxu0 0.0
    %2339 = vmatprep.subr.mxu0 0.0
    %2340 = vmatpush2.msra.mxu0 0.0
    %2341 = vmatprep.subr.mxu0 0.0
    %2342 = vmatpush2.msra.mxu0 0.0
    %2343 = vmatprep.subr.mxu0 0.0
    %2344 = vmatpush2.msra.mxu0 0.0
    %2345 = vmatprep.subr.mxu0 0.0
    %2346 = vmatpush2.msra.mxu0 0.0
    %2347 = vmatprep.subr.mxu0 0.0
    %2348 = vmatpush2.msra.mxu0 0.0
    %2349 = vmatprep.subr.mxu0 0.0
    %2350 = vmatpush2.msra.mxu0 0.0
    %2351 = vmatprep.subr.mxu0 0.0
    %2352 = vmatpush2.msra.mxu0 0.0
    %2353 = vmatprep.subr.mxu0 0.0
    %2354 = vmatpush2.msra.mxu0 0.0
    %2355 = vmatprep.mubr.f32.mxu0 0.0
    %2356 = vmatmul.mubr.f32.gmra.mxu0 %v932
    %v2357 = vpop.f32.mrf.mxu0
    %v2358 = vadd.f32 0.0, %v2357
    %v2359 = vpop.f32.mrf.mxu0
    %2360 = vmatprep.mubr.f32.mxu0 0.0
    %2361 = vmatmul.mubr.f32.gmra.mxu0 %v935
    %v2362 = vpop.f32.mrf.mxu0
    %v2363 = vadd.f32 0.0, %v2362
    %v2364 = vpop.f32.mrf.mxu0
    %2365 = vmatprep.mubr.f32.mxu0 0.0
    %2366 = vmatmul.mubr.f32.gmra.mxu0 %v938
    %v2367 = vpop.f32.mrf.mxu0
    %v2368 = vadd.f32 0.0, %v2367
    %v2369 = vpop.f32.mrf.mxu0
    %2370 = vmatprep.mubr.f32.mxu0 0.0
    %2371 = vmatmul.mubr.f32.gmra.mxu0 %v941
    %v2372 = vpop.f32.mrf.mxu0
    %v2373 = vadd.f32 0.0, %v2372
    %v2374 = vpop.f32.mrf.mxu0
    %2375 = vdwg.mxu0
    %v2377 = vsel %vm1715, %v2358, 0
    %v2380 = vsel %vm1715, %v2363, 0
    %v2383 = vsel %vm1715, %v2368, 0
    %v2386 = vsel %vm1715, %v2373, 0
    %2388 = vmatprep.subr.mxu0 0.0
    %2389 = vmatpush1.msra.mxu0 0.0
    %2390 = vmatprep.subr.mxu0 0.0
    %2391 = vmatpush1.msra.mxu0 0.0
    %2392 = vmatprep.subr.mxu0 0.0
    %2393 = vmatpush1.msra.mxu0 0.0
    %2394 = vmatprep.subr.mxu0 0.0
    %2395 = vmatpush1.msra.mxu0 0.0
    %2396 = vmatprep.subr.mxu0 0.0
    %2397 = vmatpush1.msra.mxu0 0.0
    %2398 = vmatprep.subr.mxu0 0.0
    %2399 = vmatpush1.msra.mxu0 0.0
    %2400 = vmatprep.subr.mxu0 0.0
    %2401 = vmatpush1.msra.mxu0 0.0
    %2402 = vmatprep.subr.mxu0 0.0
    %2403 = vmatpush1.msra.mxu0 0.0
    %2404 = vmatprep.subr.mxu0 0.0
    %2405 = vmatpush1.msra.mxu0 0.0
    %2406 = vmatprep.subr.mxu0 0.0
    %2407 = vmatpush1.msra.mxu0 0.0
    %2408 = vmatprep.subr.mxu0 0.0
    %2409 = vmatpush1.msra.mxu0 0.0
    %2410 = vmatprep.subr.mxu0 0.0
    %2411 = vmatpush1.msra.mxu0 0.0
    %2412 = vmatprep.subr.mxu0 0.0
    %2413 = vmatpush1.msra.mxu0 0.0
    %2414 = vmatprep.subr.mxu0 0.0
    %2415 = vmatpush1.msra.mxu0 %v2290
    %2416 = vmatprep.subr.mxu0 0.0
    %2417 = vmatpush1.msra.mxu0 %v2289
    %2418 = vmatprep.subr.mxu0 0.0
    %2419 = vmatpush1.msra.mxu0 %v2288
    %2420 = vmatprep.subr.mxu0 0.0
    %2421 = vmatpush2.msra.mxu0 0.0
    %2422 = vmatprep.subr.mxu0 0.0
    %2423 = vmatpush2.msra.mxu0 0.0
    %2424 = vmatprep.subr.mxu0 0.0
    %2425 = vmatpush2.msra.mxu0 0.0
    %2426 = vmatprep.subr.mxu0 0.0
    %2427 = vmatpush2.msra.mxu0 0.0
    %2428 = vmatprep.subr.mxu0 0.0
    %2429 = vmatpush2.msra.mxu0 0.0
    %2430 = vmatprep.subr.mxu0 0.0
    %2431 = vmatpush2.msra.mxu0 0.0
    %2432 = vmatprep.subr.mxu0 0.0
    %2433 = vmatpush2.msra.mxu0 0.0
    %2434 = vmatprep.subr.mxu0 0.0
    %2435 = vmatpush2.msra.mxu0 0.0
    %2436 = vmatprep.subr.mxu0 0.0
    %2437 = vmatpush2.msra.mxu0 0.0
    %2438 = vmatprep.subr.mxu0 0.0
    %2439 = vmatpush2.msra.mxu0 0.0
    %2440 = vmatprep.subr.mxu0 0.0
    %2441 = vmatpush2.msra.mxu0 0.0
    %2442 = vmatprep.subr.mxu0 0.0
    %2443 = vmatpush2.msra.mxu0 0.0
    %2444 = vmatprep.subr.mxu0 0.0
    %2445 = vmatpush2.msra.mxu0 0.0
    %2446 = vmatprep.subr.mxu0 0.0
    %2447 = vmatpush2.msra.mxu0 0.0
    %2448 = vmatprep.subr.mxu0 0.0
    %2449 = vmatpush2.msra.mxu0 0.0
    %2450 = vmatprep.subr.mxu0 0.0
    %2451 = vmatpush2.msra.mxu0 0.0
    %2452 = vmatprep.mubr.f32.mxu0 0.0
    %2453 = vmatmul.mubr.f32.gmra.mxu0 %v2377
    %v2454 = vpop.f32.mrf.mxu0
    %v2455 = vadd.f32 0.0, %v2454
    %v2456 = vpop.f32.mrf.mxu0
    %2457 = vmatprep.mubr.f32.mxu0 0.0
    %2458 = vmatmul.mubr.f32.gmra.mxu0 %v2380
    %v2459 = vpop.f32.mrf.mxu0
    %v2460 = vadd.f32 0.0, %v2459
    %v2461 = vpop.f32.mrf.mxu0
    %2462 = vmatprep.mubr.f32.mxu0 0.0
    %2463 = vmatmul.mubr.f32.gmra.mxu0 %v2383
    %v2464 = vpop.f32.mrf.mxu0
    %v2465 = vadd.f32 0.0, %v2464
    %v2466 = vpop.f32.mrf.mxu0
    %2467 = vmatprep.mubr.f32.mxu0 0.0
    %2468 = vmatmul.mubr.f32.gmra.mxu0 %v2386
    %v2469 = vpop.f32.mrf.mxu0
    %v2470 = vadd.f32 0.0, %v2469
    %v2471 = vpop.f32.mrf.mxu0
    %2472 = vdwg.mxu0
    %v2473 = vadd.f32 %v2284, %v2455
    %v2474 = vadd.f32 %v2285, %v2460
    %v2475 = vadd.f32 %v2286, %v2465
    %v2476 = vadd.f32 %v2287, %v2470
    %v2477 = vld [vmem:[#allocation2 + $0xb0] sm:$0xff]
    %v2478 = vld [vmem:[#allocation2 + $0xb8] sm:$0xff]
    %v2479 = vld [vmem:[#allocation2 + $0xc0] sm:$0xff]
    %2480 = vmatprep.subr.mxu0 0.0
    %2481 = vmatpush1.msra.mxu0 0.0
    %2482 = vmatprep.subr.mxu0 0.0
    %2483 = vmatpush1.msra.mxu0 0.0
    %2484 = vmatprep.subr.mxu0 0.0
    %2485 = vmatpush1.msra.mxu0 0.0
    %2486 = vmatprep.subr.mxu0 0.0
    %2487 = vmatpush1.msra.mxu0 0.0
    %2488 = vmatprep.subr.mxu0 0.0
    %2489 = vmatpush1.msra.mxu0 0.0
    %2490 = vmatprep.subr.mxu0 0.0
    %2491 = vmatpush1.msra.mxu0 0.0
    %2492 = vmatprep.subr.mxu0 0.0
    %2493 = vmatpush1.msra.mxu0 0.0
    %2494 = vmatprep.subr.mxu0 0.0
    %2495 = vmatpush1.msra.mxu0 0.0
    %2496 = vmatprep.subr.mxu0 0.0
    %2497 = vmatpush1.msra.mxu0 0.0
    %2498 = vmatprep.subr.mxu0 0.0
    %2499 = vmatpush1.msra.mxu0 0.0
    %2500 = vmatprep.subr.mxu0 0.0
    %2501 = vmatpush1.msra.mxu0 0.0
    %2502 = vmatprep.subr.mxu0 0.0
    %2503 = vmatpush1.msra.mxu0 0.0
    %2504 = vmatprep.subr.mxu0 0.0
    %2505 = vmatpush1.msra.mxu0 %v1538
    %2506 = vmatprep.subr.mxu0 0.0
    %2507 = vmatpush1.msra.mxu0 %v1537
    %2508 = vmatprep.subr.mxu0 0.0
    %2509 = vmatpush1.msra.mxu0 %v1536
    %2510 = vmatprep.subr.mxu0 0.0
    %2511 = vmatpush1.msra.mxu0 %v1535
    %2512 = vmatprep.subr.mxu0 0.0
    %2513 = vmatpush2.msra.mxu0 0.0
    %2514 = vmatprep.subr.mxu0 0.0
    %2515 = vmatpush2.msra.mxu0 0.0
    %2516 = vmatprep.subr.mxu0 0.0
    %2517 = vmatpush2.msra.mxu0 0.0
    %2518 = vmatprep.subr.mxu0 0.0
    %2519 = vmatpush2.msra.mxu0 0.0
    %2520 = vmatprep.subr.mxu0 0.0
    %2521 = vmatpush2.msra.mxu0 0.0
    %2522 = vmatprep.subr.mxu0 0.0
    %2523 = vmatpush2.msra.mxu0 0.0
    %2524 = vmatprep.subr.mxu0 0.0
    %2525 = vmatpush2.msra.mxu0 0.0
    %2526 = vmatprep.subr.mxu0 0.0
    %2527 = vmatpush2.msra.mxu0 0.0
    %2528 = vmatprep.subr.mxu0 0.0
    %2529 = vmatpush2.msra.mxu0 0.0
    %2530 = vmatprep.subr.mxu0 0.0
    %2531 = vmatpush2.msra.mxu0 0.0
    %2532 = vmatprep.subr.mxu0 0.0
    %2533 = vmatpush2.msra.mxu0 0.0
    %2534 = vmatprep.subr.mxu0 0.0
    %2535 = vmatpush2.msra.mxu0 0.0
    %2536 = vmatprep.subr.mxu0 0.0
    %2537 = vmatpush2.msra.mxu0 0.0
    %2538 = vmatprep.subr.mxu0 0.0
    %2539 = vmatpush2.msra.mxu0 0.0
    %2540 = vmatprep.subr.mxu0 0.0
    %2541 = vmatpush2.msra.mxu0 0.0
    %2542 = vmatprep.subr.mxu0 0.0
    %2543 = vmatpush2.msra.mxu0 0.0
    %2544 = vmatprep.mubr.f32.mxu0 0.0
    %2545 = vmatmul.mubr.f32.gmra.mxu0 %v1131
    %v2546 = vpop.f32.mrf.mxu0
    %v2547 = vadd.f32 0.0, %v2546
    %v2548 = vpop.f32.mrf.mxu0
    %2549 = vmatprep.mubr.f32.mxu0 0.0
    %2550 = vmatmul.mubr.f32.gmra.mxu0 %v1134
    %v2551 = vpop.f32.mrf.mxu0
    %v2552 = vadd.f32 0.0, %v2551
    %v2553 = vpop.f32.mrf.mxu0
    %2554 = vmatprep.mubr.f32.mxu0 0.0
    %2555 = vmatmul.mubr.f32.gmra.mxu0 %v1137
    %v2556 = vpop.f32.mrf.mxu0
    %v2557 = vadd.f32 0.0, %v2556
    %v2558 = vpop.f32.mrf.mxu0
    %2559 = vmatprep.mubr.f32.mxu0 0.0
    %2560 = vmatmul.mubr.f32.gmra.mxu0 %v1140
    %v2561 = vpop.f32.mrf.mxu0
    %v2562 = vadd.f32 0.0, %v2561
    %v2563 = vpop.f32.mrf.mxu0
    %2564 = vdwg.mxu0
    %v2566 = vsel %vm1715, %v2547, 0
    %v2569 = vsel %vm1715, %v2552, 0
    %v2572 = vsel %vm1715, %v2557, 0
    %v2575 = vsel %vm1715, %v2562, 0
    %2577 = vmatprep.subr.mxu0 0.0
    %2578 = vmatpush1.msra.mxu0 0.0
    %2579 = vmatprep.subr.mxu0 0.0
    %2580 = vmatpush1.msra.mxu0 0.0
    %2581 = vmatprep.subr.mxu0 0.0
    %2582 = vmatpush1.msra.mxu0 0.0
    %2583 = vmatprep.subr.mxu0 0.0
    %2584 = vmatpush1.msra.mxu0 0.0
    %2585 = vmatprep.subr.mxu0 0.0
    %2586 = vmatpush1.msra.mxu0 0.0
    %2587 = vmatprep.subr.mxu0 0.0
    %2588 = vmatpush1.msra.mxu0 0.0
    %2589 = vmatprep.subr.mxu0 0.0
    %2590 = vmatpush1.msra.mxu0 0.0
    %2591 = vmatprep.subr.mxu0 0.0
    %2592 = vmatpush1.msra.mxu0 0.0
    %2593 = vmatprep.subr.mxu0 0.0
    %2594 = vmatpush1.msra.mxu0 0.0
    %2595 = vmatprep.subr.mxu0 0.0
    %2596 = vmatpush1.msra.mxu0 0.0
    %2597 = vmatprep.subr.mxu0 0.0
    %2598 = vmatpush1.msra.mxu0 0.0
    %2599 = vmatprep.subr.mxu0 0.0
    %2600 = vmatpush1.msra.mxu0 0.0
    %2601 = vmatprep.subr.mxu0 0.0
    %2602 = vmatpush1.msra.mxu0 0.0
    %2603 = vmatprep.subr.mxu0 0.0
    %2604 = vmatpush1.msra.mxu0 %v2479
    %2605 = vmatprep.subr.mxu0 0.0
    %2606 = vmatpush1.msra.mxu0 %v2478
    %2607 = vmatprep.subr.mxu0 0.0
    %2608 = vmatpush1.msra.mxu0 %v2477
    %2609 = vmatprep.subr.mxu0 0.0
    %2610 = vmatpush2.msra.mxu0 0.0
    %2611 = vmatprep.subr.mxu0 0.0
    %2612 = vmatpush2.msra.mxu0 0.0
    %2613 = vmatprep.subr.mxu0 0.0
    %2614 = vmatpush2.msra.mxu0 0.0
    %2615 = vmatprep.subr.mxu0 0.0
    %2616 = vmatpush2.msra.mxu0 0.0
    %2617 = vmatprep.subr.mxu0 0.0
    %2618 = vmatpush2.msra.mxu0 0.0
    %2619 = vmatprep.subr.mxu0 0.0
    %2620 = vmatpush2.msra.mxu0 0.0
    %2621 = vmatprep.subr.mxu0 0.0
    %2622 = vmatpush2.msra.mxu0 0.0
    %2623 = vmatprep.subr.mxu0 0.0
    %2624 = vmatpush2.msra.mxu0 0.0
    %2625 = vmatprep.subr.mxu0 0.0
    %2626 = vmatpush2.msra.mxu0 0.0
    %2627 = vmatprep.subr.mxu0 0.0
    %2628 = vmatpush2.msra.mxu0 0.0
    %2629 = vmatprep.subr.mxu0 0.0
    %2630 = vmatpush2.msra.mxu0 0.0
    %2631 = vmatprep.subr.mxu0 0.0
    %2632 = vmatpush2.msra.mxu0 0.0
    %2633 = vmatprep.subr.mxu0 0.0
    %2634 = vmatpush2.msra.mxu0 0.0
    %2635 = vmatprep.subr.mxu0 0.0
    %2636 = vmatpush2.msra.mxu0 0.0
    %2637 = vmatprep.subr.mxu0 0.0
    %2638 = vmatpush2.msra.mxu0 0.0
    %2639 = vmatprep.subr.mxu0 0.0
    %2640 = vmatpush2.msra.mxu0 0.0
    %2641 = vmatprep.mubr.f32.mxu0 0.0
    %2642 = vmatmul.mubr.f32.gmra.mxu0 %v2566
    %v2643 = vpop.f32.mrf.mxu0
    %v2644 = vadd.f32 0.0, %v2643
    %v2645 = vpop.f32.mrf.mxu0
    %2646 = vmatprep.mubr.f32.mxu0 0.0
    %2647 = vmatmul.mubr.f32.gmra.mxu0 %v2569
    %v2648 = vpop.f32.mrf.mxu0
    %v2649 = vadd.f32 0.0, %v2648
    %v2650 = vpop.f32.mrf.mxu0
    %2651 = vmatprep.mubr.f32.mxu0 0.0
    %2652 = vmatmul.mubr.f32.gmra.mxu0 %v2572
    %v2653 = vpop.f32.mrf.mxu0
    %v2654 = vadd.f32 0.0, %v2653
    %v2655 = vpop.f32.mrf.mxu0
    %2656 = vmatprep.mubr.f32.mxu0 0.0
    %2657 = vmatmul.mubr.f32.gmra.mxu0 %v2575
    %v2658 = vpop.f32.mrf.mxu0
    %v2659 = vadd.f32 0.0, %v2658
    %v2660 = vpop.f32.mrf.mxu0
    %2661 = vdwg.mxu0
    %v2662 = vadd.f32 %v2473, %v2644
    %v2663 = vadd.f32 %v2474, %v2649
    %v2664 = vadd.f32 %v2475, %v2654
    %v2665 = vadd.f32 %v2476, %v2659
    %v2666 = vld [vmem:[#allocation2 + $0xc8] sm:$0xff]
    %v2667 = vld [vmem:[#allocation2 + $0xd0] sm:$0xff]
    %v2668 = vld [vmem:[#allocation2 + $0xd8] sm:$0xff]
    %2669 = vmatprep.subr.mxu0 0.0
    %2670 = vmatpush1.msra.mxu0 0.0
    %2671 = vmatprep.subr.mxu0 0.0
    %2672 = vmatpush1.msra.mxu0 0.0
    %2673 = vmatprep.subr.mxu0 0.0
    %2674 = vmatpush1.msra.mxu0 0.0
    %2675 = vmatprep.subr.mxu0 0.0
    %2676 = vmatpush1.msra.mxu0 0.0
    %2677 = vmatprep.subr.mxu0 0.0
    %2678 = vmatpush1.msra.mxu0 0.0
    %2679 = vmatprep.subr.mxu0 0.0
    %2680 = vmatpush1.msra.mxu0 0.0
    %2681 = vmatprep.subr.mxu0 0.0
    %2682 = vmatpush1.msra.mxu0 0.0
    %2683 = vmatprep.subr.mxu0 0.0
    %2684 = vmatpush1.msra.mxu0 0.0
    %2685 = vmatprep.subr.mxu0 0.0
    %2686 = vmatpush1.msra.mxu0 0.0
    %2687 = vmatprep.subr.mxu0 0.0
    %2688 = vmatpush1.msra.mxu0 0.0
    %2689 = vmatprep.subr.mxu0 0.0
    %2690 = vmatpush1.msra.mxu0 0.0
    %2691 = vmatprep.subr.mxu0 0.0
    %2692 = vmatpush1.msra.mxu0 0.0
    %2693 = vmatprep.subr.mxu0 0.0
    %2694 = vmatpush1.msra.mxu0 %v1538
    %2695 = vmatprep.subr.mxu0 0.0
    %2696 = vmatpush1.msra.mxu0 %v1537
    %2697 = vmatprep.subr.mxu0 0.0
    %2698 = vmatpush1.msra.mxu0 %v1536
    %2699 = vmatprep.subr.mxu0 0.0
    %2700 = vmatpush1.msra.mxu0 %v1535
    %2701 = vmatprep.subr.mxu0 0.0
    %2702 = vmatpush2.msra.mxu0 0.0
    %2703 = vmatprep.subr.mxu0 0.0
    %2704 = vmatpush2.msra.mxu0 0.0
    %2705 = vmatprep.subr.mxu0 0.0
    %2706 = vmatpush2.msra.mxu0 0.0
    %2707 = vmatprep.subr.mxu0 0.0
    %2708 = vmatpush2.msra.mxu0 0.0
    %2709 = vmatprep.subr.mxu0 0.0
    %2710 = vmatpush2.msra.mxu0 0.0
    %2711 = vmatprep.subr.mxu0 0.0
    %2712 = vmatpush2.msra.mxu0 0.0
    %2713 = vmatprep.subr.mxu0 0.0
    %2714 = vmatpush2.msra.mxu0 0.0
    %2715 = vmatprep.subr.mxu0 0.0
    %2716 = vmatpush2.msra.mxu0 0.0
    %2717 = vmatprep.subr.mxu0 0.0
    %2718 = vmatpush2.msra.mxu0 0.0
    %2719 = vmatprep.subr.mxu0 0.0
    %2720 = vmatpush2.msra.mxu0 0.0
    %2721 = vmatprep.subr.mxu0 0.0
    %2722 = vmatpush2.msra.mxu0 0.0
    %2723 = vmatprep.subr.mxu0 0.0
    %2724 = vmatpush2.msra.mxu0 0.0
    %2725 = vmatprep.subr.mxu0 0.0
    %2726 = vmatpush2.msra.mxu0 0.0
    %2727 = vmatprep.subr.mxu0 0.0
    %2728 = vmatpush2.msra.mxu0 0.0
    %2729 = vmatprep.subr.mxu0 0.0
    %2730 = vmatpush2.msra.mxu0 0.0
    %2731 = vmatprep.subr.mxu0 0.0
    %2732 = vmatpush2.msra.mxu0 0.0
    %2733 = vmatprep.mubr.f32.mxu0 0.0
    %2734 = vmatmul.mubr.f32.gmra.mxu0 %v1330
    %v2735 = vpop.f32.mrf.mxu0
    %v2736 = vadd.f32 0.0, %v2735
    %v2737 = vpop.f32.mrf.mxu0
    %2738 = vmatprep.mubr.f32.mxu0 0.0
    %2739 = vmatmul.mubr.f32.gmra.mxu0 %v1333
    %v2740 = vpop.f32.mrf.mxu0
    %v2741 = vadd.f32 0.0, %v2740
    %v2742 = vpop.f32.mrf.mxu0
    %2743 = vmatprep.mubr.f32.mxu0 0.0
    %2744 = vmatmul.mubr.f32.gmra.mxu0 %v1336
    %v2745 = vpop.f32.mrf.mxu0
    %v2746 = vadd.f32 0.0, %v2745
    %v2747 = vpop.f32.mrf.mxu0
    %2748 = vmatprep.mubr.f32.mxu0 0.0
    %2749 = vmatmul.mubr.f32.gmra.mxu0 %v1339
    %v2750 = vpop.f32.mrf.mxu0
    %v2751 = vadd.f32 0.0, %v2750
    %v2752 = vpop.f32.mrf.mxu0
    %2753 = vdwg.mxu0
    %v2755 = vsel %vm1715, %v2736, 0
    %v2758 = vsel %vm1715, %v2741, 0
    %v2761 = vsel %vm1715, %v2746, 0
    %v2764 = vsel %vm1715, %v2751, 0
    %2766 = vmatprep.subr.mxu0 0.0
    %2767 = vmatpush1.msra.mxu0 0.0
    %2768 = vmatprep.subr.mxu0 0.0
    %2769 = vmatpush1.msra.mxu0 0.0
    %2770 = vmatprep.subr.mxu0 0.0
    %2771 = vmatpush1.msra.mxu0 0.0
    %2772 = vmatprep.subr.mxu0 0.0
    %2773 = vmatpush1.msra.mxu0 0.0
    %2774 = vmatprep.subr.mxu0 0.0
    %2775 = vmatpush1.msra.mxu0 0.0
    %2776 = vmatprep.subr.mxu0 0.0
    %2777 = vmatpush1.msra.mxu0 0.0
    %2778 = vmatprep.subr.mxu0 0.0
    %2779 = vmatpush1.msra.mxu0 0.0
    %2780 = vmatprep.subr.mxu0 0.0
    %2781 = vmatpush1.msra.mxu0 0.0
    %2782 = vmatprep.subr.mxu0 0.0
    %2783 = vmatpush1.msra.mxu0 0.0
    %2784 = vmatprep.subr.mxu0 0.0
    %2785 = vmatpush1.msra.mxu0 0.0
    %2786 = vmatprep.subr.mxu0 0.0
    %2787 = vmatpush1.msra.mxu0 0.0
    %2788 = vmatprep.subr.mxu0 0.0
    %2789 = vmatpush1.msra.mxu0 0.0
    %2790 = vmatprep.subr.mxu0 0.0
    %2791 = vmatpush1.msra.mxu0 0.0
    %2792 = vmatprep.subr.mxu0 0.0
    %2793 = vmatpush1.msra.mxu0 %v2668
    %2794 = vmatprep.subr.mxu0 0.0
    %2795 = vmatpush1.msra.mxu0 %v2667
    %2796 = vmatprep.subr.mxu0 0.0
    %2797 = vmatpush1.msra.mxu0 %v2666
    %2798 = vmatprep.subr.mxu0 0.0
    %2799 = vmatpush2.msra.mxu0 0.0
    %2800 = vmatprep.subr.mxu0 0.0
    %2801 = vmatpush2.msra.mxu0 0.0
    %2802 = vmatprep.subr.mxu0 0.0
    %2803 = vmatpush2.msra.mxu0 0.0
    %2804 = vmatprep.subr.mxu0 0.0
    %2805 = vmatpush2.msra.mxu0 0.0
    %2806 = vmatprep.subr.mxu0 0.0
    %2807 = vmatpush2.msra.mxu0 0.0
    %2808 = vmatprep.subr.mxu0 0.0
    %2809 = vmatpush2.msra.mxu0 0.0
    %2810 = vmatprep.subr.mxu0 0.0
    %2811 = vmatpush2.msra.mxu0 0.0
    %2812 = vmatprep.subr.mxu0 0.0
    %2813 = vmatpush2.msra.mxu0 0.0
    %2814 = vmatprep.subr.mxu0 0.0
    %2815 = vmatpush2.msra.mxu0 0.0
    %2816 = vmatprep.subr.mxu0 0.0
    %2817 = vmatpush2.msra.mxu0 0.0
    %2818 = vmatprep.subr.mxu0 0.0
    %2819 = vmatpush2.msra.mxu0 0.0
    %2820 = vmatprep.subr.mxu0 0.0
    %2821 = vmatpush2.msra.mxu0 0.0
    %2822 = vmatprep.subr.mxu0 0.0
    %2823 = vmatpush2.msra.mxu0 0.0
    %2824 = vmatprep.subr.mxu0 0.0
    %2825 = vmatpush2.msra.mxu0 0.0
    %2826 = vmatprep.subr.mxu0 0.0
    %2827 = vmatpush2.msra.mxu0 0.0
    %2828 = vmatprep.subr.mxu0 0.0
    %2829 = vmatpush2.msra.mxu0 0.0
    %2830 = vmatprep.mubr.f32.mxu0 0.0
    %2831 = vmatmul.mubr.f32.gmra.mxu0 %v2755
    %v2832 = vpop.f32.mrf.mxu0
    %v2833 = vadd.f32 0.0, %v2832
    %v2834 = vpop.f32.mrf.mxu0
    %2835 = vmatprep.mubr.f32.mxu0 0.0
    %2836 = vmatmul.mubr.f32.gmra.mxu0 %v2758
    %v2837 = vpop.f32.mrf.mxu0
    %v2838 = vadd.f32 0.0, %v2837
    %v2839 = vpop.f32.mrf.mxu0
    %2840 = vmatprep.mubr.f32.mxu0 0.0
    %2841 = vmatmul.mubr.f32.gmra.mxu0 %v2761
    %v2842 = vpop.f32.mrf.mxu0
    %v2843 = vadd.f32 0.0, %v2842
    %v2844 = vpop.f32.mrf.mxu0
    %2845 = vmatprep.mubr.f32.mxu0 0.0
    %2846 = vmatmul.mubr.f32.gmra.mxu0 %v2764
    %v2847 = vpop.f32.mrf.mxu0
    %v2848 = vadd.f32 0.0, %v2847
    %v2849 = vpop.f32.mrf.mxu0
    %2850 = vdwg.mxu0
    %v2851 = vadd.f32 %v2662, %v2833
    %v2852 = vadd.f32 %v2663, %v2838
    %v2853 = vadd.f32 %v2664, %v2843
    %v2854 = vadd.f32 %v2665, %v2848
    %v2855 = vlaneseq
    %v2856 = vshrl.u32 %v2855, 7
    %v2857 = vsub.s32 0, %v2856
    %v2858 = vrot.slane %v133, %v2857
    %v2859 = vadd.f32 %v2851, %v2858
    %v2860 = vadd.f32 %v2852, %v2858
    %v2861 = vadd.f32 %v2853, %v2858
    %v2862 = vadd.f32 %v2854, %v2858
    %v2863 = vmax.f32 %v2859, 0.0
    %v2864 = vmax.f32 %v2860, 0.0
    %v2865 = vmax.f32 %v2861, 0.0
    %v2866 = vmax.f32 %v2862, 0.0
    %v2867 = vld [vmem:[#allocation2 + $0xe0] sm:$0xff]
    %v2868 = vld [vmem:[#allocation2 + $0xe8] sm:$0xff]
    %v2869 = vld [vmem:[#allocation2 + $0xf0] sm:$0xff]
    %v2870 = vld [vmem:[#allocation2 + $0xf8] sm:$0xff]
    %v2871 = vld [vmem:[#allocation2 + $0x100] sm:$0xff]
    %v2872 = vld [vmem:[#allocation2 + $0x108] sm:$0xff]
    %v2873 = vld [vmem:[#allocation2 + $0x110] sm:$0xff]
    %v2874 = vlaneseq
    %v2875 = vshrl.u32 %v2874, 7
    %v2876 = vsub.s32 0, %v2875
    %v2877 = vrot.slane %v134, %v2876
    %v2879 = vsel %vm1715, %v2863, 0
    %v2882 = vsel %vm1715, %v2864, 0
    %v2885 = vsel %vm1715, %v2865, 0
    %v2888 = vsel %vm1715, %v2866, 0
    %2890 = vmatprep.subr.mxu0 0.0
    %2891 = vmatpush1.msra.mxu0 0.0
    %2892 = vmatprep.subr.mxu0 0.0
    %2893 = vmatpush1.msra.mxu0 0.0
    %2894 = vmatprep.subr.mxu0 0.0
    %2895 = vmatpush1.msra.mxu0 0.0
    %2896 = vmatprep.subr.mxu0 0.0
    %2897 = vmatpush1.msra.mxu0 0.0
    %2898 = vmatprep.subr.mxu0 0.0
    %2899 = vmatpush1.msra.mxu0 0.0
    %2900 = vmatprep.subr.mxu0 0.0
    %2901 = vmatpush1.msra.mxu0 0.0
    %2902 = vmatprep.subr.mxu0 0.0
    %2903 = vmatpush1.msra.mxu0 0.0
    %2904 = vmatprep.subr.mxu0 0.0
    %2905 = vmatpush1.msra.mxu0 0.0
    %2906 = vmatprep.subr.mxu0 0.0
    %2907 = vmatpush1.msra.mxu0 0.0
    %2908 = vmatprep.subr.mxu0 0.0
    %2909 = vmatpush1.msra.mxu0 0.0
    %2910 = vmatprep.subr.mxu0 0.0
    %2911 = vmatpush1.msra.mxu0 0.0
    %2912 = vmatprep.subr.mxu0 0.0
    %2913 = vmatpush1.msra.mxu0 0.0
    %2914 = vmatprep.subr.mxu0 0.0
    %2915 = vmatpush1.msra.mxu0 0.0
    %2916 = vmatprep.subr.mxu0 0.0
    %2917 = vmatpush1.msra.mxu0 %v2869
    %2918 = vmatprep.subr.mxu0 0.0
    %2919 = vmatpush1.msra.mxu0 %v2868
    %2920 = vmatprep.subr.mxu0 0.0
    %2921 = vmatpush1.msra.mxu0 %v2867
    %2922 = vmatprep.subr.mxu0 0.0
    %2923 = vmatpush2.msra.mxu0 0.0
    %2924 = vmatprep.subr.mxu0 0.0
    %2925 = vmatpush2.msra.mxu0 0.0
    %2926 = vmatprep.subr.mxu0 0.0
    %2927 = vmatpush2.msra.mxu0 0.0
    %2928 = vmatprep.subr.mxu0 0.0
    %2929 = vmatpush2.msra.mxu0 0.0
    %2930 = vmatprep.subr.mxu0 0.0
    %2931 = vmatpush2.msra.mxu0 0.0
    %2932 = vmatprep.subr.mxu0 0.0
    %2933 = vmatpush2.msra.mxu0 0.0
    %2934 = vmatprep.subr.mxu0 0.0
    %2935 = vmatpush2.msra.mxu0 0.0
    %2936 = vmatprep.subr.mxu0 0.0
    %2937 = vmatpush2.msra.mxu0 0.0
    %2938 = vmatprep.subr.mxu0 0.0
    %2939 = vmatpush2.msra.mxu0 0.0
    %2940 = vmatprep.subr.mxu0 0.0
    %2941 = vmatpush2.msra.mxu0 0.0
    %2942 = vmatprep.subr.mxu0 0.0
    %2943 = vmatpush2.msra.mxu0 0.0
    %2944 = vmatprep.subr.mxu0 0.0
    %2945 = vmatpush2.msra.mxu0 0.0
    %2946 = vmatprep.subr.mxu0 0.0
    %2947 = vmatpush2.msra.mxu0 0.0
    %2948 = vmatprep.subr.mxu0 0.0
    %2949 = vmatpush2.msra.mxu0 0.0
    %2950 = vmatprep.subr.mxu0 0.0
    %2951 = vmatpush2.msra.mxu0 0.0
    %2952 = vmatprep.subr.mxu0 0.0
    %2953 = vmatpush2.msra.mxu0 0.0
    %2954 = vmatprep.mubr.f32.mxu0 0.0
    %2955 = vmatmul.mubr.f32.gmra.mxu0 %v2879
    %v2956 = vpop.f32.mrf.mxu0
    %v2957 = vadd.f32 %v2877, %v2956
    %v2958 = vpop.f32.mrf.mxu0
    %2959 = vmatprep.mubr.f32.mxu0 0.0
    %2960 = vmatmul.mubr.f32.gmra.mxu0 %v2882
    %v2961 = vpop.f32.mrf.mxu0
    %v2962 = vadd.f32 %v2877, %v2961
    %v2963 = vpop.f32.mrf.mxu0
    %2964 = vmatprep.mubr.f32.mxu0 0.0
    %2965 = vmatmul.mubr.f32.gmra.mxu0 %v2885
    %v2966 = vpop.f32.mrf.mxu0
    %v2967 = vadd.f32 %v2877, %v2966
    %v2968 = vpop.f32.mrf.mxu0
    %2969 = vmatprep.mubr.f32.mxu0 0.0
    %2970 = vmatmul.mubr.f32.gmra.mxu0 %v2888
    %v2971 = vpop.f32.mrf.mxu0
    %v2972 = vadd.f32 %v2877, %v2971
    %v2973 = vpop.f32.mrf.mxu0
    %2974 = vdwg.mxu0
    %v2975 = vmax.f32 %v2957, 0.0
    %v2976 = vmax.f32 %v2962, 0.0
    %v2977 = vmax.f32 %v2967, 0.0
    %v2978 = vmax.f32 %v2972, 0.0
    %v2979 = vlaneseq
    %v2980 = vshrl.u32 %v2979, 7
    %v2981 = vsub.s32 0, %v2980
    %v2982 = vrot.slane %v135, %v2981
    %v2984 = vsel %vm141, %v2975, 0
    %v2987 = vsel %vm141, %v2976, 0
    %v2990 = vsel %vm141, %v2977, 0
    %v2993 = vsel %vm141, %v2978, 0
    %2995 = vmatprep.subr.mxu0 0.0
    %2996 = vmatpush1.msra.mxu0 0.0
    %2997 = vmatprep.subr.mxu0 0.0
    %2998 = vmatpush1.msra.mxu0 0.0
    %2999 = vmatprep.subr.mxu0 0.0
    %3000 = vmatpush1.msra.mxu0 0.0
    %3001 = vmatprep.subr.mxu0 0.0
    %3002 = vmatpush1.msra.mxu0 0.0
    %3003 = vmatprep.subr.mxu0 0.0
    %3004 = vmatpush1.msra.mxu0 0.0
    %3005 = vmatprep.subr.mxu0 0.0
    %3006 = vmatpush1.msra.mxu0 0.0
    %3007 = vmatprep.subr.mxu0 0.0
    %3008 = vmatpush1.msra.mxu0 0.0
    %3009 = vmatprep.subr.mxu0 0.0
    %3010 = vmatpush1.msra.mxu0 0.0
    %3011 = vmatprep.subr.mxu0 0.0
    %3012 = vmatpush1.msra.mxu0 0.0
    %3013 = vmatprep.subr.mxu0 0.0
    %3014 = vmatpush1.msra.mxu0 0.0
    %3015 = vmatprep.subr.mxu0 0.0
    %3016 = vmatpush1.msra.mxu0 0.0
    %3017 = vmatprep.subr.mxu0 0.0
    %3018 = vmatpush1.msra.mxu0 0.0
    %3019 = vmatprep.subr.mxu0 0.0
    %3020 = vmatpush1.msra.mxu0 %v2873
    %3021 = vmatprep.subr.mxu0 0.0
    %3022 = vmatpush1.msra.mxu0 %v2872
    %3023 = vmatprep.subr.mxu0 0.0
    %3024 = vmatpush1.msra.mxu0 %v2871
    %3025 = vmatprep.subr.mxu0 0.0
    %3026 = vmatpush1.msra.mxu0 %v2870
    %3027 = vmatprep.subr.mxu0 0.0
    %3028 = vmatpush2.msra.mxu0 0.0
    %3029 = vmatprep.subr.mxu0 0.0
    %3030 = vmatpush2.msra.mxu0 0.0
    %3031 = vmatprep.subr.mxu0 0.0
    %3032 = vmatpush2.msra.mxu0 0.0
    %3033 = vmatprep.subr.mxu0 0.0
    %3034 = vmatpush2.msra.mxu0 0.0
    %3035 = vmatprep.subr.mxu0 0.0
    %3036 = vmatpush2.msra.mxu0 0.0
    %3037 = vmatprep.subr.mxu0 0.0
    %3038 = vmatpush2.msra.mxu0 0.0
    %3039 = vmatprep.subr.mxu0 0.0
    %3040 = vmatpush2.msra.mxu0 0.0
    %3041 = vmatprep.subr.mxu0 0.0
    %3042 = vmatpush2.msra.mxu0 0.0
    %3043 = vmatprep.subr.mxu0 0.0
    %3044 = vmatpush2.msra.mxu0 0.0
    %3045 = vmatprep.subr.mxu0 0.0
    %3046 = vmatpush2.msra.mxu0 0.0
    %3047 = vmatprep.subr.mxu0 0.0
    %3048 = vmatpush2.msra.mxu0 0.0
    %3049 = vmatprep.subr.mxu0 0.0
    %3050 = vmatpush2.msra.mxu0 0.0
    %3051 = vmatprep.subr.mxu0 0.0
    %3052 = vmatpush2.msra.mxu0 0.0
    %3053 = vmatprep.subr.mxu0 0.0
    %3054 = vmatpush2.msra.mxu0 0.0
    %3055 = vmatprep.subr.mxu0 0.0
    %3056 = vmatpush2.msra.mxu0 0.0
    %3057 = vmatprep.subr.mxu0 0.0
    %3058 = vmatpush2.msra.mxu0 0.0
    %3059 = vmatprep.mubr.f32.mxu0 0.0
    %3060 = vmatmul.mubr.f32.gmra.mxu0 %v2984
    %v3061 = vpop.f32.mrf.mxu0
    %v3062 = vadd.f32 %v2982, %v3061
    %v3063 = vpop.f32.mrf.mxu0
    %3064 = vmatprep.mubr.f32.mxu0 0.0
    %3065 = vmatmul.mubr.f32.gmra.mxu0 %v2987
    %v3066 = vpop.f32.mrf.mxu0
    %v3067 = vadd.f32 %v2982, %v3066
    %v3068 = vpop.f32.mrf.mxu0
    %3069 = vmatprep.mubr.f32.mxu0 0.0
    %3070 = vmatmul.mubr.f32.gmra.mxu0 %v2990
    %v3071 = vpop.f32.mrf.mxu0
    %v3072 = vadd.f32 %v2982, %v3071
    %v3073 = vpop.f32.mrf.mxu0
    %3074 = vmatprep.mubr.f32.mxu0 0.0
    %3075 = vmatmul.mubr.f32.gmra.mxu0 %v2993
    %v3076 = vpop.f32.mrf.mxu0
    %v3077 = vadd.f32 %v2982, %v3076
    %v3078 = vpop.f32.mrf.mxu0
    %3079 = vdwg.mxu0
    %3080 = vst [vmem:[%s3] sm:$0xff] %v3062
    %3081 = vst [vmem:[%s3 + $0x8] sm:$0xff] %v3067
    %3082 = vst [vmem:[%s3 + $0x10] sm:$0xff] %v3072
    %3083 = vst [vmem:[%s3 + $0x18] sm:$0xff] %v3077
    // Predicated region
    $region18: #{multiscale_cnn_forward.1} parent=1 // pred_check
      _
    $region19: #{multiscale_cnn_forward.1} parent=1 // pred_check_branch
      %3085 = sbr.rel (0) target = $region21
    $region20: #{multiscale_cnn_forward.1} parent=1 // pred_region
      _
    $region21: #{multiscale_cnn_forward.1} parent=1 // pred_fallthru
      _
    // Predicated region
    $region22: #{multiscale_cnn_forward.1} parent=1 // pred_check
      _
    $region23: #{multiscale_cnn_forward.1} parent=1 // pred_check_branch
      %3087 = sbr.rel (0) target = $region25
    $region24: #{multiscale_cnn_forward.1} parent=1 // pred_region
      _
    $region25: #{multiscale_cnn_forward.1} parent=1 // pred_fallthru
      _
    %3088 = vsyncpa [#allocation3], 1

</llo_original>
